<compile_context>
chip_gen: v7x
topology: tpu7x:2x2x1
jax: 0.10.0
libtpu: 0.0.40
codegen_flags: <defaults>
</compile_context>

<pallas_src>
import functools

import jax
import jax.numpy as jnp
import numpy as np
from jax.experimental import pallas as pl
from jax.experimental.pallas import tpu as pltpu

_VMEM_LIMIT = 32 * 1024 * 1024  # fits default/physical VMEM on v5e/v6e/v7x


def _pick_bm(m, target=512):
    """Largest row-block <= target dividing m (8-aligned when < m)."""
    if m <= target:
        return m
    for bm in (target, 256, 128, 64, 32, 16, 8):
        if m % bm == 0:
            return bm
    return m


def conv_out(h, k, s):
    return (h - k) // s + 1


# ----------------------------- Pallas kernels ------------------------------ #
def conv1_kernel(a_ref, w_ref, o_ref):
    """o = relu(a @ w).  a: (bm, Cin*k*k) f32 im2col rows; w: (Cin*k*k, 32)
    bf16 with the 1/255 input scale already folded in.  bf16 MXU, f32 acc."""
    a = a_ref[...].astype(jnp.bfloat16)
    acc = jnp.dot(a, w_ref[...], preferred_element_type=jnp.float32)
    o_ref[...] = jnp.maximum(acc, 0.0)


def tail_kernel(h1_ref, w2d_ref, w3d_ref, fc1w_ref, fc1b_ref, fc2w_ref,
                fc2b_ref, o_ref):
    """Fused conv2 + conv3 + fc1 + fc2.

    conv2/conv3 arrive pre-densified as per-sample matrices acting on the
    NHWC-flattened activation, so the whole tail is a chain of 2D MXU matmuls
    with every intermediate resident in VMEM/vregs.  The output is a 128-lane
    padded slab (lane-dense store); the caller slices it to action_dim.
    """
    h1 = h1_ref[...].astype(jnp.bfloat16)                     # (bm, H1*W1*32)
    h2 = jnp.maximum(
        jnp.dot(h1, w2d_ref[...], preferred_element_type=jnp.float32), 0.0)
    h3 = jnp.maximum(
        jnp.dot(h2.astype(jnp.bfloat16), w3d_ref[...],
                preferred_element_type=jnp.float32), 0.0)
    h4 = jnp.maximum(
        jnp.dot(h3.astype(jnp.bfloat16), fc1w_ref[...],
                preferred_element_type=jnp.float32) + fc1b_ref[...], 0.0)
    o_ref[...] = (jnp.dot(h4.astype(jnp.bfloat16), fc2w_ref[...],
                          preferred_element_type=jnp.float32) + fc2b_ref[...])


def conv1_matmul_relu(a, w):
    m, k = a.shape
    n = w.shape[1]
    bm = _pick_bm(m)
    return pl.pallas_call(
        conv1_kernel,
        out_shape=jax.ShapeDtypeStruct((m, n), jnp.float32),
        grid=(m // bm,),
        in_specs=[
            pl.BlockSpec((bm, k), lambda i: (i, 0)),
            pl.BlockSpec((k, n), lambda i: (0, 0)),
        ],
        out_specs=pl.BlockSpec((bm, n), lambda i: (i, 0)),
        compiler_params=pltpu.CompilerParams(
            dimension_semantics=("parallel",),
            vmem_limit_bytes=_VMEM_LIMIT),
    )(a, w)


def fused_tail(h1w, w2d, w3d, fc1w, fc1b, fc2w, fc2b):
    m, k2 = h1w.shape
    n2 = w2d.shape[1]
    n3 = w3d.shape[1]
    n4 = fc1w.shape[1]
    n5 = fc2w.shape[1]
    bm = _pick_bm(m)
    return pl.pallas_call(
        tail_kernel,
        out_shape=jax.ShapeDtypeStruct((m, n5), jnp.float32),
        grid=(m // bm,),
        in_specs=[
            pl.BlockSpec((bm, k2), lambda i: (i, 0)),
            pl.BlockSpec((k2, n2), lambda i: (0, 0)),
            pl.BlockSpec((n2, n3), lambda i: (0, 0)),
            pl.BlockSpec((n3, n4), lambda i: (0, 0)),
            pl.BlockSpec((1, n4), lambda i: (0, 0)),
            pl.BlockSpec((n4, n5), lambda i: (0, 0)),
            pl.BlockSpec((1, n5), lambda i: (0, 0)),
        ],
        out_specs=pl.BlockSpec((bm, n5), lambda i: (i, 0)),
        compiler_params=pltpu.CompilerParams(
            dimension_semantics=("parallel",),
            vmem_limit_bytes=_VMEM_LIMIT),
    )(h1w, w2d, w3d, fc1w, fc1b, fc2w, fc2b)


# ------------------------------- forward ----------------------------------- #
def conv_nn_forward(mats, x, *, action_dim):
    """x: (B, C, H, W) float32 (NCHW, like the PyTorch module)."""
    b = x.shape[0]
    # conv1 im2col as a single XLA op.  Patch channel order is (c, kh, kw),
    # matching the OIHW weight flatten done in prepare_params.
    pat = jax.lax.conv_general_dilated_patches(
        x, filter_shape=(8, 8), window_strides=(4, 4), padding="VALID",
        dimension_numbers=("NCHW", "OIHW", "NHWC"))        # (B, H1, W1, C*64)
    _, h1s, w1s, kk = pat.shape
    a1 = pat.reshape(b * h1s * w1s, kk)
    h1 = conv1_matmul_relu(a1, mats["w1m"])                # (B*H1*W1, 32)
    # Free row-major reshape to the per-sample NHWC flatten the densified
    # conv2 matrix was built for.
    h1w = h1.reshape(b, h1s * w1s * h1.shape[1])
    out_pad = fused_tail(h1w, mats["w2d"], mats["w3d"], mats["fc1w"],
                         mats["fc1b"], mats["fc2w"], mats["fc2b"])
    return out_pad[:, :action_dim]


# --------------------------- weight preparation ----------------------------- #
def _densify_conv_nhwc(w, h_in, w_in, stride):
    """Dense (h_in*w_in*Cin, h_out*w_out*Cout) matrix equivalent to a VALID,
    bias-free conv (OIHW weights) acting on a per-sample NHWC-flattened input."""
    cout, cin, k, _ = w.shape
    h_out = conv_out(h_in, k, stride)
    w_out = conv_out(w_in, k, stride)
    w_np = np.asarray(w, np.float32)
    m = np.zeros((h_in * w_in * cin, h_out * w_out * cout), np.float32)
    for oh in range(h_out):
        for ow in range(w_out):
            c0 = (oh * w_out + ow) * cout
            for i in range(k):
                for j in range(k):
                    r0 = ((oh * stride + i) * w_in + (ow * stride + j)) * cin
                    m[r0:r0 + cin, c0:c0 + cout] = w_np[:, :, i, j].T
    return m, h_out, w_out


def prepare_params(params, hw, action_dim):
    """One-time repack of PyTorch-layout weights into kernel-ready matrices
    (done once outside jit, like weight packing at load time)."""
    h, w = hw
    w1 = np.asarray(params["w1"], np.float32)                 # (32, C, 8, 8)
    c1out = w1.shape[0]
    # conv1 weight matrix, x/255 input scaling folded in.
    w1m = w1.reshape(c1out, -1).T / 255.0                     # (C*64, 32)

    h1s, w1s = conv_out(h, 8, 4), conv_out(w, 8, 4)
    w2d, h2s, w2s = _densify_conv_nhwc(np.asarray(params["w2"]), h1s, w1s, 2)
    w3d, h3s, w3s = _densify_conv_nhwc(np.asarray(params["w3"]), h2s, w2s, 1)
    c3out = int(params["w3"].shape[0])

    # fc1: reorder its input columns from torch's NCHW flatten to the NHWC
    # flatten produced by the dense conv3 matrix (identity when H3 = W3 = 1).
    fc1_w = np.asarray(params["fc1_w"], np.float32)           # (512, C3*H3*W3)
    fc1_w = fc1_w.reshape(-1, c3out, h3s, w3s).transpose(0, 2, 3, 1)
    fc1w = fc1_w.reshape(fc1_w.shape[0], -1).T                # (feat, 512)
    fc1b = np.asarray(params["fc1_b"], np.float32)[None, :]   # (1, 512)

    # fc2: pad the output (lane) dim to a multiple of 128 for lane-dense stores.
    fc2_w = np.asarray(params["fc2_w"], np.float32)           # (A, 512)
    n_pad = max(128, ((action_dim + 127) // 128) * 128)
    fc2w = np.zeros((fc2_w.shape[1], n_pad), np.float32)
    fc2w[:, :action_dim] = fc2_w.T
    fc2b = np.zeros((1, n_pad), np.float32)
    fc2b[0, :action_dim] = np.asarray(params["fc2_b"], np.float32)

    return dict(
        w1m=jnp.asarray(w1m, jnp.bfloat16),
        w2d=jnp.asarray(w2d, jnp.bfloat16),
        w3d=jnp.asarray(w3d, jnp.bfloat16),
        fc1w=jnp.asarray(fc1w, jnp.bfloat16),
        fc1b=jnp.asarray(fc1b, jnp.float32),
        fc2w=jnp.asarray(fc2w, jnp.bfloat16),
        fc2b=jnp.asarray(fc2b, jnp.float32),
    )


# --------------------------- parameter setup ------------------------------- #
def kaiming_normal(key, shape, fan_in):
    return (np.sqrt(2.0 / fan_in) *
            jax.random.normal(key, shape, dtype=jnp.float32))


def init_params(key, in_channels, action_dim, feature_size):
    ks = jax.random.split(key, 5)
    return dict(
        w1=kaiming_normal(ks[0], (32, in_channels, 8, 8), in_channels * 8 * 8),
        w2=kaiming_normal(ks[1], (64, 32, 4, 4), 32 * 4 * 4),
        w3=kaiming_normal(ks[2], (64, 64, 3, 3), 64 * 3 * 3),
        fc1_w=kaiming_normal(ks[3], (512, feature_size), feature_size),
        fc1_b=jnp.zeros((512,), jnp.float32),
        fc2_w=kaiming_normal(ks[4], (action_dim, 512), 512),
        fc2_b=jnp.zeros((action_dim,), jnp.float32),
    )


# ------------------------------ reference ---------------------------------- #
def reference_forward(params, x):
    dn = ("NCHW", "OIHW", "NCHW")
    x = x / 255.0
    x = jax.nn.relu(jax.lax.conv_general_dilated(x, params["w1"], (4, 4),
                                                 "VALID", dimension_numbers=dn))
    x = jax.nn.relu(jax.lax.conv_general_dilated(x, params["w2"], (2, 2),
                                                 "VALID", dimension_numbers=dn))
    x = jax.nn.relu(jax.lax.conv_general_dilated(x, params["w3"], (1, 1),
                                                 "VALID", dimension_numbers=dn))
    x = x.reshape(x.shape[0], -1)
    x = jax.nn.relu(x @ params["fc1_w"].T + params["fc1_b"])
    return x @ params["fc2_w"].T + params["fc2_b"]


# --------------------------------- main ------------------------------------ #
if __name__ == "__main__":
    # state_dim = (H, W, C) like the PyTorch module; 36x36 is the smallest
    # spatial size the 8/4 -> 4/2 -> 3/1 conv stack accepts.
    H = W = 36
    C = 4
    action_dim = 6
    batch = 2

    h_feat = conv_out(conv_out(conv_out(H, 8, 4), 4, 2), 3, 1)
    w_feat = conv_out(conv_out(conv_out(W, 8, 4), 4, 2), 3, 1)
    feature_size = 64 * h_feat * w_feat   # mirrors Conv_NN.feature_size()

    key = jax.random.PRNGKey(0)
    pkey, xkey = jax.random.split(key)
    params = init_params(pkey, C, action_dim, feature_size)
    x = jax.random.uniform(xkey, (batch, C, H, W), dtype=jnp.float32,
                           minval=0.0, maxval=255.0)

    mats = prepare_params(params, (H, W), action_dim)
    fwd = jax.jit(functools.partial(conv_nn_forward, action_dim=action_dim))
    out = jax.block_until_ready(fwd(mats, x))
    assert out.shape == (batch, action_dim) and out.dtype == jnp.float32

    ref = jax.block_until_ready(reference_forward(params, x))
    # bf16 MXU inputs with f32 accumulation give ~1% deviation from the pure
    # f32 reference; a layout / weight-order bug would be O(100%).
    np.testing.assert_allclose(np.asarray(out), np.asarray(ref),
                               rtol=5e-2, atol=5e-2)

    print("KERNEL_OK")
</pallas_src>

<mosaic_0001>
module attributes {stable_mosaic.version = 11 : i64} {
  func.func @conv1_kernel(%arg0: i32, %arg1: memref<128x256xf32, #tpu.memory_space<vmem>>, %arg2: memref<256x32xbf16, #tpu.memory_space<vmem>>, %arg3: memref<128x32xf32, #tpu.memory_space<vmem>>) attributes {dimension_semantics = [#tpu.dimension_semantics<parallel>], iteration_bounds = array<i64: 1>, scalar_prefetch = 0 : i64, scratch_operands = 0 : i64, tpu.core_type = #tpu.core_type<tc>, window_params = [{transform_indices = @transform_0, window_bounds = array<i64: 128, 256>}, {pipeline_mode = #tpu.pipeline_mode<synchronous>, transform_indices = @transform_1, window_bounds = array<i64: 256, 32>}, {transform_indices = @transform_2, window_bounds = array<i64: 128, 32>}]} {
    %c0 = arith.constant 0 : index
    %c0_0 = arith.constant 0 : index
    %0 = vector.load %arg1[%c0, %c0_0] : memref<128x256xf32, #tpu.memory_space<vmem>>, vector<128x256xf32>
    %1 = arith.truncf %0 : vector<128x256xf32> to vector<128x256xbf16>
    %c0_1 = arith.constant 0 : index
    %c0_2 = arith.constant 0 : index
    %2 = vector.load %arg2[%c0_1, %c0_2] : memref<256x32xbf16, #tpu.memory_space<vmem>>, vector<256x32xbf16>
    %cst = arith.constant dense<0.000000e+00> : vector<128x32xf32>
    %3 = tpu.matmul %1, %2, %cst {dimension_numbers = #tpu.dot_dimension_numbers<[1], [0], [0], [1], [0, 0, 1, 1], [], []>} : vector<128x256xbf16>, vector<256x32xbf16>, vector<128x32xf32> -> vector<128x32xf32>
    %cst_3 = arith.constant 0.000000e+00 : f32
    %4 = vector.broadcast %cst_3 : f32 to vector<128x32xf32>
    %5 = arith.maximumf %3, %4 : vector<128x32xf32>
    %c0_4 = arith.constant 0 : index
    %c0_5 = arith.constant 0 : index
    %6 = vector.load %arg3[%c0_4, %c0_5] : memref<128x32xf32, #tpu.memory_space<vmem>>, vector<128x32xf32>
    tpu.vector_store %arg3[%c0_4, %c0_5], %5 {strides = array<i32>} : memref<128x32xf32, #tpu.memory_space<vmem>>, vector<128x32xf32>,
    return
  }
  func.func @transform_0(%arg0: i32) -> (i32, i32) {
    %c0_i32 = arith.constant 0 : i32
    %c0_i32_0 = arith.constant 0 : i32
    return %arg0, %c0_i32 : i32, i32
  }
  func.func @transform_1(%arg0: i32) -> (i32, i32) {
    %c0_i32 = arith.constant 0 : i32
    %c0_i32_0 = arith.constant 0 : i32
    %c0_i32_1 = arith.constant 0 : i32
    return %c0_i32, %c0_i32_0 : i32, i32
  }
  func.func @transform_2(%arg0: i32) -> (i32, i32) {
    %c0_i32 = arith.constant 0 : i32
    %c0_i32_0 = arith.constant 0 : i32
    return %arg0, %c0_i32 : i32, i32
  }
}

module attributes {stable_mosaic.version = 11 : i64} {
  func.func @tail_kernel(%arg0: i32, %arg1: memref<2x2048xf32, #tpu.memory_space<vmem>>, %arg2: memref<2048x576xbf16, #tpu.memory_space<vmem>>, %arg3: memref<576x64xbf16, #tpu.memory_space<vmem>>, %arg4: memref<64x512xbf16, #tpu.memory_space<vmem>>, %arg5: memref<1x512xf32, #tpu.memory_space<vmem>>, %arg6: memref<512x128xbf16, #tpu.memory_space<vmem>>, %arg7: memref<1x128xf32, #tpu.memory_space<vmem>>, %arg8: memref<2x128xf32, #tpu.memory_space<vmem>>) attributes {dimension_semantics = [#tpu.dimension_semantics<parallel>], iteration_bounds = array<i64: 1>, scalar_prefetch = 0 : i64, scratch_operands = 0 : i64, tpu.core_type = #tpu.core_type<tc>, window_params = [{transform_indices = @transform_0, window_bounds = array<i64: 2, 2048>}, {pipeline_mode = #tpu.pipeline_mode<synchronous>, transform_indices = @transform_1, window_bounds = array<i64: 2048, 576>}, {pipeline_mode = #tpu.pipeline_mode<synchronous>, transform_indices = @transform_2, window_bounds = array<i64: 576, 64>}, {pipeline_mode = #tpu.pipeline_mode<synchronous>, transform_indices = @transform_3, window_bounds = array<i64: 64, 512>}, {pipeline_mode = #tpu.pipeline_mode<synchronous>, transform_indices = @transform_4, window_bounds = array<i64: 1, 512>}, {pipeline_mode = #tpu.pipeline_mode<synchronous>, transform_indices = @transform_5, window_bounds = array<i64: 512, 128>}, {pipeline_mode = #tpu.pipeline_mode<synchronous>, transform_indices = @transform_6, window_bounds = array<i64: 1, 128>}, {transform_indices = @transform_7, window_bounds = array<i64: 2, 128>}]} {
    %c0 = arith.constant 0 : index
    %c0_0 = arith.constant 0 : index
    %0 = vector.load %arg1[%c0, %c0_0] : memref<2x2048xf32, #tpu.memory_space<vmem>>, vector<2x2048xf32>
    %1 = arith.truncf %0 : vector<2x2048xf32> to vector<2x2048xbf16>
    %c0_1 = arith.constant 0 : index
    %c0_2 = arith.constant 0 : index
    %2 = vector.load %arg2[%c0_1, %c0_2] : memref<2048x576xbf16, #tpu.memory_space<vmem>>, vector<2048x576xbf16>
    %cst = arith.constant dense<0.000000e+00> : vector<2x576xf32>
    %3 = tpu.matmul %1, %2, %cst {dimension_numbers = #tpu.dot_dimension_numbers<[1], [0], [0], [1], [0, 0, 1, 1], [], []>} : vector<2x2048xbf16>, vector<2048x576xbf16>, vector<2x576xf32> -> vector<2x576xf32>
    %cst_3 = arith.constant 0.000000e+00 : f32
    %4 = vector.broadcast %cst_3 : f32 to vector<2x576xf32>
    %5 = arith.maximumf %3, %4 : vector<2x576xf32>
    %6 = arith.truncf %5 : vector<2x576xf32> to vector<2x576xbf16>
    %c0_4 = arith.constant 0 : index
    %c0_5 = arith.constant 0 : index
    %7 = vector.load %arg3[%c0_4, %c0_5] : memref<576x64xbf16, #tpu.memory_space<vmem>>, vector<576x64xbf16>
    %cst_6 = arith.constant dense<0.000000e+00> : vector<2x64xf32>
    %8 = tpu.matmul %6, %7, %cst_6 {dimension_numbers = #tpu.dot_dimension_numbers<[1], [0], [0], [1], [0, 0, 1, 1], [], []>} : vector<2x576xbf16>, vector<576x64xbf16>, vector<2x64xf32> -> vector<2x64xf32>
    %cst_7 = arith.constant 0.000000e+00 : f32
    %9 = vector.broadcast %cst_7 : f32 to vector<2x64xf32>
    %10 = arith.maximumf %8, %9 : vector<2x64xf32>
    %11 = arith.truncf %10 : vector<2x64xf32> to vector<2x64xbf16>
    %c0_8 = arith.constant 0 : index
    %c0_9 = arith.constant 0 : index
    %12 = vector.load %arg4[%c0_8, %c0_9] : memref<64x512xbf16, #tpu.memory_space<vmem>>, vector<64x512xbf16>
    %cst_10 = arith.constant dense<0.000000e+00> : vector<2x512xf32>
    %13 = tpu.matmul %11, %12, %cst_10 {dimension_numbers = #tpu.dot_dimension_numbers<[1], [0], [0], [1], [0, 0, 1, 1], [], []>} : vector<2x64xbf16>, vector<64x512xbf16>, vector<2x512xf32> -> vector<2x512xf32>
    %c0_11 = arith.constant 0 : index
    %c0_12 = arith.constant 0 : index
    %14 = vector.load %arg5[%c0_11, %c0_12] : memref<1x512xf32, #tpu.memory_space<vmem>>, vector<1x512xf32>
    %15 = vector.broadcast %14 : vector<1x512xf32> to vector<2x512xf32>
    %16 = arith.addf %13, %15 : vector<2x512xf32>
    %cst_13 = arith.constant 0.000000e+00 : f32
    %17 = vector.broadcast %cst_13 : f32 to vector<2x512xf32>
    %18 = arith.maximumf %16, %17 : vector<2x512xf32>
    %19 = arith.truncf %18 : vector<2x512xf32> to vector<2x512xbf16>
    %c0_14 = arith.constant 0 : index
    %c0_15 = arith.constant 0 : index
    %20 = vector.load %arg6[%c0_14, %c0_15] : memref<512x128xbf16, #tpu.memory_space<vmem>>, vector<512x128xbf16>
    %cst_16 = arith.constant dense<0.000000e+00> : vector<2x128xf32>
    %21 = tpu.matmul %19, %20, %cst_16 {dimension_numbers = #tpu.dot_dimension_numbers<[1], [0], [0], [1], [0, 0, 1, 1], [], []>} : vector<2x512xbf16>, vector<512x128xbf16>, vector<2x128xf32> -> vector<2x128xf32>
    %c0_17 = arith.constant 0 : index
    %c0_18 = arith.constant 0 : index
    %22 = vector.load %arg7[%c0_17, %c0_18] : memref<1x128xf32, #tpu.memory_space<vmem>>, vector<1x128xf32>
    %23 = vector.broadcast %22 : vector<1x128xf32> to vector<2x128xf32>
    %24 = arith.addf %21, %23 : vector<2x128xf32>
    %c0_19 = arith.constant 0 : index
    %c0_20 = arith.constant 0 : index
    %25 = vector.load %arg8[%c0_19, %c0_20] : memref<2x128xf32, #tpu.memory_space<vmem>>, vector<2x128xf32>
    tpu.vector_store %arg8[%c0_19, %c0_20], %24 {strides = array<i32>} : memref<2x128xf32, #tpu.memory_space<vmem>>, vector<2x128xf32>,
    return
  }
  func.func @transform_0(%arg0: i32) -> (i32, i32) {
    %c0_i32 = arith.constant 0 : i32
    %c0_i32_0 = arith.constant 0 : i32
    return %arg0, %c0_i32 : i32, i32
  }
  func.func @transform_1(%arg0: i32) -> (i32, i32) {
    %c0_i32 = arith.constant 0 : i32
    %c0_i32_0 = arith.constant 0 : i32
    %c0_i32_1 = arith.constant 0 : i32
    return %c0_i32, %c0_i32_0 : i32, i32
  }
  func.func @transform_2(%arg0: i32) -> (i32, i32) {
    %c0_i32 = arith.constant 0 : i32
    %c0_i32_0 = arith.constant 0 : i32
    %c0_i32_1 = arith.constant 0 : i32
    return %c0_i32, %c0_i32_0 : i32, i32
  }
  func.func @transform_3(%arg0: i32) -> (i32, i32) {
    %c0_i32 = arith.constant 0 : i32
    %c0_i32_0 = arith.constant 0 : i32
    %c0_i32_1 = arith.constant 0 : i32
    return %c0_i32, %c0_i32_0 : i32, i32
  }
  func.func @transform_4(%arg0: i32) -> (i32, i32) {
    %c0_i32 = arith.constant 0 : i32
    %c0_i32_0 = arith.constant 0 : i32
    %c0_i32_1 = arith.constant 0 : i32
    return %c0_i32, %c0_i32_0 : i32, i32
  }
  func.func @transform_5(%arg0: i32) -> (i32, i32) {
    %c0_i32 = arith.constant 0 : i32
    %c0_i32_0 = arith.constant 0 : i32
    %c0_i32_1 = arith.constant 0 : i32
    return %c0_i32, %c0_i32_0 : i32, i32
  }
  func.func @transform_6(%arg0: i32) -> (i32, i32) {
    %c0_i32 = arith.constant 0 : i32
    %c0_i32_0 = arith.constant 0 : i32
    %c0_i32_1 = arith.constant 0 : i32
    return %c0_i32, %c0_i32_0 : i32, i32
  }
  func.func @transform_7(%arg0: i32) -> (i32, i32) {
    %c0_i32 = arith.constant 0 : i32
    %c0_i32_0 = arith.constant 0 : i32
    return %arg0, %c0_i32 : i32, i32
  }
}

</mosaic_0001>

<llo_original>
// kernel: conv_nn_forward.2
$region0: #{conv_nn_forward.2}
  #allocation0 [shape = 'u32[]', space=smem, size = 0x4, offset = 0x4, fixed_abs, tag = 'smem constant byte address 0x4 - core index']
  #allocation1 [shape = 'u32[144,128]{1,0:T(1,128)}', space=vmem, size = 0x12000, scoped, tag = 'internal scratch']
  %s0 = inlined_call_operand.vmem [shape: f32[128,256], index: 0, kind: input, shape index: {}]
  %s1 = inlined_call_operand.vmem [shape: bf16[256,32], index: 1, kind: input, shape index: {}]
  %s2 = inlined_call_operand.vmem [shape: f32[128,32], index: 2, kind: output, shape index: {}]
  %s3 = sld [smem:[#allocation0]]
  $region18: #{conv_nn_forward.2} parent=0
    _
  %s5 = ssub.s32 1, %s3
  %s6 = scalar_select 0, %s5, %s3
  // Predicated region
  $region2: #{conv_nn_forward.2} parent=0 // pred_check
    _
  $region3: #{conv_nn_forward.2} parent=0 // pred_check_branch
    %8 = sbr.rel (0) target = $region5
  $region4: #{conv_nn_forward.2} parent=0 // pred_region
    _
  $region5: #{conv_nn_forward.2} parent=0 // pred_fallthru
    _
  // Predicated region
  $region6: #{conv_nn_forward.2} parent=0 // pred_check
    _
  $region7: #{conv_nn_forward.2} parent=0 // pred_check_branch
    %10 = sbr.rel (0) target = $region9
  $region8: #{conv_nn_forward.2} parent=0 // pred_region
    _
  $region9: #{conv_nn_forward.2} parent=0 // pred_fallthru
    _
  %v12 = vld [vmem:[%s0] sm:$0xff]
  %v13 = vld [vmem:[%s0 + $0x8] sm:$0xff]
  %v14 = vld [vmem:[%s0 + $0x10] sm:$0xff]
  %v15 = vld [vmem:[%s0 + $0x18] sm:$0xff]
  %v16 = vld [vmem:[%s0 + $0x20] sm:$0xff]
  %v17 = vld [vmem:[%s0 + $0x28] sm:$0xff]
  %v18 = vld [vmem:[%s0 + $0x30] sm:$0xff]
  %v19 = vld [vmem:[%s0 + $0x38] sm:$0xff]
  %v20 = vld [vmem:[%s0 + $0x40] sm:$0xff]
  %v21 = vld [vmem:[%s0 + $0x48] sm:$0xff]
  %v22 = vld [vmem:[%s0 + $0x50] sm:$0xff]
  %v23 = vld [vmem:[%s0 + $0x58] sm:$0xff]
  %v24 = vld [vmem:[%s0 + $0x60] sm:$0xff]
  %v25 = vld [vmem:[%s0 + $0x68] sm:$0xff]
  %v26 = vld [vmem:[%s0 + $0x70] sm:$0xff]
  %v27 = vld [vmem:[%s0 + $0x78] sm:$0xff]
  %v28 = vld [vmem:[%s0 + $0x80] sm:$0xff]
  %v29 = vld [vmem:[%s0 + $0x88] sm:$0xff]
  %v30 = vld [vmem:[%s0 + $0x90] sm:$0xff]
  %v31 = vld [vmem:[%s0 + $0x98] sm:$0xff]
  %v32 = vld [vmem:[%s0 + $0xa0] sm:$0xff]
  %v33 = vld [vmem:[%s0 + $0xa8] sm:$0xff]
  %v34 = vld [vmem:[%s0 + $0xb0] sm:$0xff]
  %v35 = vld [vmem:[%s0 + $0xb8] sm:$0xff]
  %v36 = vld [vmem:[%s0 + $0xc0] sm:$0xff]
  %v37 = vld [vmem:[%s0 + $0xc8] sm:$0xff]
  %v38 = vld [vmem:[%s0 + $0xd0] sm:$0xff]
  %v39 = vld [vmem:[%s0 + $0xd8] sm:$0xff]
  %v40 = vld [vmem:[%s0 + $0xe0] sm:$0xff]
  %v41 = vld [vmem:[%s0 + $0xe8] sm:$0xff]
  %v42 = vld [vmem:[%s0 + $0xf0] sm:$0xff]
  %v43 = vld [vmem:[%s0 + $0xf8] sm:$0xff]
  %v44 = vpack.c.bf16 %v14, %v12
  %v45 = vpack.c.bf16 %v15, %v13
  %v46 = vpack.c.bf16 %v18, %v16
  %v47 = vpack.c.bf16 %v19, %v17
  %v48 = vpack.c.bf16 %v22, %v20
  %v49 = vpack.c.bf16 %v23, %v21
  %v50 = vpack.c.bf16 %v26, %v24
  %v51 = vpack.c.bf16 %v27, %v25
  %v52 = vpack.c.bf16 %v30, %v28
  %v53 = vpack.c.bf16 %v31, %v29
  %v54 = vpack.c.bf16 %v34, %v32
  %v55 = vpack.c.bf16 %v35, %v33
  %v56 = vpack.c.bf16 %v38, %v36
  %v57 = vpack.c.bf16 %v39, %v37
  %v58 = vpack.c.bf16 %v42, %v40
  %v59 = vpack.c.bf16 %v43, %v41
  %v60 = vld [vmem:[%s1] sm:$0xf]
  %v61 = vld [vmem:[%s1 + $0x4] sm:$0xf]
  %v62 = vld [vmem:[%s1 + $0x8] sm:$0xf]
  %v63 = vld [vmem:[%s1 + $0xc] sm:$0xf]
  %v64 = vld [vmem:[%s1 + $0x10] sm:$0xf]
  %v65 = vld [vmem:[%s1 + $0x14] sm:$0xf]
  %v66 = vld [vmem:[%s1 + $0x18] sm:$0xf]
  %v67 = vld [vmem:[%s1 + $0x1c] sm:$0xf]
  %v68 = vld [vmem:[%s1 + $0x20] sm:$0xf]
  %v69 = vld [vmem:[%s1 + $0x24] sm:$0xf]
  %v70 = vld [vmem:[%s1 + $0x28] sm:$0xf]
  %v71 = vld [vmem:[%s1 + $0x2c] sm:$0xf]
  %v72 = vld [vmem:[%s1 + $0x30] sm:$0xf]
  %v73 = vld [vmem:[%s1 + $0x34] sm:$0xf]
  %v74 = vld [vmem:[%s1 + $0x38] sm:$0xf]
  %v75 = vld [vmem:[%s1 + $0x3c] sm:$0xf]
  %v76 = vld [vmem:[%s1 + $0x40] sm:$0xf]
  %v77 = vld [vmem:[%s1 + $0x44] sm:$0xf]
  %v78 = vld [vmem:[%s1 + $0x48] sm:$0xf]
  %v79 = vld [vmem:[%s1 + $0x4c] sm:$0xf]
  %v80 = vld [vmem:[%s1 + $0x50] sm:$0xf]
  %v81 = vld [vmem:[%s1 + $0x54] sm:$0xf]
  %v82 = vld [vmem:[%s1 + $0x58] sm:$0xf]
  %v83 = vld [vmem:[%s1 + $0x5c] sm:$0xf]
  %v84 = vld [vmem:[%s1 + $0x60] sm:$0xf]
  %v85 = vld [vmem:[%s1 + $0x64] sm:$0xf]
  %v86 = vld [vmem:[%s1 + $0x68] sm:$0xf]
  %v87 = vld [vmem:[%s1 + $0x6c] sm:$0xf]
  %v88 = vld [vmem:[%s1 + $0x70] sm:$0xf]
  %v89 = vld [vmem:[%s1 + $0x74] sm:$0xf]
  %v90 = vld [vmem:[%s1 + $0x78] sm:$0xf]
  %v91 = vld [vmem:[%s1 + $0x7c] sm:$0xf]
  %v124 = vunpack.c.l.b16 %v60
  %v125 = vunpack.c.l.b16 %v61
  %v126 = vunpack.c.l.b16 %v62
  %v127 = vunpack.c.l.b16 %v63
  %v128 = vunpack.c.l.b16 %v64
  %v129 = vunpack.c.l.b16 %v65
  %v130 = vunpack.c.l.b16 %v66
  %v131 = vunpack.c.l.b16 %v67
  %v132 = vunpack.c.l.b16 %v68
  %v133 = vunpack.c.l.b16 %v69
  %v134 = vunpack.c.l.b16 %v70
  %v135 = vunpack.c.l.b16 %v71
  %v136 = vunpack.c.l.b16 %v72
  %v137 = vunpack.c.l.b16 %v73
  %v138 = vunpack.c.l.b16 %v74
  %v139 = vunpack.c.l.b16 %v75
  %v140 = vunpack.c.l.b16 %v76
  %v141 = vunpack.c.l.b16 %v77
  %v142 = vunpack.c.l.b16 %v78
  %v143 = vunpack.c.l.b16 %v79
  %v144 = vunpack.c.l.b16 %v80
  %v145 = vunpack.c.l.b16 %v81
  %v146 = vunpack.c.l.b16 %v82
  %v147 = vunpack.c.l.b16 %v83
  %v148 = vunpack.c.l.b16 %v84
  %v149 = vunpack.c.l.b16 %v85
  %v150 = vunpack.c.l.b16 %v86
  %v151 = vunpack.c.l.b16 %v87
  %v152 = vunpack.c.l.b16 %v88
  %v153 = vunpack.c.l.b16 %v89
  %v154 = vunpack.c.l.b16 %v90
  %v155 = vunpack.c.l.b16 %v91
  %v156 = vpack.c.b16 %v125, %v124
  %v157 = vpack.c.b16 %v127, %v126
  %v158 = vpack.c.b16 %v129, %v128
  %v159 = vpack.c.b16 %v131, %v130
  %v160 = vpack.c.b16 %v133, %v132
  %v161 = vpack.c.b16 %v135, %v134
  %v162 = vpack.c.b16 %v137, %v136
  %v163 = vpack.c.b16 %v139, %v138
  %v164 = vpack.c.b16 %v141, %v140
  %v165 = vpack.c.b16 %v143, %v142
  %v166 = vpack.c.b16 %v145, %v144
  %v167 = vpack.c.b16 %v147, %v146
  %v168 = vpack.c.b16 %v149, %v148
  %v169 = vpack.c.b16 %v151, %v150
  %v170 = vpack.c.b16 %v153, %v152
  %v171 = vpack.c.b16 %v155, %v154
  %188 = vmatprep.subr.bf16.mxu0 0
  %189 = vmatpush1.bf16.msra.mxu0 %v156
  %190 = vmatprep.subr.bf16.mxu0 0
  %191 = vmatpush1.bf16.msra.mxu0 %v157
  %192 = vmatprep.subr.bf16.mxu0 0
  %193 = vmatpush1.bf16.msra.mxu0 %v158
  %194 = vmatprep.subr.bf16.mxu0 0
  %195 = vmatpush1.bf16.msra.mxu0 %v159
  %196 = vmatprep.subr.bf16.mxu0 0
  %197 = vmatpush1.bf16.msra.mxu0 %v160
  %198 = vmatprep.subr.bf16.mxu0 0
  %199 = vmatpush1.bf16.msra.mxu0 %v161
  %200 = vmatprep.subr.bf16.mxu0 0
  %201 = vmatpush1.bf16.msra.mxu0 %v162
  %202 = vmatprep.subr.bf16.mxu0 0
  %203 = vmatpush1.bf16.msra.mxu0 %v163
  %204 = vmatprep.subr.bf16.mxu0 0
  %205 = vmatpush1.bf16.msra.mxu0 %v164
  %206 = vmatprep.subr.bf16.mxu0 0
  %207 = vmatpush1.bf16.msra.mxu0 %v165
  %208 = vmatprep.subr.bf16.mxu0 0
  %209 = vmatpush1.bf16.msra.mxu0 %v166
  %210 = vmatprep.subr.bf16.mxu0 0
  %211 = vmatpush1.bf16.msra.mxu0 %v167
  %212 = vmatprep.subr.bf16.mxu0 0
  %213 = vmatpush1.bf16.msra.mxu0 %v168
  %214 = vmatprep.subr.bf16.mxu0 0
  %215 = vmatpush1.bf16.msra.mxu0 %v169
  %216 = vmatprep.subr.bf16.mxu0 0
  %217 = vmatpush1.bf16.msra.mxu0 %v170
  %218 = vmatprep.subr.bf16.mxu0 0
  %219 = vmatpush1.bf16.msra.mxu0 %v171
  %220 = vmatprep.mubr.bf16.mxu0 %v45
  %221 = vmatmul.mubr.bf16.gmra.mrb[0].mxu0 %v44
  %v222 = vpop.f32.mrb[0].mxu0
  %v223 = vadd.f32 0.0, %v222
  %v224 = vpop.f32.mrb[0].mxu0
  %v225 = vpop.f32.mrb[0].mxu0
  %v226 = vadd.f32 0.0, %v225
  %v227 = vpop.f32.mrb[0].mxu0
  %228 = vmatprep.mubr.bf16.mxu0 %v47
  %229 = vmatmul.mubr.bf16.gmra.mrb[0].mxu0 %v46
  %v230 = vpop.f32.mrb[0].mxu0
  %v231 = vadd.f32 0.0, %v230
  %v232 = vpop.f32.mrb[0].mxu0
  %v233 = vpop.f32.mrb[0].mxu0
  %v234 = vadd.f32 0.0, %v233
  %v235 = vpop.f32.mrb[0].mxu0
  %236 = vmatprep.mubr.bf16.mxu0 %v49
  %237 = vmatmul.mubr.bf16.gmra.mrb[0].mxu0 %v48
  %v238 = vpop.f32.mrb[0].mxu0
  %v239 = vadd.f32 0.0, %v238
  %v240 = vpop.f32.mrb[0].mxu0
  %v241 = vpop.f32.mrb[0].mxu0
  %v242 = vadd.f32 0.0, %v241
  %v243 = vpop.f32.mrb[0].mxu0
  %244 = vmatprep.mubr.bf16.mxu0 %v51
  %245 = vmatmul.mubr.bf16.gmra.mrb[0].mxu0 %v50
  %v246 = vpop.f32.mrb[0].mxu0
  %v247 = vadd.f32 0.0, %v246
  %v248 = vpop.f32.mrb[0].mxu0
  %v249 = vpop.f32.mrb[0].mxu0
  %v250 = vadd.f32 0.0, %v249
  %v251 = vpop.f32.mrb[0].mxu0
  %252 = vmatprep.mubr.bf16.mxu0 %v53
  %253 = vmatmul.mubr.bf16.gmra.mrb[0].mxu0 %v52
  %v254 = vpop.f32.mrb[0].mxu0
  %v255 = vadd.f32 0.0, %v254
  %v256 = vpop.f32.mrb[0].mxu0
  %v257 = vpop.f32.mrb[0].mxu0
  %v258 = vadd.f32 0.0, %v257
  %v259 = vpop.f32.mrb[0].mxu0
  %260 = vmatprep.mubr.bf16.mxu0 %v55
  %261 = vmatmul.mubr.bf16.gmra.mrb[0].mxu0 %v54
  %v262 = vpop.f32.mrb[0].mxu0
  %v263 = vadd.f32 0.0, %v262
  %v264 = vpop.f32.mrb[0].mxu0
  %v265 = vpop.f32.mrb[0].mxu0
  %v266 = vadd.f32 0.0, %v265
  %v267 = vpop.f32.mrb[0].mxu0
  %268 = vmatprep.mubr.bf16.mxu0 %v57
  %269 = vmatmul.mubr.bf16.gmra.mrb[0].mxu0 %v56
  %v270 = vpop.f32.mrb[0].mxu0
  %v271 = vadd.f32 0.0, %v270
  %v272 = vpop.f32.mrb[0].mxu0
  %v273 = vpop.f32.mrb[0].mxu0
  %v274 = vadd.f32 0.0, %v273
  %v275 = vpop.f32.mrb[0].mxu0
  %276 = vmatprep.mubr.bf16.mxu0 %v59
  %277 = vmatmul.mubr.bf16.gmra.mrb[0].mxu0 %v58
  %v278 = vpop.f32.mrb[0].mxu0
  %v279 = vadd.f32 0.0, %v278
  %v280 = vpop.f32.mrb[0].mxu0
  %v281 = vpop.f32.mrb[0].mxu0
  %v282 = vadd.f32 0.0, %v281
  %v283 = vpop.f32.mrb[0].mxu0
  %284 = vdwg.mxu0
  %v285 = vmax.f32 %v223, 0.0
  %v286 = vmax.f32 %v226, 0.0
  %v287 = vmax.f32 %v231, 0.0
  %v288 = vmax.f32 %v234, 0.0
  %v289 = vmax.f32 %v239, 0.0
  %v290 = vmax.f32 %v242, 0.0
  %v291 = vmax.f32 %v247, 0.0
  %v292 = vmax.f32 %v250, 0.0
  %v293 = vmax.f32 %v255, 0.0
  %v294 = vmax.f32 %v258, 0.0
  %v295 = vmax.f32 %v263, 0.0
  %v296 = vmax.f32 %v266, 0.0
  %v297 = vmax.f32 %v271, 0.0
  %v298 = vmax.f32 %v274, 0.0
  %v299 = vmax.f32 %v279, 0.0
  %v300 = vmax.f32 %v282, 0.0
  %vm301 = vcmask 261120
  %302 = vst.msk [vmem:[%s2] sm:$0xff] %vm301, %v285
  %303 = vst.msk [vmem:[%s2 + $0x8] sm:$0xff] %vm301, %v286
  %304 = vst.msk [vmem:[%s2 + $0x10] sm:$0xff] %vm301, %v287
  %305 = vst.msk [vmem:[%s2 + $0x18] sm:$0xff] %vm301, %v288
  %306 = vst.msk [vmem:[%s2 + $0x20] sm:$0xff] %vm301, %v289
  %307 = vst.msk [vmem:[%s2 + $0x28] sm:$0xff] %vm301, %v290
  %308 = vst.msk [vmem:[%s2 + $0x30] sm:$0xff] %vm301, %v291
  %309 = vst.msk [vmem:[%s2 + $0x38] sm:$0xff] %vm301, %v292
  %310 = vst.msk [vmem:[%s2 + $0x40] sm:$0xff] %vm301, %v293
  %311 = vst.msk [vmem:[%s2 + $0x48] sm:$0xff] %vm301, %v294
  %312 = vst.msk [vmem:[%s2 + $0x50] sm:$0xff] %vm301, %v295
  %313 = vst.msk [vmem:[%s2 + $0x58] sm:$0xff] %vm301, %v296
  %314 = vst.msk [vmem:[%s2 + $0x60] sm:$0xff] %vm301, %v297
  %315 = vst.msk [vmem:[%s2 + $0x68] sm:$0xff] %vm301, %v298
  %316 = vst.msk [vmem:[%s2 + $0x70] sm:$0xff] %vm301, %v299
  %317 = vst.msk [vmem:[%s2 + $0x78] sm:$0xff] %vm301, %v300
  // Predicated region
  $region10: #{conv_nn_forward.2} parent=0 // pred_check
    _
  $region11: #{conv_nn_forward.2} parent=0 // pred_check_branch
    %319 = sbr.rel (0) target = $region13
  $region12: #{conv_nn_forward.2} parent=0 // pred_region
    _
  $region13: #{conv_nn_forward.2} parent=0 // pred_fallthru
    _
  // Predicated region
  $region14: #{conv_nn_forward.2} parent=0 // pred_check
    _
  $region15: #{conv_nn_forward.2} parent=0 // pred_check_branch
    %321 = sbr.rel (0) target = $region17
  $region16: #{conv_nn_forward.2} parent=0 // pred_region
    _
  $region17: #{conv_nn_forward.2} parent=0 // pred_fallthru
    _

// kernel: conv_nn_forward.3
$region0: #{conv_nn_forward.3}
  #allocation0 [shape = 'u32[]', space=smem, size = 0x4, offset = 0x4, fixed_abs, tag = 'smem constant byte address 0x4 - core index']
  #allocation1 [shape = 'u32[144,128]{1,0:T(1,128)}', space=vmem, size = 0x12000, scoped, tag = 'internal scratch']
  %s0 = inlined_call_operand.vmem [shape: f32[2,2048], index: 0, kind: input, shape index: {}]
  %s1 = inlined_call_operand.vmem [shape: bf16[2048,576], index: 1, kind: input, shape index: {}]
  %s2 = inlined_call_operand.vmem [shape: bf16[576,64], index: 2, kind: input, shape index: {}]
  %s3 = inlined_call_operand.vmem [shape: bf16[64,512], index: 3, kind: input, shape index: {}]
  %s4 = inlined_call_operand.vmem [shape: f32[1,512], index: 4, kind: input, shape index: {}]
  %s5 = inlined_call_operand.vmem [shape: bf16[512,128], index: 5, kind: input, shape index: {}]
  %s6 = inlined_call_operand.vmem [shape: f32[1,128], index: 6, kind: input, shape index: {}]
  %s7 = inlined_call_operand.hbm [shape: f32[2,128], index: 7, kind: output, shape index: {}]
  %s8 = sld [smem:[#allocation0]]
  $region38: #{conv_nn_forward.3} parent=0
    _
  %s10 = ssub.s32 1, %s8
  %s11 = scalar_select 0, %s10, %s8
  $region1: #{conv_nn_forward.3} parent=0
    #allocation2 [shape = 'u8[1024]{0}', space=vmem, size = 0x400, scoped, tag = 'output window, operand 0, single buffered']
    #allocation3 [shape = 's32[1]{0}', space=sflag, size = 0x4, scoped, tag = 'scoped memory for conv_nn_forward.3']
    %12 = vsyncpa [#allocation3], 0
    // Predicated region
    $region2: #{conv_nn_forward.3} parent=1 // pred_check
      _
    $region3: #{conv_nn_forward.3} parent=1 // pred_check_branch
      %14 = sbr.rel (0) target = $region5
    $region4: #{conv_nn_forward.3} parent=1 // pred_region
      _
    $region5: #{conv_nn_forward.3} parent=1 // pred_fallthru
      _
    // Predicated region
    $region6: #{conv_nn_forward.3} parent=1 // pred_check
      _
    $region7: #{conv_nn_forward.3} parent=1 // pred_check_branch
      %16 = sbr.rel (0) target = $region9
    $region8: #{conv_nn_forward.3} parent=1 // pred_region
      _
    $region9: #{conv_nn_forward.3} parent=1 // pred_fallthru
      _
    // Predicated region
    $region10: #{conv_nn_forward.3} parent=1 // pred_check
      _
    $region11: #{conv_nn_forward.3} parent=1 // pred_check_branch
      %18 = sbr.rel (0) target = $region13
    $region12: #{conv_nn_forward.3} parent=1 // pred_region
      _
    $region13: #{conv_nn_forward.3} parent=1 // pred_fallthru
      _
    // Predicated region
    $region14: #{conv_nn_forward.3} parent=1 // pred_check
      _
    $region15: #{conv_nn_forward.3} parent=1 // pred_check_branch
      %20 = sbr.rel (0) target = $region17
    $region16: #{conv_nn_forward.3} parent=1 // pred_region
      _
    $region17: #{conv_nn_forward.3} parent=1 // pred_fallthru
      _
    // Predicated region
    $region18: #{conv_nn_forward.3} parent=1 // pred_check
      _
    $region19: #{conv_nn_forward.3} parent=1 // pred_check_branch
      %22 = sbr.rel (0) target = $region21
    $region20: #{conv_nn_forward.3} parent=1 // pred_region
      _
    $region21: #{conv_nn_forward.3} parent=1 // pred_fallthru
      _
    // Predicated region
    $region22: #{conv_nn_forward.3} parent=1 // pred_check
      _
    $region23: #{conv_nn_forward.3} parent=1 // pred_check_branch
      %24 = sbr.rel (0) target = $region25
    $region24: #{conv_nn_forward.3} parent=1 // pred_region
      _
    $region25: #{conv_nn_forward.3} parent=1 // pred_fallthru
      _
    // Predicated region
    $region26: #{conv_nn_forward.3} parent=1 // pred_check
      _
    $region27: #{conv_nn_forward.3} parent=1 // pred_check_branch
      %26 = sbr.rel (0) target = $region29
    $region28: #{conv_nn_forward.3} parent=1 // pred_region
      _
    $region29: #{conv_nn_forward.3} parent=1 // pred_fallthru
      _
    %v28 = vld [vmem:[%s0] sm:$0xff]
    %v29 = vld [vmem:[%s0 + $0x8] sm:$0xff]
    %v30 = vld [vmem:[%s0 + $0x10] sm:$0xff]
    %v31 = vld [vmem:[%s0 + $0x18] sm:$0xff]
    %v36 = vcombine.high %v28, %v28
    %v38 = vunpack.c.l.s4 1983009808
    %v39 = vunpack.c.0.s8 %v38
    %v40 = vlaneseq
    %v41 = vshrl.u32 %v40, 7
    %v42 = vsub.s32 %v39, %v41
    %v43 = vrot.slane %v28, %v42
    %v45 = vunpack.c.l.s4 1983009808
    %v46 = vunpack.c.0.s8 %v45
    %v47 = vlaneseq
    %v48 = vshrl.u32 %v47, 7
    %v49 = vsub.s32 %v46, %v48
    %v50 = vrot.slane %v36, %v49
    %v51 = vcombine.high %v43, %v43
    %v52 = vcombine.high %v50, %v50
    %v53 = vcombine.high %v29, %v29
    %v55 = vunpack.c.l.s4 1983009808
    %v56 = vunpack.c.0.s8 %v55
    %v57 = vlaneseq
    %v58 = vshrl.u32 %v57, 7
    %v59 = vsub.s32 %v56, %v58
    %v60 = vrot.slane %v29, %v59
    %v62 = vunpack.c.l.s4 1983009808
    %v63 = vunpack.c.0.s8 %v62
    %v64 = vlaneseq
    %v65 = vshrl.u32 %v64, 7
    %v66 = vsub.s32 %v63, %v65
    %v67 = vrot.slane %v53, %v66
    %v68 = vcombine.high %v60, %v60
    %v69 = vcombine.high %v67, %v67
    %v70 = vcombine.high %v30, %v30
    %v72 = vunpack.c.l.s4 1983009808
    %v73 = vunpack.c.0.s8 %v72
    %v74 = vlaneseq
    %v75 = vshrl.u32 %v74, 7
    %v76 = vsub.s32 %v73, %v75
    %v77 = vrot.slane %v30, %v76
    %v79 = vunpack.c.l.s4 1983009808
    %v80 = vunpack.c.0.s8 %v79
    %v81 = vlaneseq
    %v82 = vshrl.u32 %v81, 7
    %v83 = vsub.s32 %v80, %v82
    %v84 = vrot.slane %v70, %v83
    %v85 = vcombine.high %v77, %v77
    %v86 = vcombine.high %v84, %v84
    %v87 = vcombine.high %v31, %v31
    %v89 = vunpack.c.l.s4 1983009808
    %v90 = vunpack.c.0.s8 %v89
    %v91 = vlaneseq
    %v92 = vshrl.u32 %v91, 7
    %v93 = vsub.s32 %v90, %v92
    %v94 = vrot.slane %v31, %v93
    %v96 = vunpack.c.l.s4 1983009808
    %v97 = vunpack.c.0.s8 %v96
    %v98 = vlaneseq
    %v99 = vshrl.u32 %v98, 7
    %v100 = vsub.s32 %v97, %v99
    %v101 = vrot.slane %v87, %v100
    %v102 = vcombine.high %v94, %v94
    %v103 = vcombine.high %v101, %v101
    %v120 = vpack.c.bf16 %v43, %v43
    %v121 = vpack.c.bf16 %v51, %v51
    %v122 = vpack.c.bf16 %v50, %v50
    %v123 = vpack.c.bf16 %v52, %v52
    %v124 = vpack.c.bf16 %v60, %v60
    %v125 = vpack.c.bf16 %v68, %v68
    %v126 = vpack.c.bf16 %v67, %v67
    %v127 = vpack.c.bf16 %v69, %v69
    %v128 = vpack.c.bf16 %v77, %v77
    %v129 = vpack.c.bf16 %v85, %v85
    %v130 = vpack.c.bf16 %v84, %v84
    %v131 = vpack.c.bf16 %v86, %v86
    %v132 = vpack.c.bf16 %v94, %v94
    %v133 = vpack.c.bf16 %v102, %v102
    %v134 = vpack.c.bf16 %v101, %v101
    %v135 = vpack.c.bf16 %v103, %v103
    %v136 = vld [vmem:[%s1] sm:$0xff]
    %v137 = vld [vmem:[%s1 + $0x8] sm:$0xff]
    %v138 = vld [vmem:[%s1 + $0x10] sm:$0xf]
    %v139 = vld [vmem:[%s1 + $0x14] sm:$0xff]
    %v140 = vld [vmem:[%s1 + $0x1c] sm:$0xff]
    %v141 = vld [vmem:[%s1 + $0x24] sm:$0xf]
    %v142 = vld [vmem:[%s1 + $0x28] sm:$0xff]
    %v143 = vld [vmem:[%s1 + $0x30] sm:$0xff]
    %v144 = vld [vmem:[%s1 + $0x38] sm:$0xf]
    %v145 = vld [vmem:[%s1 + $0x3c] sm:$0xff]
    %v146 = vld [vmem:[%s1 + $0x44] sm:$0xff]
    %v147 = vld [vmem:[%s1 + $0x4c] sm:$0xf]
    %v148 = vld [vmem:[%s1 + $0x50] sm:$0xff]
    %v149 = vld [vmem:[%s1 + $0x58] sm:$0xff]
    %v150 = vld [vmem:[%s1 + $0x60] sm:$0xf]
    %v151 = vld [vmem:[%s1 + $0x64] sm:$0xff]
    %v152 = vld [vmem:[%s1 + $0x6c] sm:$0xff]
    %v153 = vld [vmem:[%s1 + $0x74] sm:$0xf]
    %v154 = vld [vmem:[%s1 + $0x78] sm:$0xff]
    %v155 = vld [vmem:[%s1 + $0x80] sm:$0xff]
    %v156 = vld [vmem:[%s1 + $0x88] sm:$0xf]
    %v157 = vld [vmem:[%s1 + $0x8c] sm:$0xff]
    %v158 = vld [vmem:[%s1 + $0x94] sm:$0xff]
    %v159 = vld [vmem:[%s1 + $0x9c] sm:$0xf]
    %v160 = vld [vmem:[%s1 + $0xa0] sm:$0xff]
    %v161 = vld [vmem:[%s1 + $0xa8] sm:$0xff]
    %v162 = vld [vmem:[%s1 + $0xb0] sm:$0xf]
    %v163 = vld [vmem:[%s1 + $0xb4] sm:$0xff]
    %v164 = vld [vmem:[%s1 + $0xbc] sm:$0xff]
    %v165 = vld [vmem:[%s1 + $0xc4] sm:$0xf]
    %v166 = vld [vmem:[%s1 + $0xc8] sm:$0xff]
    %v167 = vld [vmem:[%s1 + $0xd0] sm:$0xff]
    %v168 = vld [vmem:[%s1 + $0xd8] sm:$0xf]
    %v169 = vld [vmem:[%s1 + $0xdc] sm:$0xff]
    %v170 = vld [vmem:[%s1 + $0xe4] sm:$0xff]
    %v171 = vld [vmem:[%s1 + $0xec] sm:$0xf]
    %v172 = vld [vmem:[%s1 + $0xf0] sm:$0xff]
    %v173 = vld [vmem:[%s1 + $0xf8] sm:$0xff]
    %v174 = vld [vmem:[%s1 + $0x100] sm:$0xf]
    %v175 = vld [vmem:[%s1 + $0x104] sm:$0xff]
    %v176 = vld [vmem:[%s1 + $0x10c] sm:$0xff]
    %v177 = vld [vmem:[%s1 + $0x114] sm:$0xf]
    %v178 = vld [vmem:[%s1 + $0x118] sm:$0xff]
    %v179 = vld [vmem:[%s1 + $0x120] sm:$0xff]
    %v180 = vld [vmem:[%s1 + $0x128] sm:$0xf]
    %v181 = vld [vmem:[%s1 + $0x12c] sm:$0xff]
    %v182 = vld [vmem:[%s1 + $0x134] sm:$0xff]
    %v183 = vld [vmem:[%s1 + $0x13c] sm:$0xf]
    %v184 = vld [vmem:[%s1 + $0x140] sm:$0xff]
    %v185 = vld [vmem:[%s1 + $0x148] sm:$0xff]
    %v186 = vld [vmem:[%s1 + $0x150] sm:$0xf]
    %v187 = vld [vmem:[%s1 + $0x154] sm:$0xff]
    %v188 = vld [vmem:[%s1 + $0x15c] sm:$0xff]
    %v189 = vld [vmem:[%s1 + $0x164] sm:$0xf]
    %v190 = vld [vmem:[%s1 + $0x168] sm:$0xff]
    %v191 = vld [vmem:[%s1 + $0x170] sm:$0xff]
    %v192 = vld [vmem:[%s1 + $0x178] sm:$0xf]
    %v193 = vld [vmem:[%s1 + $0x17c] sm:$0xff]
    %v194 = vld [vmem:[%s1 + $0x184] sm:$0xff]
    %v195 = vld [vmem:[%s1 + $0x18c] sm:$0xf]
    %v196 = vld [vmem:[%s1 + $0x190] sm:$0xff]
    %v197 = vld [vmem:[%s1 + $0x198] sm:$0xff]
    %v198 = vld [vmem:[%s1 + $0x1a0] sm:$0xf]
    %v199 = vld [vmem:[%s1 + $0x1a4] sm:$0xff]
    %v200 = vld [vmem:[%s1 + $0x1ac] sm:$0xff]
    %v201 = vld [vmem:[%s1 + $0x1b4] sm:$0xf]
    %v202 = vld [vmem:[%s1 + $0x1b8] sm:$0xff]
    %v203 = vld [vmem:[%s1 + $0x1c0] sm:$0xff]
    %v204 = vld [vmem:[%s1 + $0x1c8] sm:$0xf]
    %v205 = vld [vmem:[%s1 + $0x1cc] sm:$0xff]
    %v206 = vld [vmem:[%s1 + $0x1d4] sm:$0xff]
    %v207 = vld [vmem:[%s1 + $0x1dc] sm:$0xf]
    %v208 = vld [vmem:[%s1 + $0x1e0] sm:$0xff]
    %v209 = vld [vmem:[%s1 + $0x1e8] sm:$0xff]
    %v210 = vld [vmem:[%s1 + $0x1f0] sm:$0xf]
    %v211 = vld [vmem:[%s1 + $0x1f4] sm:$0xff]
    %v212 = vld [vmem:[%s1 + $0x1fc] sm:$0xff]
    %v213 = vld [vmem:[%s1 + $0x204] sm:$0xf]
    %v214 = vld [vmem:[%s1 + $0x208] sm:$0xff]
    %v215 = vld [vmem:[%s1 + $0x210] sm:$0xff]
    %v216 = vld [vmem:[%s1 + $0x218] sm:$0xf]
    %v217 = vld [vmem:[%s1 + $0x21c] sm:$0xff]
    %v218 = vld [vmem:[%s1 + $0x224] sm:$0xff]
    %v219 = vld [vmem:[%s1 + $0x22c] sm:$0xf]
    %v220 = vld [vmem:[%s1 + $0x230] sm:$0xff]
    %v221 = vld [vmem:[%s1 + $0x238] sm:$0xff]
    %v222 = vld [vmem:[%s1 + $0x240] sm:$0xf]
    %v223 = vld [vmem:[%s1 + $0x244] sm:$0xff]
    %v224 = vld [vmem:[%s1 + $0x24c] sm:$0xff]
    %v225 = vld [vmem:[%s1 + $0x254] sm:$0xf]
    %v226 = vld [vmem:[%s1 + $0x258] sm:$0xff]
    %v227 = vld [vmem:[%s1 + $0x260] sm:$0xff]
    %v228 = vld [vmem:[%s1 + $0x268] sm:$0xf]
    %v229 = vld [vmem:[%s1 + $0x26c] sm:$0xff]
    %v230 = vld [vmem:[%s1 + $0x274] sm:$0xff]
    %v231 = vld [vmem:[%s1 + $0x27c] sm:$0xf]
    %v232 = vld [vmem:[%s1 + $0x280] sm:$0xff]
    %v233 = vld [vmem:[%s1 + $0x288] sm:$0xff]
    %v234 = vld [vmem:[%s1 + $0x290] sm:$0xf]
    %v235 = vld [vmem:[%s1 + $0x294] sm:$0xff]
    %v236 = vld [vmem:[%s1 + $0x29c] sm:$0xff]
    %v237 = vld [vmem:[%s1 + $0x2a4] sm:$0xf]
    %v238 = vld [vmem:[%s1 + $0x2a8] sm:$0xff]
    %v239 = vld [vmem:[%s1 + $0x2b0] sm:$0xff]
    %v240 = vld [vmem:[%s1 + $0x2b8] sm:$0xf]
    %v241 = vld [vmem:[%s1 + $0x2bc] sm:$0xff]
    %v242 = vld [vmem:[%s1 + $0x2c4] sm:$0xff]
    %v243 = vld [vmem:[%s1 + $0x2cc] sm:$0xf]
    %v244 = vld [vmem:[%s1 + $0x2d0] sm:$0xff]
    %v245 = vld [vmem:[%s1 + $0x2d8] sm:$0xff]
    %v246 = vld [vmem:[%s1 + $0x2e0] sm:$0xf]
    %v247 = vld [vmem:[%s1 + $0x2e4] sm:$0xff]
    %v248 = vld [vmem:[%s1 + $0x2ec] sm:$0xff]
    %v249 = vld [vmem:[%s1 + $0x2f4] sm:$0xf]
    %v250 = vld [vmem:[%s1 + $0x2f8] sm:$0xff]
    %v251 = vld [vmem:[%s1 + $0x300] sm:$0xff]
    %v252 = vld [vmem:[%s1 + $0x308] sm:$0xf]
    %v253 = vld [vmem:[%s1 + $0x30c] sm:$0xff]
    %v254 = vld [vmem:[%s1 + $0x314] sm:$0xff]
    %v255 = vld [vmem:[%s1 + $0x31c] sm:$0xf]
    %v256 = vld [vmem:[%s1 + $0x320] sm:$0xff]
    %v257 = vld [vmem:[%s1 + $0x328] sm:$0xff]
    %v258 = vld [vmem:[%s1 + $0x330] sm:$0xf]
    %v259 = vld [vmem:[%s1 + $0x334] sm:$0xff]
    %v260 = vld [vmem:[%s1 + $0x33c] sm:$0xff]
    %v261 = vld [vmem:[%s1 + $0x344] sm:$0xf]
    %v262 = vld [vmem:[%s1 + $0x348] sm:$0xff]
    %v263 = vld [vmem:[%s1 + $0x350] sm:$0xff]
    %v264 = vld [vmem:[%s1 + $0x358] sm:$0xf]
    %v265 = vld [vmem:[%s1 + $0x35c] sm:$0xff]
    %v266 = vld [vmem:[%s1 + $0x364] sm:$0xff]
    %v267 = vld [vmem:[%s1 + $0x36c] sm:$0xf]
    %v268 = vld [vmem:[%s1 + $0x370] sm:$0xff]
    %v269 = vld [vmem:[%s1 + $0x378] sm:$0xff]
    %v270 = vld [vmem:[%s1 + $0x380] sm:$0xf]
    %v271 = vld [vmem:[%s1 + $0x384] sm:$0xff]
    %v272 = vld [vmem:[%s1 + $0x38c] sm:$0xff]
    %v273 = vld [vmem:[%s1 + $0x394] sm:$0xf]
    %v274 = vld [vmem:[%s1 + $0x398] sm:$0xff]
    %v275 = vld [vmem:[%s1 + $0x3a0] sm:$0xff]
    %v276 = vld [vmem:[%s1 + $0x3a8] sm:$0xf]
    %v277 = vld [vmem:[%s1 + $0x3ac] sm:$0xff]
    %v278 = vld [vmem:[%s1 + $0x3b4] sm:$0xff]
    %v279 = vld [vmem:[%s1 + $0x3bc] sm:$0xf]
    %v280 = vld [vmem:[%s1 + $0x3c0] sm:$0xff]
    %v281 = vld [vmem:[%s1 + $0x3c8] sm:$0xff]
    %v282 = vld [vmem:[%s1 + $0x3d0] sm:$0xf]
    %v283 = vld [vmem:[%s1 + $0x3d4] sm:$0xff]
    %v284 = vld [vmem:[%s1 + $0x3dc] sm:$0xff]
    %v285 = vld [vmem:[%s1 + $0x3e4] sm:$0xf]
    %v286 = vld [vmem:[%s1 + $0x3e8] sm:$0xff]
    %v287 = vld [vmem:[%s1 + $0x3f0] sm:$0xff]
    %v288 = vld [vmem:[%s1 + $0x3f8] sm:$0xf]
    %v289 = vld [vmem:[%s1 + $0x3fc] sm:$0xff]
    %v290 = vld [vmem:[%s1 + $0x404] sm:$0xff]
    %v291 = vld [vmem:[%s1 + $0x40c] sm:$0xf]
    %v292 = vld [vmem:[%s1 + $0x410] sm:$0xff]
    %v293 = vld [vmem:[%s1 + $0x418] sm:$0xff]
    %v294 = vld [vmem:[%s1 + $0x420] sm:$0xf]
    %v295 = vld [vmem:[%s1 + $0x424] sm:$0xff]
    %v296 = vld [vmem:[%s1 + $0x42c] sm:$0xff]
    %v297 = vld [vmem:[%s1 + $0x434] sm:$0xf]
    %v298 = vld [vmem:[%s1 + $0x438] sm:$0xff]
    %v299 = vld [vmem:[%s1 + $0x440] sm:$0xff]
    %v300 = vld [vmem:[%s1 + $0x448] sm:$0xf]
    %v301 = vld [vmem:[%s1 + $0x44c] sm:$0xff]
    %v302 = vld [vmem:[%s1 + $0x454] sm:$0xff]
    %v303 = vld [vmem:[%s1 + $0x45c] sm:$0xf]
    %v304 = vld [vmem:[%s1 + $0x460] sm:$0xff]
    %v305 = vld [vmem:[%s1 + $0x468] sm:$0xff]
    %v306 = vld [vmem:[%s1 + $0x470] sm:$0xf]
    %v307 = vld [vmem:[%s1 + $0x474] sm:$0xff]
    %v308 = vld [vmem:[%s1 + $0x47c] sm:$0xff]
    %v309 = vld [vmem:[%s1 + $0x484] sm:$0xf]
    %v310 = vld [vmem:[%s1 + $0x488] sm:$0xff]
    %v311 = vld [vmem:[%s1 + $0x490] sm:$0xff]
    %v312 = vld [vmem:[%s1 + $0x498] sm:$0xf]
    %v313 = vld [vmem:[%s1 + $0x49c] sm:$0xff]
    %v314 = vld [vmem:[%s1 + $0x4a4] sm:$0xff]
    %v315 = vld [vmem:[%s1 + $0x4ac] sm:$0xf]
    %v316 = vld [vmem:[%s1 + $0x4b0] sm:$0xff]
    %v317 = vld [vmem:[%s1 + $0x4b8] sm:$0xff]
    %v318 = vld [vmem:[%s1 + $0x4c0] sm:$0xf]
    %v319 = vld [vmem:[%s1 + $0x4c4] sm:$0xff]
    %v320 = vld [vmem:[%s1 + $0x4cc] sm:$0xff]
    %v321 = vld [vmem:[%s1 + $0x4d4] sm:$0xf]
    %v322 = vld [vmem:[%s1 + $0x4d8] sm:$0xff]
    %v323 = vld [vmem:[%s1 + $0x4e0] sm:$0xff]
    %v324 = vld [vmem:[%s1 + $0x4e8] sm:$0xf]
    %v325 = vld [vmem:[%s1 + $0x4ec] sm:$0xff]
    %v326 = vld [vmem:[%s1 + $0x4f4] sm:$0xff]
    %v327 = vld [vmem:[%s1 + $0x4fc] sm:$0xf]
    %v328 = vld [vmem:[%s1 + $0x500] sm:$0xff]
    %v329 = vld [vmem:[%s1 + $0x508] sm:$0xff]
    %v330 = vld [vmem:[%s1 + $0x510] sm:$0xf]
    %v331 = vld [vmem:[%s1 + $0x514] sm:$0xff]
    %v332 = vld [vmem:[%s1 + $0x51c] sm:$0xff]
    %v333 = vld [vmem:[%s1 + $0x524] sm:$0xf]
    %v334 = vld [vmem:[%s1 + $0x528] sm:$0xff]
    %v335 = vld [vmem:[%s1 + $0x530] sm:$0xff]
    %v336 = vld [vmem:[%s1 + $0x538] sm:$0xf]
    %v337 = vld [vmem:[%s1 + $0x53c] sm:$0xff]
    %v338 = vld [vmem:[%s1 + $0x544] sm:$0xff]
    %v339 = vld [vmem:[%s1 + $0x54c] sm:$0xf]
    %v340 = vld [vmem:[%s1 + $0x550] sm:$0xff]
    %v341 = vld [vmem:[%s1 + $0x558] sm:$0xff]
    %v342 = vld [vmem:[%s1 + $0x560] sm:$0xf]
    %v343 = vld [vmem:[%s1 + $0x564] sm:$0xff]
    %v344 = vld [vmem:[%s1 + $0x56c] sm:$0xff]
    %v345 = vld [vmem:[%s1 + $0x574] sm:$0xf]
    %v346 = vld [vmem:[%s1 + $0x578] sm:$0xff]
    %v347 = vld [vmem:[%s1 + $0x580] sm:$0xff]
    %v348 = vld [vmem:[%s1 + $0x588] sm:$0xf]
    %v349 = vld [vmem:[%s1 + $0x58c] sm:$0xff]
    %v350 = vld [vmem:[%s1 + $0x594] sm:$0xff]
    %v351 = vld [vmem:[%s1 + $0x59c] sm:$0xf]
    %v352 = vld [vmem:[%s1 + $0x5a0] sm:$0xff]
    %v353 = vld [vmem:[%s1 + $0x5a8] sm:$0xff]
    %v354 = vld [vmem:[%s1 + $0x5b0] sm:$0xf]
    %v355 = vld [vmem:[%s1 + $0x5b4] sm:$0xff]
    %v356 = vld [vmem:[%s1 + $0x5bc] sm:$0xff]
    %v357 = vld [vmem:[%s1 + $0x5c4] sm:$0xf]
    %v358 = vld [vmem:[%s1 + $0x5c8] sm:$0xff]
    %v359 = vld [vmem:[%s1 + $0x5d0] sm:$0xff]
    %v360 = vld [vmem:[%s1 + $0x5d8] sm:$0xf]
    %v361 = vld [vmem:[%s1 + $0x5dc] sm:$0xff]
    %v362 = vld [vmem:[%s1 + $0x5e4] sm:$0xff]
    %v363 = vld [vmem:[%s1 + $0x5ec] sm:$0xf]
    %v364 = vld [vmem:[%s1 + $0x5f0] sm:$0xff]
    %v365 = vld [vmem:[%s1 + $0x5f8] sm:$0xff]
    %v366 = vld [vmem:[%s1 + $0x600] sm:$0xf]
    %v367 = vld [vmem:[%s1 + $0x604] sm:$0xff]
    %v368 = vld [vmem:[%s1 + $0x60c] sm:$0xff]
    %v369 = vld [vmem:[%s1 + $0x614] sm:$0xf]
    %v370 = vld [vmem:[%s1 + $0x618] sm:$0xff]
    %v371 = vld [vmem:[%s1 + $0x620] sm:$0xff]
    %v372 = vld [vmem:[%s1 + $0x628] sm:$0xf]
    %v373 = vld [vmem:[%s1 + $0x62c] sm:$0xff]
    %v374 = vld [vmem:[%s1 + $0x634] sm:$0xff]
    %v375 = vld [vmem:[%s1 + $0x63c] sm:$0xf]
    %v376 = vld [vmem:[%s1 + $0x640] sm:$0xff]
    %v377 = vld [vmem:[%s1 + $0x648] sm:$0xff]
    %v378 = vld [vmem:[%s1 + $0x650] sm:$0xf]
    %v379 = vld [vmem:[%s1 + $0x654] sm:$0xff]
    %v380 = vld [vmem:[%s1 + $0x65c] sm:$0xff]
    %v381 = vld [vmem:[%s1 + $0x664] sm:$0xf]
    %v382 = vld [vmem:[%s1 + $0x668] sm:$0xff]
    %v383 = vld [vmem:[%s1 + $0x670] sm:$0xff]
    %v384 = vld [vmem:[%s1 + $0x678] sm:$0xf]
    %v385 = vld [vmem:[%s1 + $0x67c] sm:$0xff]
    %v386 = vld [vmem:[%s1 + $0x684] sm:$0xff]
    %v387 = vld [vmem:[%s1 + $0x68c] sm:$0xf]
    %v388 = vld [vmem:[%s1 + $0x690] sm:$0xff]
    %v389 = vld [vmem:[%s1 + $0x698] sm:$0xff]
    %v390 = vld [vmem:[%s1 + $0x6a0] sm:$0xf]
    %v391 = vld [vmem:[%s1 + $0x6a4] sm:$0xff]
    %v392 = vld [vmem:[%s1 + $0x6ac] sm:$0xff]
    %v393 = vld [vmem:[%s1 + $0x6b4] sm:$0xf]
    %v394 = vld [vmem:[%s1 + $0x6b8] sm:$0xff]
    %v395 = vld [vmem:[%s1 + $0x6c0] sm:$0xff]
    %v396 = vld [vmem:[%s1 + $0x6c8] sm:$0xf]
    %v397 = vld [vmem:[%s1 + $0x6cc] sm:$0xff]
    %v398 = vld [vmem:[%s1 + $0x6d4] sm:$0xff]
    %v399 = vld [vmem:[%s1 + $0x6dc] sm:$0xf]
    %v400 = vld [vmem:[%s1 + $0x6e0] sm:$0xff]
    %v401 = vld [vmem:[%s1 + $0x6e8] sm:$0xff]
    %v402 = vld [vmem:[%s1 + $0x6f0] sm:$0xf]
    %v403 = vld [vmem:[%s1 + $0x6f4] sm:$0xff]
    %v404 = vld [vmem:[%s1 + $0x6fc] sm:$0xff]
    %v405 = vld [vmem:[%s1 + $0x704] sm:$0xf]
    %v406 = vld [vmem:[%s1 + $0x708] sm:$0xff]
    %v407 = vld [vmem:[%s1 + $0x710] sm:$0xff]
    %v408 = vld [vmem:[%s1 + $0x718] sm:$0xf]
    %v409 = vld [vmem:[%s1 + $0x71c] sm:$0xff]
    %v410 = vld [vmem:[%s1 + $0x724] sm:$0xff]
    %v411 = vld [vmem:[%s1 + $0x72c] sm:$0xf]
    %v412 = vld [vmem:[%s1 + $0x730] sm:$0xff]
    %v413 = vld [vmem:[%s1 + $0x738] sm:$0xff]
    %v414 = vld [vmem:[%s1 + $0x740] sm:$0xf]
    %v415 = vld [vmem:[%s1 + $0x744] sm:$0xff]
    %v416 = vld [vmem:[%s1 + $0x74c] sm:$0xff]
    %v417 = vld [vmem:[%s1 + $0x754] sm:$0xf]
    %v418 = vld [vmem:[%s1 + $0x758] sm:$0xff]
    %v419 = vld [vmem:[%s1 + $0x760] sm:$0xff]
    %v420 = vld [vmem:[%s1 + $0x768] sm:$0xf]
    %v421 = vld [vmem:[%s1 + $0x76c] sm:$0xff]
    %v422 = vld [vmem:[%s1 + $0x774] sm:$0xff]
    %v423 = vld [vmem:[%s1 + $0x77c] sm:$0xf]
    %v424 = vld [vmem:[%s1 + $0x780] sm:$0xff]
    %v425 = vld [vmem:[%s1 + $0x788] sm:$0xff]
    %v426 = vld [vmem:[%s1 + $0x790] sm:$0xf]
    %v427 = vld [vmem:[%s1 + $0x794] sm:$0xff]
    %v428 = vld [vmem:[%s1 + $0x79c] sm:$0xff]
    %v429 = vld [vmem:[%s1 + $0x7a4] sm:$0xf]
    %v430 = vld [vmem:[%s1 + $0x7a8] sm:$0xff]
    %v431 = vld [vmem:[%s1 + $0x7b0] sm:$0xff]
    %v432 = vld [vmem:[%s1 + $0x7b8] sm:$0xf]
    %v433 = vld [vmem:[%s1 + $0x7bc] sm:$0xff]
    %v434 = vld [vmem:[%s1 + $0x7c4] sm:$0xff]
    %v435 = vld [vmem:[%s1 + $0x7cc] sm:$0xf]
    %v436 = vld [vmem:[%s1 + $0x7d0] sm:$0xff]
    %v437 = vld [vmem:[%s1 + $0x7d8] sm:$0xff]
    %v438 = vld [vmem:[%s1 + $0x7e0] sm:$0xf]
    %v439 = vld [vmem:[%s1 + $0x7e4] sm:$0xff]
    %v440 = vld [vmem:[%s1 + $0x7ec] sm:$0xff]
    %v441 = vld [vmem:[%s1 + $0x7f4] sm:$0xf]
    %v442 = vld [vmem:[%s1 + $0x7f8] sm:$0xff]
    %v443 = vld [vmem:[%s1 + $0x800] sm:$0xff]
    %v444 = vld [vmem:[%s1 + $0x808] sm:$0xf]
    %v445 = vld [vmem:[%s1 + $0x80c] sm:$0xff]
    %v446 = vld [vmem:[%s1 + $0x814] sm:$0xff]
    %v447 = vld [vmem:[%s1 + $0x81c] sm:$0xf]
    %v448 = vld [vmem:[%s1 + $0x820] sm:$0xff]
    %v449 = vld [vmem:[%s1 + $0x828] sm:$0xff]
    %v450 = vld [vmem:[%s1 + $0x830] sm:$0xf]
    %v451 = vld [vmem:[%s1 + $0x834] sm:$0xff]
    %v452 = vld [vmem:[%s1 + $0x83c] sm:$0xff]
    %v453 = vld [vmem:[%s1 + $0x844] sm:$0xf]
    %v454 = vld [vmem:[%s1 + $0x848] sm:$0xff]
    %v455 = vld [vmem:[%s1 + $0x850] sm:$0xff]
    %v456 = vld [vmem:[%s1 + $0x858] sm:$0xf]
    %v457 = vld [vmem:[%s1 + $0x85c] sm:$0xff]
    %v458 = vld [vmem:[%s1 + $0x864] sm:$0xff]
    %v459 = vld [vmem:[%s1 + $0x86c] sm:$0xf]
    %v460 = vld [vmem:[%s1 + $0x870] sm:$0xff]
    %v461 = vld [vmem:[%s1 + $0x878] sm:$0xff]
    %v462 = vld [vmem:[%s1 + $0x880] sm:$0xf]
    %v463 = vld [vmem:[%s1 + $0x884] sm:$0xff]
    %v464 = vld [vmem:[%s1 + $0x88c] sm:$0xff]
    %v465 = vld [vmem:[%s1 + $0x894] sm:$0xf]
    %v466 = vld [vmem:[%s1 + $0x898] sm:$0xff]
    %v467 = vld [vmem:[%s1 + $0x8a0] sm:$0xff]
    %v468 = vld [vmem:[%s1 + $0x8a8] sm:$0xf]
    %v469 = vld [vmem:[%s1 + $0x8ac] sm:$0xff]
    %v470 = vld [vmem:[%s1 + $0x8b4] sm:$0xff]
    %v471 = vld [vmem:[%s1 + $0x8bc] sm:$0xf]
    %v472 = vld [vmem:[%s1 + $0x8c0] sm:$0xff]
    %v473 = vld [vmem:[%s1 + $0x8c8] sm:$0xff]
    %v474 = vld [vmem:[%s1 + $0x8d0] sm:$0xf]
    %v475 = vld [vmem:[%s1 + $0x8d4] sm:$0xff]
    %v476 = vld [vmem:[%s1 + $0x8dc] sm:$0xff]
    %v477 = vld [vmem:[%s1 + $0x8e4] sm:$0xf]
    %v478 = vld [vmem:[%s1 + $0x8e8] sm:$0xff]
    %v479 = vld [vmem:[%s1 + $0x8f0] sm:$0xff]
    %v480 = vld [vmem:[%s1 + $0x8f8] sm:$0xf]
    %v481 = vld [vmem:[%s1 + $0x8fc] sm:$0xff]
    %v482 = vld [vmem:[%s1 + $0x904] sm:$0xff]
    %v483 = vld [vmem:[%s1 + $0x90c] sm:$0xf]
    %v484 = vld [vmem:[%s1 + $0x910] sm:$0xff]
    %v485 = vld [vmem:[%s1 + $0x918] sm:$0xff]
    %v486 = vld [vmem:[%s1 + $0x920] sm:$0xf]
    %v487 = vld [vmem:[%s1 + $0x924] sm:$0xff]
    %v488 = vld [vmem:[%s1 + $0x92c] sm:$0xff]
    %v489 = vld [vmem:[%s1 + $0x934] sm:$0xf]
    %v490 = vld [vmem:[%s1 + $0x938] sm:$0xff]
    %v491 = vld [vmem:[%s1 + $0x940] sm:$0xff]
    %v492 = vld [vmem:[%s1 + $0x948] sm:$0xf]
    %v493 = vld [vmem:[%s1 + $0x94c] sm:$0xff]
    %v494 = vld [vmem:[%s1 + $0x954] sm:$0xff]
    %v495 = vld [vmem:[%s1 + $0x95c] sm:$0xf]
    %v496 = vld [vmem:[%s1 + $0x960] sm:$0xff]
    %v497 = vld [vmem:[%s1 + $0x968] sm:$0xff]
    %v498 = vld [vmem:[%s1 + $0x970] sm:$0xf]
    %v499 = vld [vmem:[%s1 + $0x974] sm:$0xff]
    %v500 = vld [vmem:[%s1 + $0x97c] sm:$0xff]
    %v501 = vld [vmem:[%s1 + $0x984] sm:$0xf]
    %v502 = vld [vmem:[%s1 + $0x988] sm:$0xff]
    %v503 = vld [vmem:[%s1 + $0x990] sm:$0xff]
    %v504 = vld [vmem:[%s1 + $0x998] sm:$0xf]
    %v505 = vld [vmem:[%s1 + $0x99c] sm:$0xff]
    %v506 = vld [vmem:[%s1 + $0x9a4] sm:$0xff]
    %v507 = vld [vmem:[%s1 + $0x9ac] sm:$0xf]
    %v508 = vld [vmem:[%s1 + $0x9b0] sm:$0xff]
    %v509 = vld [vmem:[%s1 + $0x9b8] sm:$0xff]
    %v510 = vld [vmem:[%s1 + $0x9c0] sm:$0xf]
    %v511 = vld [vmem:[%s1 + $0x9c4] sm:$0xff]
    %v512 = vld [vmem:[%s1 + $0x9cc] sm:$0xff]
    %v513 = vld [vmem:[%s1 + $0x9d4] sm:$0xf]
    %v514 = vld [vmem:[%s1 + $0x9d8] sm:$0xff]
    %v515 = vld [vmem:[%s1 + $0x9e0] sm:$0xff]
    %v516 = vld [vmem:[%s1 + $0x9e8] sm:$0xf]
    %v517 = vld [vmem:[%s1 + $0x9ec] sm:$0xff]
    %v518 = vld [vmem:[%s1 + $0x9f4] sm:$0xff]
    %v519 = vld [vmem:[%s1 + $0x9fc] sm:$0xf]
    %v520 = vld [vmem:[%s1 + $0xa00] sm:$0xff]
    %v521 = vld [vmem:[%s1 + $0xa08] sm:$0xff]
    %v522 = vld [vmem:[%s1 + $0xa10] sm:$0xf]
    %v523 = vld [vmem:[%s1 + $0xa14] sm:$0xff]
    %v524 = vld [vmem:[%s1 + $0xa1c] sm:$0xff]
    %v525 = vld [vmem:[%s1 + $0xa24] sm:$0xf]
    %v526 = vld [vmem:[%s1 + $0xa28] sm:$0xff]
    %v527 = vld [vmem:[%s1 + $0xa30] sm:$0xff]
    %v528 = vld [vmem:[%s1 + $0xa38] sm:$0xf]
    %v529 = vld [vmem:[%s1 + $0xa3c] sm:$0xff]
    %v530 = vld [vmem:[%s1 + $0xa44] sm:$0xff]
    %v531 = vld [vmem:[%s1 + $0xa4c] sm:$0xf]
    %v532 = vld [vmem:[%s1 + $0xa50] sm:$0xff]
    %v533 = vld [vmem:[%s1 + $0xa58] sm:$0xff]
    %v534 = vld [vmem:[%s1 + $0xa60] sm:$0xf]
    %v535 = vld [vmem:[%s1 + $0xa64] sm:$0xff]
    %v536 = vld [vmem:[%s1 + $0xa6c] sm:$0xff]
    %v537 = vld [vmem:[%s1 + $0xa74] sm:$0xf]
    %v538 = vld [vmem:[%s1 + $0xa78] sm:$0xff]
    %v539 = vld [vmem:[%s1 + $0xa80] sm:$0xff]
    %v540 = vld [vmem:[%s1 + $0xa88] sm:$0xf]
    %v541 = vld [vmem:[%s1 + $0xa8c] sm:$0xff]
    %v542 = vld [vmem:[%s1 + $0xa94] sm:$0xff]
    %v543 = vld [vmem:[%s1 + $0xa9c] sm:$0xf]
    %v544 = vld [vmem:[%s1 + $0xaa0] sm:$0xff]
    %v545 = vld [vmem:[%s1 + $0xaa8] sm:$0xff]
    %v546 = vld [vmem:[%s1 + $0xab0] sm:$0xf]
    %v547 = vld [vmem:[%s1 + $0xab4] sm:$0xff]
    %v548 = vld [vmem:[%s1 + $0xabc] sm:$0xff]
    %v549 = vld [vmem:[%s1 + $0xac4] sm:$0xf]
    %v550 = vld [vmem:[%s1 + $0xac8] sm:$0xff]
    %v551 = vld [vmem:[%s1 + $0xad0] sm:$0xff]
    %v552 = vld [vmem:[%s1 + $0xad8] sm:$0xf]
    %v553 = vld [vmem:[%s1 + $0xadc] sm:$0xff]
    %v554 = vld [vmem:[%s1 + $0xae4] sm:$0xff]
    %v555 = vld [vmem:[%s1 + $0xaec] sm:$0xf]
    %v556 = vld [vmem:[%s1 + $0xaf0] sm:$0xff]
    %v557 = vld [vmem:[%s1 + $0xaf8] sm:$0xff]
    %v558 = vld [vmem:[%s1 + $0xb00] sm:$0xf]
    %v559 = vld [vmem:[%s1 + $0xb04] sm:$0xff]
    %v560 = vld [vmem:[%s1 + $0xb0c] sm:$0xff]
    %v561 = vld [vmem:[%s1 + $0xb14] sm:$0xf]
    %v562 = vld [vmem:[%s1 + $0xb18] sm:$0xff]
    %v563 = vld [vmem:[%s1 + $0xb20] sm:$0xff]
    %v564 = vld [vmem:[%s1 + $0xb28] sm:$0xf]
    %v565 = vld [vmem:[%s1 + $0xb2c] sm:$0xff]
    %v566 = vld [vmem:[%s1 + $0xb34] sm:$0xff]
    %v567 = vld [vmem:[%s1 + $0xb3c] sm:$0xf]
    %v568 = vld [vmem:[%s1 + $0xb40] sm:$0xff]
    %v569 = vld [vmem:[%s1 + $0xb48] sm:$0xff]
    %v570 = vld [vmem:[%s1 + $0xb50] sm:$0xf]
    %v571 = vld [vmem:[%s1 + $0xb54] sm:$0xff]
    %v572 = vld [vmem:[%s1 + $0xb5c] sm:$0xff]
    %v573 = vld [vmem:[%s1 + $0xb64] sm:$0xf]
    %v574 = vld [vmem:[%s1 + $0xb68] sm:$0xff]
    %v575 = vld [vmem:[%s1 + $0xb70] sm:$0xff]
    %v576 = vld [vmem:[%s1 + $0xb78] sm:$0xf]
    %v577 = vld [vmem:[%s1 + $0xb7c] sm:$0xff]
    %v578 = vld [vmem:[%s1 + $0xb84] sm:$0xff]
    %v579 = vld [vmem:[%s1 + $0xb8c] sm:$0xf]
    %v580 = vld [vmem:[%s1 + $0xb90] sm:$0xff]
    %v581 = vld [vmem:[%s1 + $0xb98] sm:$0xff]
    %v582 = vld [vmem:[%s1 + $0xba0] sm:$0xf]
    %v583 = vld [vmem:[%s1 + $0xba4] sm:$0xff]
    %v584 = vld [vmem:[%s1 + $0xbac] sm:$0xff]
    %v585 = vld [vmem:[%s1 + $0xbb4] sm:$0xf]
    %v586 = vld [vmem:[%s1 + $0xbb8] sm:$0xff]
    %v587 = vld [vmem:[%s1 + $0xbc0] sm:$0xff]
    %v588 = vld [vmem:[%s1 + $0xbc8] sm:$0xf]
    %v589 = vld [vmem:[%s1 + $0xbcc] sm:$0xff]
    %v590 = vld [vmem:[%s1 + $0xbd4] sm:$0xff]
    %v591 = vld [vmem:[%s1 + $0xbdc] sm:$0xf]
    %v592 = vld [vmem:[%s1 + $0xbe0] sm:$0xff]
    %v593 = vld [vmem:[%s1 + $0xbe8] sm:$0xff]
    %v594 = vld [vmem:[%s1 + $0xbf0] sm:$0xf]
    %v595 = vld [vmem:[%s1 + $0xbf4] sm:$0xff]
    %v596 = vld [vmem:[%s1 + $0xbfc] sm:$0xff]
    %v597 = vld [vmem:[%s1 + $0xc04] sm:$0xf]
    %v598 = vld [vmem:[%s1 + $0xc08] sm:$0xff]
    %v599 = vld [vmem:[%s1 + $0xc10] sm:$0xff]
    %v600 = vld [vmem:[%s1 + $0xc18] sm:$0xf]
    %v601 = vld [vmem:[%s1 + $0xc1c] sm:$0xff]
    %v602 = vld [vmem:[%s1 + $0xc24] sm:$0xff]
    %v603 = vld [vmem:[%s1 + $0xc2c] sm:$0xf]
    %v604 = vld [vmem:[%s1 + $0xc30] sm:$0xff]
    %v605 = vld [vmem:[%s1 + $0xc38] sm:$0xff]
    %v606 = vld [vmem:[%s1 + $0xc40] sm:$0xf]
    %v607 = vld [vmem:[%s1 + $0xc44] sm:$0xff]
    %v608 = vld [vmem:[%s1 + $0xc4c] sm:$0xff]
    %v609 = vld [vmem:[%s1 + $0xc54] sm:$0xf]
    %v610 = vld [vmem:[%s1 + $0xc58] sm:$0xff]
    %v611 = vld [vmem:[%s1 + $0xc60] sm:$0xff]
    %v612 = vld [vmem:[%s1 + $0xc68] sm:$0xf]
    %v613 = vld [vmem:[%s1 + $0xc6c] sm:$0xff]
    %v614 = vld [vmem:[%s1 + $0xc74] sm:$0xff]
    %v615 = vld [vmem:[%s1 + $0xc7c] sm:$0xf]
    %v616 = vld [vmem:[%s1 + $0xc80] sm:$0xff]
    %v617 = vld [vmem:[%s1 + $0xc88] sm:$0xff]
    %v618 = vld [vmem:[%s1 + $0xc90] sm:$0xf]
    %v619 = vld [vmem:[%s1 + $0xc94] sm:$0xff]
    %v620 = vld [vmem:[%s1 + $0xc9c] sm:$0xff]
    %v621 = vld [vmem:[%s1 + $0xca4] sm:$0xf]
    %v622 = vld [vmem:[%s1 + $0xca8] sm:$0xff]
    %v623 = vld [vmem:[%s1 + $0xcb0] sm:$0xff]
    %v624 = vld [vmem:[%s1 + $0xcb8] sm:$0xf]
    %v625 = vld [vmem:[%s1 + $0xcbc] sm:$0xff]
    %v626 = vld [vmem:[%s1 + $0xcc4] sm:$0xff]
    %v627 = vld [vmem:[%s1 + $0xccc] sm:$0xf]
    %v628 = vld [vmem:[%s1 + $0xcd0] sm:$0xff]
    %v629 = vld [vmem:[%s1 + $0xcd8] sm:$0xff]
    %v630 = vld [vmem:[%s1 + $0xce0] sm:$0xf]
    %v631 = vld [vmem:[%s1 + $0xce4] sm:$0xff]
    %v632 = vld [vmem:[%s1 + $0xcec] sm:$0xff]
    %v633 = vld [vmem:[%s1 + $0xcf4] sm:$0xf]
    %v634 = vld [vmem:[%s1 + $0xcf8] sm:$0xff]
    %v635 = vld [vmem:[%s1 + $0xd00] sm:$0xff]
    %v636 = vld [vmem:[%s1 + $0xd08] sm:$0xf]
    %v637 = vld [vmem:[%s1 + $0xd0c] sm:$0xff]
    %v638 = vld [vmem:[%s1 + $0xd14] sm:$0xff]
    %v639 = vld [vmem:[%s1 + $0xd1c] sm:$0xf]
    %v640 = vld [vmem:[%s1 + $0xd20] sm:$0xff]
    %v641 = vld [vmem:[%s1 + $0xd28] sm:$0xff]
    %v642 = vld [vmem:[%s1 + $0xd30] sm:$0xf]
    %v643 = vld [vmem:[%s1 + $0xd34] sm:$0xff]
    %v644 = vld [vmem:[%s1 + $0xd3c] sm:$0xff]
    %v645 = vld [vmem:[%s1 + $0xd44] sm:$0xf]
    %v646 = vld [vmem:[%s1 + $0xd48] sm:$0xff]
    %v647 = vld [vmem:[%s1 + $0xd50] sm:$0xff]
    %v648 = vld [vmem:[%s1 + $0xd58] sm:$0xf]
    %v649 = vld [vmem:[%s1 + $0xd5c] sm:$0xff]
    %v650 = vld [vmem:[%s1 + $0xd64] sm:$0xff]
    %v651 = vld [vmem:[%s1 + $0xd6c] sm:$0xf]
    %v652 = vld [vmem:[%s1 + $0xd70] sm:$0xff]
    %v653 = vld [vmem:[%s1 + $0xd78] sm:$0xff]
    %v654 = vld [vmem:[%s1 + $0xd80] sm:$0xf]
    %v655 = vld [vmem:[%s1 + $0xd84] sm:$0xff]
    %v656 = vld [vmem:[%s1 + $0xd8c] sm:$0xff]
    %v657 = vld [vmem:[%s1 + $0xd94] sm:$0xf]
    %v658 = vld [vmem:[%s1 + $0xd98] sm:$0xff]
    %v659 = vld [vmem:[%s1 + $0xda0] sm:$0xff]
    %v660 = vld [vmem:[%s1 + $0xda8] sm:$0xf]
    %v661 = vld [vmem:[%s1 + $0xdac] sm:$0xff]
    %v662 = vld [vmem:[%s1 + $0xdb4] sm:$0xff]
    %v663 = vld [vmem:[%s1 + $0xdbc] sm:$0xf]
    %v664 = vld [vmem:[%s1 + $0xdc0] sm:$0xff]
    %v665 = vld [vmem:[%s1 + $0xdc8] sm:$0xff]
    %v666 = vld [vmem:[%s1 + $0xdd0] sm:$0xf]
    %v667 = vld [vmem:[%s1 + $0xdd4] sm:$0xff]
    %v668 = vld [vmem:[%s1 + $0xddc] sm:$0xff]
    %v669 = vld [vmem:[%s1 + $0xde4] sm:$0xf]
    %v670 = vld [vmem:[%s1 + $0xde8] sm:$0xff]
    %v671 = vld [vmem:[%s1 + $0xdf0] sm:$0xff]
    %v672 = vld [vmem:[%s1 + $0xdf8] sm:$0xf]
    %v673 = vld [vmem:[%s1 + $0xdfc] sm:$0xff]
    %v674 = vld [vmem:[%s1 + $0xe04] sm:$0xff]
    %v675 = vld [vmem:[%s1 + $0xe0c] sm:$0xf]
    %v676 = vld [vmem:[%s1 + $0xe10] sm:$0xff]
    %v677 = vld [vmem:[%s1 + $0xe18] sm:$0xff]
    %v678 = vld [vmem:[%s1 + $0xe20] sm:$0xf]
    %v679 = vld [vmem:[%s1 + $0xe24] sm:$0xff]
    %v680 = vld [vmem:[%s1 + $0xe2c] sm:$0xff]
    %v681 = vld [vmem:[%s1 + $0xe34] sm:$0xf]
    %v682 = vld [vmem:[%s1 + $0xe38] sm:$0xff]
    %v683 = vld [vmem:[%s1 + $0xe40] sm:$0xff]
    %v684 = vld [vmem:[%s1 + $0xe48] sm:$0xf]
    %v685 = vld [vmem:[%s1 + $0xe4c] sm:$0xff]
    %v686 = vld [vmem:[%s1 + $0xe54] sm:$0xff]
    %v687 = vld [vmem:[%s1 + $0xe5c] sm:$0xf]
    %v688 = vld [vmem:[%s1 + $0xe60] sm:$0xff]
    %v689 = vld [vmem:[%s1 + $0xe68] sm:$0xff]
    %v690 = vld [vmem:[%s1 + $0xe70] sm:$0xf]
    %v691 = vld [vmem:[%s1 + $0xe74] sm:$0xff]
    %v692 = vld [vmem:[%s1 + $0xe7c] sm:$0xff]
    %v693 = vld [vmem:[%s1 + $0xe84] sm:$0xf]
    %v694 = vld [vmem:[%s1 + $0xe88] sm:$0xff]
    %v695 = vld [vmem:[%s1 + $0xe90] sm:$0xff]
    %v696 = vld [vmem:[%s1 + $0xe98] sm:$0xf]
    %v697 = vld [vmem:[%s1 + $0xe9c] sm:$0xff]
    %v698 = vld [vmem:[%s1 + $0xea4] sm:$0xff]
    %v699 = vld [vmem:[%s1 + $0xeac] sm:$0xf]
    %v700 = vld [vmem:[%s1 + $0xeb0] sm:$0xff]
    %v701 = vld [vmem:[%s1 + $0xeb8] sm:$0xff]
    %v702 = vld [vmem:[%s1 + $0xec0] sm:$0xf]
    %v703 = vld [vmem:[%s1 + $0xec4] sm:$0xff]
    %v704 = vld [vmem:[%s1 + $0xecc] sm:$0xff]
    %v705 = vld [vmem:[%s1 + $0xed4] sm:$0xf]
    %v706 = vld [vmem:[%s1 + $0xed8] sm:$0xff]
    %v707 = vld [vmem:[%s1 + $0xee0] sm:$0xff]
    %v708 = vld [vmem:[%s1 + $0xee8] sm:$0xf]
    %v709 = vld [vmem:[%s1 + $0xeec] sm:$0xff]
    %v710 = vld [vmem:[%s1 + $0xef4] sm:$0xff]
    %v711 = vld [vmem:[%s1 + $0xefc] sm:$0xf]
    %v712 = vld [vmem:[%s1 + $0xf00] sm:$0xff]
    %v713 = vld [vmem:[%s1 + $0xf08] sm:$0xff]
    %v714 = vld [vmem:[%s1 + $0xf10] sm:$0xf]
    %v715 = vld [vmem:[%s1 + $0xf14] sm:$0xff]
    %v716 = vld [vmem:[%s1 + $0xf1c] sm:$0xff]
    %v717 = vld [vmem:[%s1 + $0xf24] sm:$0xf]
    %v718 = vld [vmem:[%s1 + $0xf28] sm:$0xff]
    %v719 = vld [vmem:[%s1 + $0xf30] sm:$0xff]
    %v720 = vld [vmem:[%s1 + $0xf38] sm:$0xf]
    %v721 = vld [vmem:[%s1 + $0xf3c] sm:$0xff]
    %v722 = vld [vmem:[%s1 + $0xf44] sm:$0xff]
    %v723 = vld [vmem:[%s1 + $0xf4c] sm:$0xf]
    %v724 = vld [vmem:[%s1 + $0xf50] sm:$0xff]
    %v725 = vld [vmem:[%s1 + $0xf58] sm:$0xff]
    %v726 = vld [vmem:[%s1 + $0xf60] sm:$0xf]
    %v727 = vld [vmem:[%s1 + $0xf64] sm:$0xff]
    %v728 = vld [vmem:[%s1 + $0xf6c] sm:$0xff]
    %v729 = vld [vmem:[%s1 + $0xf74] sm:$0xf]
    %v730 = vld [vmem:[%s1 + $0xf78] sm:$0xff]
    %v731 = vld [vmem:[%s1 + $0xf80] sm:$0xff]
    %v732 = vld [vmem:[%s1 + $0xf88] sm:$0xf]
    %v733 = vld [vmem:[%s1 + $0xf8c] sm:$0xff]
    %v734 = vld [vmem:[%s1 + $0xf94] sm:$0xff]
    %v735 = vld [vmem:[%s1 + $0xf9c] sm:$0xf]
    %v736 = vld [vmem:[%s1 + $0xfa0] sm:$0xff]
    %v737 = vld [vmem:[%s1 + $0xfa8] sm:$0xff]
    %v738 = vld [vmem:[%s1 + $0xfb0] sm:$0xf]
    %v739 = vld [vmem:[%s1 + $0xfb4] sm:$0xff]
    %v740 = vld [vmem:[%s1 + $0xfbc] sm:$0xff]
    %v741 = vld [vmem:[%s1 + $0xfc4] sm:$0xf]
    %v742 = vld [vmem:[%s1 + $0xfc8] sm:$0xff]
    %v743 = vld [vmem:[%s1 + $0xfd0] sm:$0xff]
    %v744 = vld [vmem:[%s1 + $0xfd8] sm:$0xf]
    %v745 = vld [vmem:[%s1 + $0xfdc] sm:$0xff]
    %v746 = vld [vmem:[%s1 + $0xfe4] sm:$0xff]
    %v747 = vld [vmem:[%s1 + $0xfec] sm:$0xf]
    %v748 = vld [vmem:[%s1 + $0xff0] sm:$0xff]
    %v749 = vld [vmem:[%s1 + $0xff8] sm:$0xff]
    %v750 = vld [vmem:[%s1 + $0x1000] sm:$0xf]
    %v751 = vld [vmem:[%s1 + $0x1004] sm:$0xff]
    %v752 = vld [vmem:[%s1 + $0x100c] sm:$0xff]
    %v753 = vld [vmem:[%s1 + $0x1014] sm:$0xf]
    %v754 = vld [vmem:[%s1 + $0x1018] sm:$0xff]
    %v755 = vld [vmem:[%s1 + $0x1020] sm:$0xff]
    %v756 = vld [vmem:[%s1 + $0x1028] sm:$0xf]
    %v757 = vld [vmem:[%s1 + $0x102c] sm:$0xff]
    %v758 = vld [vmem:[%s1 + $0x1034] sm:$0xff]
    %v759 = vld [vmem:[%s1 + $0x103c] sm:$0xf]
    %v760 = vld [vmem:[%s1 + $0x1040] sm:$0xff]
    %v761 = vld [vmem:[%s1 + $0x1048] sm:$0xff]
    %v762 = vld [vmem:[%s1 + $0x1050] sm:$0xf]
    %v763 = vld [vmem:[%s1 + $0x1054] sm:$0xff]
    %v764 = vld [vmem:[%s1 + $0x105c] sm:$0xff]
    %v765 = vld [vmem:[%s1 + $0x1064] sm:$0xf]
    %v766 = vld [vmem:[%s1 + $0x1068] sm:$0xff]
    %v767 = vld [vmem:[%s1 + $0x1070] sm:$0xff]
    %v768 = vld [vmem:[%s1 + $0x1078] sm:$0xf]
    %v769 = vld [vmem:[%s1 + $0x107c] sm:$0xff]
    %v770 = vld [vmem:[%s1 + $0x1084] sm:$0xff]
    %v771 = vld [vmem:[%s1 + $0x108c] sm:$0xf]
    %v772 = vld [vmem:[%s1 + $0x1090] sm:$0xff]
    %v773 = vld [vmem:[%s1 + $0x1098] sm:$0xff]
    %v774 = vld [vmem:[%s1 + $0x10a0] sm:$0xf]
    %v775 = vld [vmem:[%s1 + $0x10a4] sm:$0xff]
    %v776 = vld [vmem:[%s1 + $0x10ac] sm:$0xff]
    %v777 = vld [vmem:[%s1 + $0x10b4] sm:$0xf]
    %v778 = vld [vmem:[%s1 + $0x10b8] sm:$0xff]
    %v779 = vld [vmem:[%s1 + $0x10c0] sm:$0xff]
    %v780 = vld [vmem:[%s1 + $0x10c8] sm:$0xf]
    %v781 = vld [vmem:[%s1 + $0x10cc] sm:$0xff]
    %v782 = vld [vmem:[%s1 + $0x10d4] sm:$0xff]
    %v783 = vld [vmem:[%s1 + $0x10dc] sm:$0xf]
    %v784 = vld [vmem:[%s1 + $0x10e0] sm:$0xff]
    %v785 = vld [vmem:[%s1 + $0x10e8] sm:$0xff]
    %v786 = vld [vmem:[%s1 + $0x10f0] sm:$0xf]
    %v787 = vld [vmem:[%s1 + $0x10f4] sm:$0xff]
    %v788 = vld [vmem:[%s1 + $0x10fc] sm:$0xff]
    %v789 = vld [vmem:[%s1 + $0x1104] sm:$0xf]
    %v790 = vld [vmem:[%s1 + $0x1108] sm:$0xff]
    %v791 = vld [vmem:[%s1 + $0x1110] sm:$0xff]
    %v792 = vld [vmem:[%s1 + $0x1118] sm:$0xf]
    %v793 = vld [vmem:[%s1 + $0x111c] sm:$0xff]
    %v794 = vld [vmem:[%s1 + $0x1124] sm:$0xff]
    %v795 = vld [vmem:[%s1 + $0x112c] sm:$0xf]
    %v796 = vld [vmem:[%s1 + $0x1130] sm:$0xff]
    %v797 = vld [vmem:[%s1 + $0x1138] sm:$0xff]
    %v798 = vld [vmem:[%s1 + $0x1140] sm:$0xf]
    %v799 = vld [vmem:[%s1 + $0x1144] sm:$0xff]
    %v800 = vld [vmem:[%s1 + $0x114c] sm:$0xff]
    %v801 = vld [vmem:[%s1 + $0x1154] sm:$0xf]
    %v802 = vld [vmem:[%s1 + $0x1158] sm:$0xff]
    %v803 = vld [vmem:[%s1 + $0x1160] sm:$0xff]
    %v804 = vld [vmem:[%s1 + $0x1168] sm:$0xf]
    %v805 = vld [vmem:[%s1 + $0x116c] sm:$0xff]
    %v806 = vld [vmem:[%s1 + $0x1174] sm:$0xff]
    %v807 = vld [vmem:[%s1 + $0x117c] sm:$0xf]
    %v808 = vld [vmem:[%s1 + $0x1180] sm:$0xff]
    %v809 = vld [vmem:[%s1 + $0x1188] sm:$0xff]
    %v810 = vld [vmem:[%s1 + $0x1190] sm:$0xf]
    %v811 = vld [vmem:[%s1 + $0x1194] sm:$0xff]
    %v812 = vld [vmem:[%s1 + $0x119c] sm:$0xff]
    %v813 = vld [vmem:[%s1 + $0x11a4] sm:$0xf]
    %v814 = vld [vmem:[%s1 + $0x11a8] sm:$0xff]
    %v815 = vld [vmem:[%s1 + $0x11b0] sm:$0xff]
    %v816 = vld [vmem:[%s1 + $0x11b8] sm:$0xf]
    %v817 = vld [vmem:[%s1 + $0x11bc] sm:$0xff]
    %v818 = vld [vmem:[%s1 + $0x11c4] sm:$0xff]
    %v819 = vld [vmem:[%s1 + $0x11cc] sm:$0xf]
    %v820 = vld [vmem:[%s1 + $0x11d0] sm:$0xff]
    %v821 = vld [vmem:[%s1 + $0x11d8] sm:$0xff]
    %v822 = vld [vmem:[%s1 + $0x11e0] sm:$0xf]
    %v823 = vld [vmem:[%s1 + $0x11e4] sm:$0xff]
    %v824 = vld [vmem:[%s1 + $0x11ec] sm:$0xff]
    %v825 = vld [vmem:[%s1 + $0x11f4] sm:$0xf]
    %v826 = vld [vmem:[%s1 + $0x11f8] sm:$0xff]
    %v827 = vld [vmem:[%s1 + $0x1200] sm:$0xff]
    %v828 = vld [vmem:[%s1 + $0x1208] sm:$0xf]
    %v829 = vld [vmem:[%s1 + $0x120c] sm:$0xff]
    %v830 = vld [vmem:[%s1 + $0x1214] sm:$0xff]
    %v831 = vld [vmem:[%s1 + $0x121c] sm:$0xf]
    %v832 = vld [vmem:[%s1 + $0x1220] sm:$0xff]
    %v833 = vld [vmem:[%s1 + $0x1228] sm:$0xff]
    %v834 = vld [vmem:[%s1 + $0x1230] sm:$0xf]
    %v835 = vld [vmem:[%s1 + $0x1234] sm:$0xff]
    %v836 = vld [vmem:[%s1 + $0x123c] sm:$0xff]
    %v837 = vld [vmem:[%s1 + $0x1244] sm:$0xf]
    %v838 = vld [vmem:[%s1 + $0x1248] sm:$0xff]
    %v839 = vld [vmem:[%s1 + $0x1250] sm:$0xff]
    %v840 = vld [vmem:[%s1 + $0x1258] sm:$0xf]
    %v841 = vld [vmem:[%s1 + $0x125c] sm:$0xff]
    %v842 = vld [vmem:[%s1 + $0x1264] sm:$0xff]
    %v843 = vld [vmem:[%s1 + $0x126c] sm:$0xf]
    %v844 = vld [vmem:[%s1 + $0x1270] sm:$0xff]
    %v845 = vld [vmem:[%s1 + $0x1278] sm:$0xff]
    %v846 = vld [vmem:[%s1 + $0x1280] sm:$0xf]
    %v847 = vld [vmem:[%s1 + $0x1284] sm:$0xff]
    %v848 = vld [vmem:[%s1 + $0x128c] sm:$0xff]
    %v849 = vld [vmem:[%s1 + $0x1294] sm:$0xf]
    %v850 = vld [vmem:[%s1 + $0x1298] sm:$0xff]
    %v851 = vld [vmem:[%s1 + $0x12a0] sm:$0xff]
    %v852 = vld [vmem:[%s1 + $0x12a8] sm:$0xf]
    %v853 = vld [vmem:[%s1 + $0x12ac] sm:$0xff]
    %v854 = vld [vmem:[%s1 + $0x12b4] sm:$0xff]
    %v855 = vld [vmem:[%s1 + $0x12bc] sm:$0xf]
    %v856 = vld [vmem:[%s1 + $0x12c0] sm:$0xff]
    %v857 = vld [vmem:[%s1 + $0x12c8] sm:$0xff]
    %v858 = vld [vmem:[%s1 + $0x12d0] sm:$0xf]
    %v859 = vld [vmem:[%s1 + $0x12d4] sm:$0xff]
    %v860 = vld [vmem:[%s1 + $0x12dc] sm:$0xff]
    %v861 = vld [vmem:[%s1 + $0x12e4] sm:$0xf]
    %v862 = vld [vmem:[%s1 + $0x12e8] sm:$0xff]
    %v863 = vld [vmem:[%s1 + $0x12f0] sm:$0xff]
    %v864 = vld [vmem:[%s1 + $0x12f8] sm:$0xf]
    %v865 = vld [vmem:[%s1 + $0x12fc] sm:$0xff]
    %v866 = vld [vmem:[%s1 + $0x1304] sm:$0xff]
    %v867 = vld [vmem:[%s1 + $0x130c] sm:$0xf]
    %v868 = vld [vmem:[%s1 + $0x1310] sm:$0xff]
    %v869 = vld [vmem:[%s1 + $0x1318] sm:$0xff]
    %v870 = vld [vmem:[%s1 + $0x1320] sm:$0xf]
    %v871 = vld [vmem:[%s1 + $0x1324] sm:$0xff]
    %v872 = vld [vmem:[%s1 + $0x132c] sm:$0xff]
    %v873 = vld [vmem:[%s1 + $0x1334] sm:$0xf]
    %v874 = vld [vmem:[%s1 + $0x1338] sm:$0xff]
    %v875 = vld [vmem:[%s1 + $0x1340] sm:$0xff]
    %v876 = vld [vmem:[%s1 + $0x1348] sm:$0xf]
    %v877 = vld [vmem:[%s1 + $0x134c] sm:$0xff]
    %v878 = vld [vmem:[%s1 + $0x1354] sm:$0xff]
    %v879 = vld [vmem:[%s1 + $0x135c] sm:$0xf]
    %v880 = vld [vmem:[%s1 + $0x1360] sm:$0xff]
    %v881 = vld [vmem:[%s1 + $0x1368] sm:$0xff]
    %v882 = vld [vmem:[%s1 + $0x1370] sm:$0xf]
    %v883 = vld [vmem:[%s1 + $0x1374] sm:$0xff]
    %v884 = vld [vmem:[%s1 + $0x137c] sm:$0xff]
    %v885 = vld [vmem:[%s1 + $0x1384] sm:$0xf]
    %v886 = vld [vmem:[%s1 + $0x1388] sm:$0xff]
    %v887 = vld [vmem:[%s1 + $0x1390] sm:$0xff]
    %v888 = vld [vmem:[%s1 + $0x1398] sm:$0xf]
    %v889 = vld [vmem:[%s1 + $0x139c] sm:$0xff]
    %v890 = vld [vmem:[%s1 + $0x13a4] sm:$0xff]
    %v891 = vld [vmem:[%s1 + $0x13ac] sm:$0xf]
    %v892 = vld [vmem:[%s1 + $0x13b0] sm:$0xff]
    %v893 = vld [vmem:[%s1 + $0x13b8] sm:$0xff]
    %v894 = vld [vmem:[%s1 + $0x13c0] sm:$0xf]
    %v895 = vld [vmem:[%s1 + $0x13c4] sm:$0xff]
    %v896 = vld [vmem:[%s1 + $0x13cc] sm:$0xff]
    %v897 = vld [vmem:[%s1 + $0x13d4] sm:$0xf]
    %v898 = vld [vmem:[%s1 + $0x13d8] sm:$0xff]
    %v899 = vld [vmem:[%s1 + $0x13e0] sm:$0xff]
    %v900 = vld [vmem:[%s1 + $0x13e8] sm:$0xf]
    %v901 = vld [vmem:[%s1 + $0x13ec] sm:$0xff]
    %v902 = vld [vmem:[%s1 + $0x13f4] sm:$0xff]
    %v903 = vld [vmem:[%s1 + $0x13fc] sm:$0xf]
    %v1672 = vunpack.c.l.b16 %v136
    %v1673 = vunpack.c.h.b16 %v136
    %v1674 = vunpack.c.l.b16 %v137
    %v1675 = vunpack.c.h.b16 %v137
    %v1676 = vunpack.c.l.b16 %v138
    %v1677 = vunpack.c.l.b16 %v139
    %v1678 = vunpack.c.h.b16 %v139
    %v1679 = vunpack.c.l.b16 %v140
    %v1680 = vunpack.c.h.b16 %v140
    %v1681 = vunpack.c.l.b16 %v141
    %v1682 = vunpack.c.l.b16 %v142
    %v1683 = vunpack.c.h.b16 %v142
    %v1684 = vunpack.c.l.b16 %v143
    %v1685 = vunpack.c.h.b16 %v143
    %v1686 = vunpack.c.l.b16 %v144
    %v1687 = vunpack.c.l.b16 %v145
    %v1688 = vunpack.c.h.b16 %v145
    %v1689 = vunpack.c.l.b16 %v146
    %v1690 = vunpack.c.h.b16 %v146
    %v1691 = vunpack.c.l.b16 %v147
    %v1692 = vunpack.c.l.b16 %v148
    %v1693 = vunpack.c.h.b16 %v148
    %v1694 = vunpack.c.l.b16 %v149
    %v1695 = vunpack.c.h.b16 %v149
    %v1696 = vunpack.c.l.b16 %v150
    %v1697 = vunpack.c.l.b16 %v151
    %v1698 = vunpack.c.h.b16 %v151
    %v1699 = vunpack.c.l.b16 %v152
    %v1700 = vunpack.c.h.b16 %v152
    %v1701 = vunpack.c.l.b16 %v153
    %v1702 = vunpack.c.l.b16 %v154
    %v1703 = vunpack.c.h.b16 %v154
    %v1704 = vunpack.c.l.b16 %v155
    %v1705 = vunpack.c.h.b16 %v155
    %v1706 = vunpack.c.l.b16 %v156
    %v1707 = vunpack.c.l.b16 %v157
    %v1708 = vunpack.c.h.b16 %v157
    %v1709 = vunpack.c.l.b16 %v158
    %v1710 = vunpack.c.h.b16 %v158
    %v1711 = vunpack.c.l.b16 %v159
    %v1712 = vunpack.c.l.b16 %v160
    %v1713 = vunpack.c.h.b16 %v160
    %v1714 = vunpack.c.l.b16 %v161
    %v1715 = vunpack.c.h.b16 %v161
    %v1716 = vunpack.c.l.b16 %v162
    %v1717 = vunpack.c.l.b16 %v163
    %v1718 = vunpack.c.h.b16 %v163
    %v1719 = vunpack.c.l.b16 %v164
    %v1720 = vunpack.c.h.b16 %v164
    %v1721 = vunpack.c.l.b16 %v165
    %v1722 = vunpack.c.l.b16 %v166
    %v1723 = vunpack.c.h.b16 %v166
    %v1724 = vunpack.c.l.b16 %v167
    %v1725 = vunpack.c.h.b16 %v167
    %v1726 = vunpack.c.l.b16 %v168
    %v1727 = vunpack.c.l.b16 %v169
    %v1728 = vunpack.c.h.b16 %v169
    %v1729 = vunpack.c.l.b16 %v170
    %v1730 = vunpack.c.h.b16 %v170
    %v1731 = vunpack.c.l.b16 %v171
    %v1732 = vunpack.c.l.b16 %v172
    %v1733 = vunpack.c.h.b16 %v172
    %v1734 = vunpack.c.l.b16 %v173
    %v1735 = vunpack.c.h.b16 %v173
    %v1736 = vunpack.c.l.b16 %v174
    %v1737 = vunpack.c.l.b16 %v175
    %v1738 = vunpack.c.h.b16 %v175
    %v1739 = vunpack.c.l.b16 %v176
    %v1740 = vunpack.c.h.b16 %v176
    %v1741 = vunpack.c.l.b16 %v177
    %v1742 = vunpack.c.l.b16 %v178
    %v1743 = vunpack.c.h.b16 %v178
    %v1744 = vunpack.c.l.b16 %v179
    %v1745 = vunpack.c.h.b16 %v179
    %v1746 = vunpack.c.l.b16 %v180
    %v1747 = vunpack.c.l.b16 %v181
    %v1748 = vunpack.c.h.b16 %v181
    %v1749 = vunpack.c.l.b16 %v182
    %v1750 = vunpack.c.h.b16 %v182
    %v1751 = vunpack.c.l.b16 %v183
    %v1752 = vunpack.c.l.b16 %v184
    %v1753 = vunpack.c.h.b16 %v184
    %v1754 = vunpack.c.l.b16 %v185
    %v1755 = vunpack.c.h.b16 %v185
    %v1756 = vunpack.c.l.b16 %v186
    %v1757 = vunpack.c.l.b16 %v187
    %v1758 = vunpack.c.h.b16 %v187
    %v1759 = vunpack.c.l.b16 %v188
    %v1760 = vunpack.c.h.b16 %v188
    %v1761 = vunpack.c.l.b16 %v189
    %v1762 = vunpack.c.l.b16 %v190
    %v1763 = vunpack.c.h.b16 %v190
    %v1764 = vunpack.c.l.b16 %v191
    %v1765 = vunpack.c.h.b16 %v191
    %v1766 = vunpack.c.l.b16 %v192
    %v1767 = vunpack.c.l.b16 %v193
    %v1768 = vunpack.c.h.b16 %v193
    %v1769 = vunpack.c.l.b16 %v194
    %v1770 = vunpack.c.h.b16 %v194
    %v1771 = vunpack.c.l.b16 %v195
    %v1772 = vunpack.c.l.b16 %v196
    %v1773 = vunpack.c.h.b16 %v196
    %v1774 = vunpack.c.l.b16 %v197
    %v1775 = vunpack.c.h.b16 %v197
    %v1776 = vunpack.c.l.b16 %v198
    %v1777 = vunpack.c.l.b16 %v199
    %v1778 = vunpack.c.h.b16 %v199
    %v1779 = vunpack.c.l.b16 %v200
    %v1780 = vunpack.c.h.b16 %v200
    %v1781 = vunpack.c.l.b16 %v201
    %v1782 = vunpack.c.l.b16 %v202
    %v1783 = vunpack.c.h.b16 %v202
    %v1784 = vunpack.c.l.b16 %v203
    %v1785 = vunpack.c.h.b16 %v203
    %v1786 = vunpack.c.l.b16 %v204
    %v1787 = vunpack.c.l.b16 %v205
    %v1788 = vunpack.c.h.b16 %v205
    %v1789 = vunpack.c.l.b16 %v206
    %v1790 = vunpack.c.h.b16 %v206
    %v1791 = vunpack.c.l.b16 %v207
    %v1792 = vunpack.c.l.b16 %v208
    %v1793 = vunpack.c.h.b16 %v208
    %v1794 = vunpack.c.l.b16 %v209
    %v1795 = vunpack.c.h.b16 %v209
    %v1796 = vunpack.c.l.b16 %v210
    %v1797 = vunpack.c.l.b16 %v211
    %v1798 = vunpack.c.h.b16 %v211
    %v1799 = vunpack.c.l.b16 %v212
    %v1800 = vunpack.c.h.b16 %v212
    %v1801 = vunpack.c.l.b16 %v213
    %v1802 = vunpack.c.l.b16 %v214
    %v1803 = vunpack.c.h.b16 %v214
    %v1804 = vunpack.c.l.b16 %v215
    %v1805 = vunpack.c.h.b16 %v215
    %v1806 = vunpack.c.l.b16 %v216
    %v1807 = vunpack.c.l.b16 %v217
    %v1808 = vunpack.c.h.b16 %v217
    %v1809 = vunpack.c.l.b16 %v218
    %v1810 = vunpack.c.h.b16 %v218
    %v1811 = vunpack.c.l.b16 %v219
    %v1812 = vunpack.c.l.b16 %v220
    %v1813 = vunpack.c.h.b16 %v220
    %v1814 = vunpack.c.l.b16 %v221
    %v1815 = vunpack.c.h.b16 %v221
    %v1816 = vunpack.c.l.b16 %v222
    %v1817 = vunpack.c.l.b16 %v223
    %v1818 = vunpack.c.h.b16 %v223
    %v1819 = vunpack.c.l.b16 %v224
    %v1820 = vunpack.c.h.b16 %v224
    %v1821 = vunpack.c.l.b16 %v225
    %v1822 = vunpack.c.l.b16 %v226
    %v1823 = vunpack.c.h.b16 %v226
    %v1824 = vunpack.c.l.b16 %v227
    %v1825 = vunpack.c.h.b16 %v227
    %v1826 = vunpack.c.l.b16 %v228
    %v1827 = vunpack.c.l.b16 %v229
    %v1828 = vunpack.c.h.b16 %v229
    %v1829 = vunpack.c.l.b16 %v230
    %v1830 = vunpack.c.h.b16 %v230
    %v1831 = vunpack.c.l.b16 %v231
    %v1832 = vunpack.c.l.b16 %v232
    %v1833 = vunpack.c.h.b16 %v232
    %v1834 = vunpack.c.l.b16 %v233
    %v1835 = vunpack.c.h.b16 %v233
    %v1836 = vunpack.c.l.b16 %v234
    %v1837 = vunpack.c.l.b16 %v235
    %v1838 = vunpack.c.h.b16 %v235
    %v1839 = vunpack.c.l.b16 %v236
    %v1840 = vunpack.c.h.b16 %v236
    %v1841 = vunpack.c.l.b16 %v237
    %v1842 = vunpack.c.l.b16 %v238
    %v1843 = vunpack.c.h.b16 %v238
    %v1844 = vunpack.c.l.b16 %v239
    %v1845 = vunpack.c.h.b16 %v239
    %v1846 = vunpack.c.l.b16 %v240
    %v1847 = vunpack.c.l.b16 %v241
    %v1848 = vunpack.c.h.b16 %v241
    %v1849 = vunpack.c.l.b16 %v242
    %v1850 = vunpack.c.h.b16 %v242
    %v1851 = vunpack.c.l.b16 %v243
    %v1852 = vunpack.c.l.b16 %v244
    %v1853 = vunpack.c.h.b16 %v244
    %v1854 = vunpack.c.l.b16 %v245
    %v1855 = vunpack.c.h.b16 %v245
    %v1856 = vunpack.c.l.b16 %v246
    %v1857 = vunpack.c.l.b16 %v247
    %v1858 = vunpack.c.h.b16 %v247
    %v1859 = vunpack.c.l.b16 %v248
    %v1860 = vunpack.c.h.b16 %v248
    %v1861 = vunpack.c.l.b16 %v249
    %v1862 = vunpack.c.l.b16 %v250
    %v1863 = vunpack.c.h.b16 %v250
    %v1864 = vunpack.c.l.b16 %v251
    %v1865 = vunpack.c.h.b16 %v251
    %v1866 = vunpack.c.l.b16 %v252
    %v1867 = vunpack.c.l.b16 %v253
    %v1868 = vunpack.c.h.b16 %v253
    %v1869 = vunpack.c.l.b16 %v254
    %v1870 = vunpack.c.h.b16 %v254
    %v1871 = vunpack.c.l.b16 %v255
    %v1872 = vunpack.c.l.b16 %v256
    %v1873 = vunpack.c.h.b16 %v256
    %v1874 = vunpack.c.l.b16 %v257
    %v1875 = vunpack.c.h.b16 %v257
    %v1876 = vunpack.c.l.b16 %v258
    %v1877 = vunpack.c.l.b16 %v259
    %v1878 = vunpack.c.h.b16 %v259
    %v1879 = vunpack.c.l.b16 %v260
    %v1880 = vunpack.c.h.b16 %v260
    %v1881 = vunpack.c.l.b16 %v261
    %v1882 = vunpack.c.l.b16 %v262
    %v1883 = vunpack.c.h.b16 %v262
    %v1884 = vunpack.c.l.b16 %v263
    %v1885 = vunpack.c.h.b16 %v263
    %v1886 = vunpack.c.l.b16 %v264
    %v1887 = vunpack.c.l.b16 %v265
    %v1888 = vunpack.c.h.b16 %v265
    %v1889 = vunpack.c.l.b16 %v266
    %v1890 = vunpack.c.h.b16 %v266
    %v1891 = vunpack.c.l.b16 %v267
    %v1892 = vunpack.c.l.b16 %v268
    %v1893 = vunpack.c.h.b16 %v268
    %v1894 = vunpack.c.l.b16 %v269
    %v1895 = vunpack.c.h.b16 %v269
    %v1896 = vunpack.c.l.b16 %v270
    %v1897 = vunpack.c.l.b16 %v271
    %v1898 = vunpack.c.h.b16 %v271
    %v1899 = vunpack.c.l.b16 %v272
    %v1900 = vunpack.c.h.b16 %v272
    %v1901 = vunpack.c.l.b16 %v273
    %v1902 = vunpack.c.l.b16 %v274
    %v1903 = vunpack.c.h.b16 %v274
    %v1904 = vunpack.c.l.b16 %v275
    %v1905 = vunpack.c.h.b16 %v275
    %v1906 = vunpack.c.l.b16 %v276
    %v1907 = vunpack.c.l.b16 %v277
    %v1908 = vunpack.c.h.b16 %v277
    %v1909 = vunpack.c.l.b16 %v278
    %v1910 = vunpack.c.h.b16 %v278
    %v1911 = vunpack.c.l.b16 %v279
    %v1912 = vunpack.c.l.b16 %v280
    %v1913 = vunpack.c.h.b16 %v280
    %v1914 = vunpack.c.l.b16 %v281
    %v1915 = vunpack.c.h.b16 %v281
    %v1916 = vunpack.c.l.b16 %v282
    %v1917 = vunpack.c.l.b16 %v283
    %v1918 = vunpack.c.h.b16 %v283
    %v1919 = vunpack.c.l.b16 %v284
    %v1920 = vunpack.c.h.b16 %v284
    %v1921 = vunpack.c.l.b16 %v285
    %v1922 = vunpack.c.l.b16 %v286
    %v1923 = vunpack.c.h.b16 %v286
    %v1924 = vunpack.c.l.b16 %v287
    %v1925 = vunpack.c.h.b16 %v287
    %v1926 = vunpack.c.l.b16 %v288
    %v1927 = vunpack.c.l.b16 %v289
    %v1928 = vunpack.c.h.b16 %v289
    %v1929 = vunpack.c.l.b16 %v290
    %v1930 = vunpack.c.h.b16 %v290
    %v1931 = vunpack.c.l.b16 %v291
    %v1932 = vunpack.c.l.b16 %v292
    %v1933 = vunpack.c.h.b16 %v292
    %v1934 = vunpack.c.l.b16 %v293
    %v1935 = vunpack.c.h.b16 %v293
    %v1936 = vunpack.c.l.b16 %v294
    %v1937 = vunpack.c.l.b16 %v295
    %v1938 = vunpack.c.h.b16 %v295
    %v1939 = vunpack.c.l.b16 %v296
    %v1940 = vunpack.c.h.b16 %v296
    %v1941 = vunpack.c.l.b16 %v297
    %v1942 = vunpack.c.l.b16 %v298
    %v1943 = vunpack.c.h.b16 %v298
    %v1944 = vunpack.c.l.b16 %v299
    %v1945 = vunpack.c.h.b16 %v299
    %v1946 = vunpack.c.l.b16 %v300
    %v1947 = vunpack.c.l.b16 %v301
    %v1948 = vunpack.c.h.b16 %v301
    %v1949 = vunpack.c.l.b16 %v302
    %v1950 = vunpack.c.h.b16 %v302
    %v1951 = vunpack.c.l.b16 %v303
    %v1952 = vunpack.c.l.b16 %v304
    %v1953 = vunpack.c.h.b16 %v304
    %v1954 = vunpack.c.l.b16 %v305
    %v1955 = vunpack.c.h.b16 %v305
    %v1956 = vunpack.c.l.b16 %v306
    %v1957 = vunpack.c.l.b16 %v307
    %v1958 = vunpack.c.h.b16 %v307
    %v1959 = vunpack.c.l.b16 %v308
    %v1960 = vunpack.c.h.b16 %v308
    %v1961 = vunpack.c.l.b16 %v309
    %v1962 = vunpack.c.l.b16 %v310
    %v1963 = vunpack.c.h.b16 %v310
    %v1964 = vunpack.c.l.b16 %v311
    %v1965 = vunpack.c.h.b16 %v311
    %v1966 = vunpack.c.l.b16 %v312
    %v1967 = vunpack.c.l.b16 %v313
    %v1968 = vunpack.c.h.b16 %v313
    %v1969 = vunpack.c.l.b16 %v314
    %v1970 = vunpack.c.h.b16 %v314
    %v1971 = vunpack.c.l.b16 %v315
    %v1972 = vunpack.c.l.b16 %v316
    %v1973 = vunpack.c.h.b16 %v316
    %v1974 = vunpack.c.l.b16 %v317
    %v1975 = vunpack.c.h.b16 %v317
    %v1976 = vunpack.c.l.b16 %v318
    %v1977 = vunpack.c.l.b16 %v319
    %v1978 = vunpack.c.h.b16 %v319
    %v1979 = vunpack.c.l.b16 %v320
    %v1980 = vunpack.c.h.b16 %v320
    %v1981 = vunpack.c.l.b16 %v321
    %v1982 = vunpack.c.l.b16 %v322
    %v1983 = vunpack.c.h.b16 %v322
    %v1984 = vunpack.c.l.b16 %v323
    %v1985 = vunpack.c.h.b16 %v323
    %v1986 = vunpack.c.l.b16 %v324
    %v1987 = vunpack.c.l.b16 %v325
    %v1988 = vunpack.c.h.b16 %v325
    %v1989 = vunpack.c.l.b16 %v326
    %v1990 = vunpack.c.h.b16 %v326
    %v1991 = vunpack.c.l.b16 %v327
    %v1992 = vunpack.c.l.b16 %v328
    %v1993 = vunpack.c.h.b16 %v328
    %v1994 = vunpack.c.l.b16 %v329
    %v1995 = vunpack.c.h.b16 %v329
    %v1996 = vunpack.c.l.b16 %v330
    %v1997 = vunpack.c.l.b16 %v331
    %v1998 = vunpack.c.h.b16 %v331
    %v1999 = vunpack.c.l.b16 %v332
    %v2000 = vunpack.c.h.b16 %v332
    %v2001 = vunpack.c.l.b16 %v333
    %v2002 = vunpack.c.l.b16 %v334
    %v2003 = vunpack.c.h.b16 %v334
    %v2004 = vunpack.c.l.b16 %v335
    %v2005 = vunpack.c.h.b16 %v335
    %v2006 = vunpack.c.l.b16 %v336
    %v2007 = vunpack.c.l.b16 %v337
    %v2008 = vunpack.c.h.b16 %v337
    %v2009 = vunpack.c.l.b16 %v338
    %v2010 = vunpack.c.h.b16 %v338
    %v2011 = vunpack.c.l.b16 %v339
    %v2012 = vunpack.c.l.b16 %v340
    %v2013 = vunpack.c.h.b16 %v340
    %v2014 = vunpack.c.l.b16 %v341
    %v2015 = vunpack.c.h.b16 %v341
    %v2016 = vunpack.c.l.b16 %v342
    %v2017 = vunpack.c.l.b16 %v343
    %v2018 = vunpack.c.h.b16 %v343
    %v2019 = vunpack.c.l.b16 %v344
    %v2020 = vunpack.c.h.b16 %v344
    %v2021 = vunpack.c.l.b16 %v345
    %v2022 = vunpack.c.l.b16 %v346
    %v2023 = vunpack.c.h.b16 %v346
    %v2024 = vunpack.c.l.b16 %v347
    %v2025 = vunpack.c.h.b16 %v347
    %v2026 = vunpack.c.l.b16 %v348
    %v2027 = vunpack.c.l.b16 %v349
    %v2028 = vunpack.c.h.b16 %v349
    %v2029 = vunpack.c.l.b16 %v350
    %v2030 = vunpack.c.h.b16 %v350
    %v2031 = vunpack.c.l.b16 %v351
    %v2032 = vunpack.c.l.b16 %v352
    %v2033 = vunpack.c.h.b16 %v352
    %v2034 = vunpack.c.l.b16 %v353
    %v2035 = vunpack.c.h.b16 %v353
    %v2036 = vunpack.c.l.b16 %v354
    %v2037 = vunpack.c.l.b16 %v355
    %v2038 = vunpack.c.h.b16 %v355
    %v2039 = vunpack.c.l.b16 %v356
    %v2040 = vunpack.c.h.b16 %v356
    %v2041 = vunpack.c.l.b16 %v357
    %v2042 = vunpack.c.l.b16 %v358
    %v2043 = vunpack.c.h.b16 %v358
    %v2044 = vunpack.c.l.b16 %v359
    %v2045 = vunpack.c.h.b16 %v359
    %v2046 = vunpack.c.l.b16 %v360
    %v2047 = vunpack.c.l.b16 %v361
    %v2048 = vunpack.c.h.b16 %v361
    %v2049 = vunpack.c.l.b16 %v362
    %v2050 = vunpack.c.h.b16 %v362
    %v2051 = vunpack.c.l.b16 %v363
    %v2052 = vunpack.c.l.b16 %v364
    %v2053 = vunpack.c.h.b16 %v364
    %v2054 = vunpack.c.l.b16 %v365
    %v2055 = vunpack.c.h.b16 %v365
    %v2056 = vunpack.c.l.b16 %v366
    %v2057 = vunpack.c.l.b16 %v367
    %v2058 = vunpack.c.h.b16 %v367
    %v2059 = vunpack.c.l.b16 %v368
    %v2060 = vunpack.c.h.b16 %v368
    %v2061 = vunpack.c.l.b16 %v369
    %v2062 = vunpack.c.l.b16 %v370
    %v2063 = vunpack.c.h.b16 %v370
    %v2064 = vunpack.c.l.b16 %v371
    %v2065 = vunpack.c.h.b16 %v371
    %v2066 = vunpack.c.l.b16 %v372
    %v2067 = vunpack.c.l.b16 %v373
    %v2068 = vunpack.c.h.b16 %v373
    %v2069 = vunpack.c.l.b16 %v374
    %v2070 = vunpack.c.h.b16 %v374
    %v2071 = vunpack.c.l.b16 %v375
    %v2072 = vunpack.c.l.b16 %v376
    %v2073 = vunpack.c.h.b16 %v376
    %v2074 = vunpack.c.l.b16 %v377
    %v2075 = vunpack.c.h.b16 %v377
    %v2076 = vunpack.c.l.b16 %v378
    %v2077 = vunpack.c.l.b16 %v379
    %v2078 = vunpack.c.h.b16 %v379
    %v2079 = vunpack.c.l.b16 %v380
    %v2080 = vunpack.c.h.b16 %v380
    %v2081 = vunpack.c.l.b16 %v381
    %v2082 = vunpack.c.l.b16 %v382
    %v2083 = vunpack.c.h.b16 %v382
    %v2084 = vunpack.c.l.b16 %v383
    %v2085 = vunpack.c.h.b16 %v383
    %v2086 = vunpack.c.l.b16 %v384
    %v2087 = vunpack.c.l.b16 %v385
    %v2088 = vunpack.c.h.b16 %v385
    %v2089 = vunpack.c.l.b16 %v386
    %v2090 = vunpack.c.h.b16 %v386
    %v2091 = vunpack.c.l.b16 %v387
    %v2092 = vunpack.c.l.b16 %v388
    %v2093 = vunpack.c.h.b16 %v388
    %v2094 = vunpack.c.l.b16 %v389
    %v2095 = vunpack.c.h.b16 %v389
    %v2096 = vunpack.c.l.b16 %v390
    %v2097 = vunpack.c.l.b16 %v391
    %v2098 = vunpack.c.h.b16 %v391
    %v2099 = vunpack.c.l.b16 %v392
    %v2100 = vunpack.c.h.b16 %v392
    %v2101 = vunpack.c.l.b16 %v393
    %v2102 = vunpack.c.l.b16 %v394
    %v2103 = vunpack.c.h.b16 %v394
    %v2104 = vunpack.c.l.b16 %v395
    %v2105 = vunpack.c.h.b16 %v395
    %v2106 = vunpack.c.l.b16 %v396
    %v2107 = vunpack.c.l.b16 %v397
    %v2108 = vunpack.c.h.b16 %v397
    %v2109 = vunpack.c.l.b16 %v398
    %v2110 = vunpack.c.h.b16 %v398
    %v2111 = vunpack.c.l.b16 %v399
    %v2112 = vunpack.c.l.b16 %v400
    %v2113 = vunpack.c.h.b16 %v400
    %v2114 = vunpack.c.l.b16 %v401
    %v2115 = vunpack.c.h.b16 %v401
    %v2116 = vunpack.c.l.b16 %v402
    %v2117 = vunpack.c.l.b16 %v403
    %v2118 = vunpack.c.h.b16 %v403
    %v2119 = vunpack.c.l.b16 %v404
    %v2120 = vunpack.c.h.b16 %v404
    %v2121 = vunpack.c.l.b16 %v405
    %v2122 = vunpack.c.l.b16 %v406
    %v2123 = vunpack.c.h.b16 %v406
    %v2124 = vunpack.c.l.b16 %v407
    %v2125 = vunpack.c.h.b16 %v407
    %v2126 = vunpack.c.l.b16 %v408
    %v2127 = vunpack.c.l.b16 %v409
    %v2128 = vunpack.c.h.b16 %v409
    %v2129 = vunpack.c.l.b16 %v410
    %v2130 = vunpack.c.h.b16 %v410
    %v2131 = vunpack.c.l.b16 %v411
    %v2132 = vunpack.c.l.b16 %v412
    %v2133 = vunpack.c.h.b16 %v412
    %v2134 = vunpack.c.l.b16 %v413
    %v2135 = vunpack.c.h.b16 %v413
    %v2136 = vunpack.c.l.b16 %v414
    %v2137 = vunpack.c.l.b16 %v415
    %v2138 = vunpack.c.h.b16 %v415
    %v2139 = vunpack.c.l.b16 %v416
    %v2140 = vunpack.c.h.b16 %v416
    %v2141 = vunpack.c.l.b16 %v417
    %v2142 = vunpack.c.l.b16 %v418
    %v2143 = vunpack.c.h.b16 %v418
    %v2144 = vunpack.c.l.b16 %v419
    %v2145 = vunpack.c.h.b16 %v419
    %v2146 = vunpack.c.l.b16 %v420
    %v2147 = vunpack.c.l.b16 %v421
    %v2148 = vunpack.c.h.b16 %v421
    %v2149 = vunpack.c.l.b16 %v422
    %v2150 = vunpack.c.h.b16 %v422
    %v2151 = vunpack.c.l.b16 %v423
    %v2152 = vunpack.c.l.b16 %v424
    %v2153 = vunpack.c.h.b16 %v424
    %v2154 = vunpack.c.l.b16 %v425
    %v2155 = vunpack.c.h.b16 %v425
    %v2156 = vunpack.c.l.b16 %v426
    %v2157 = vunpack.c.l.b16 %v427
    %v2158 = vunpack.c.h.b16 %v427
    %v2159 = vunpack.c.l.b16 %v428
    %v2160 = vunpack.c.h.b16 %v428
    %v2161 = vunpack.c.l.b16 %v429
    %v2162 = vunpack.c.l.b16 %v430
    %v2163 = vunpack.c.h.b16 %v430
    %v2164 = vunpack.c.l.b16 %v431
    %v2165 = vunpack.c.h.b16 %v431
    %v2166 = vunpack.c.l.b16 %v432
    %v2167 = vunpack.c.l.b16 %v433
    %v2168 = vunpack.c.h.b16 %v433
    %v2169 = vunpack.c.l.b16 %v434
    %v2170 = vunpack.c.h.b16 %v434
    %v2171 = vunpack.c.l.b16 %v435
    %v2172 = vunpack.c.l.b16 %v436
    %v2173 = vunpack.c.h.b16 %v436
    %v2174 = vunpack.c.l.b16 %v437
    %v2175 = vunpack.c.h.b16 %v437
    %v2176 = vunpack.c.l.b16 %v438
    %v2177 = vunpack.c.l.b16 %v439
    %v2178 = vunpack.c.h.b16 %v439
    %v2179 = vunpack.c.l.b16 %v440
    %v2180 = vunpack.c.h.b16 %v440
    %v2181 = vunpack.c.l.b16 %v441
    %v2182 = vunpack.c.l.b16 %v442
    %v2183 = vunpack.c.h.b16 %v442
    %v2184 = vunpack.c.l.b16 %v443
    %v2185 = vunpack.c.h.b16 %v443
    %v2186 = vunpack.c.l.b16 %v444
    %v2187 = vunpack.c.l.b16 %v445
    %v2188 = vunpack.c.h.b16 %v445
    %v2189 = vunpack.c.l.b16 %v446
    %v2190 = vunpack.c.h.b16 %v446
    %v2191 = vunpack.c.l.b16 %v447
    %v2192 = vunpack.c.l.b16 %v448
    %v2193 = vunpack.c.h.b16 %v448
    %v2194 = vunpack.c.l.b16 %v449
    %v2195 = vunpack.c.h.b16 %v449
    %v2196 = vunpack.c.l.b16 %v450
    %v2197 = vunpack.c.l.b16 %v451
    %v2198 = vunpack.c.h.b16 %v451
    %v2199 = vunpack.c.l.b16 %v452
    %v2200 = vunpack.c.h.b16 %v452
    %v2201 = vunpack.c.l.b16 %v453
    %v2202 = vunpack.c.l.b16 %v454
    %v2203 = vunpack.c.h.b16 %v454
    %v2204 = vunpack.c.l.b16 %v455
    %v2205 = vunpack.c.h.b16 %v455
    %v2206 = vunpack.c.l.b16 %v456
    %v2207 = vunpack.c.l.b16 %v457
    %v2208 = vunpack.c.h.b16 %v457
    %v2209 = vunpack.c.l.b16 %v458
    %v2210 = vunpack.c.h.b16 %v458
    %v2211 = vunpack.c.l.b16 %v459
    %v2212 = vunpack.c.l.b16 %v460
    %v2213 = vunpack.c.h.b16 %v460
    %v2214 = vunpack.c.l.b16 %v461
    %v2215 = vunpack.c.h.b16 %v461
    %v2216 = vunpack.c.l.b16 %v462
    %v2217 = vunpack.c.l.b16 %v463
    %v2218 = vunpack.c.h.b16 %v463
    %v2219 = vunpack.c.l.b16 %v464
    %v2220 = vunpack.c.h.b16 %v464
    %v2221 = vunpack.c.l.b16 %v465
    %v2222 = vunpack.c.l.b16 %v466
    %v2223 = vunpack.c.h.b16 %v466
    %v2224 = vunpack.c.l.b16 %v467
    %v2225 = vunpack.c.h.b16 %v467
    %v2226 = vunpack.c.l.b16 %v468
    %v2227 = vunpack.c.l.b16 %v469
    %v2228 = vunpack.c.h.b16 %v469
    %v2229 = vunpack.c.l.b16 %v470
    %v2230 = vunpack.c.h.b16 %v470
    %v2231 = vunpack.c.l.b16 %v471
    %v2232 = vunpack.c.l.b16 %v472
    %v2233 = vunpack.c.h.b16 %v472
    %v2234 = vunpack.c.l.b16 %v473
    %v2235 = vunpack.c.h.b16 %v473
    %v2236 = vunpack.c.l.b16 %v474
    %v2237 = vunpack.c.l.b16 %v475
    %v2238 = vunpack.c.h.b16 %v475
    %v2239 = vunpack.c.l.b16 %v476
    %v2240 = vunpack.c.h.b16 %v476
    %v2241 = vunpack.c.l.b16 %v477
    %v2242 = vunpack.c.l.b16 %v478
    %v2243 = vunpack.c.h.b16 %v478
    %v2244 = vunpack.c.l.b16 %v479
    %v2245 = vunpack.c.h.b16 %v479
    %v2246 = vunpack.c.l.b16 %v480
    %v2247 = vunpack.c.l.b16 %v481
    %v2248 = vunpack.c.h.b16 %v481
    %v2249 = vunpack.c.l.b16 %v482
    %v2250 = vunpack.c.h.b16 %v482
    %v2251 = vunpack.c.l.b16 %v483
    %v2252 = vunpack.c.l.b16 %v484
    %v2253 = vunpack.c.h.b16 %v484
    %v2254 = vunpack.c.l.b16 %v485
    %v2255 = vunpack.c.h.b16 %v485
    %v2256 = vunpack.c.l.b16 %v486
    %v2257 = vunpack.c.l.b16 %v487
    %v2258 = vunpack.c.h.b16 %v487
    %v2259 = vunpack.c.l.b16 %v488
    %v2260 = vunpack.c.h.b16 %v488
    %v2261 = vunpack.c.l.b16 %v489
    %v2262 = vunpack.c.l.b16 %v490
    %v2263 = vunpack.c.h.b16 %v490
    %v2264 = vunpack.c.l.b16 %v491
    %v2265 = vunpack.c.h.b16 %v491
    %v2266 = vunpack.c.l.b16 %v492
    %v2267 = vunpack.c.l.b16 %v493
    %v2268 = vunpack.c.h.b16 %v493
    %v2269 = vunpack.c.l.b16 %v494
    %v2270 = vunpack.c.h.b16 %v494
    %v2271 = vunpack.c.l.b16 %v495
    %v2272 = vunpack.c.l.b16 %v496
    %v2273 = vunpack.c.h.b16 %v496
    %v2274 = vunpack.c.l.b16 %v497
    %v2275 = vunpack.c.h.b16 %v497
    %v2276 = vunpack.c.l.b16 %v498
    %v2277 = vunpack.c.l.b16 %v499
    %v2278 = vunpack.c.h.b16 %v499
    %v2279 = vunpack.c.l.b16 %v500
    %v2280 = vunpack.c.h.b16 %v500
    %v2281 = vunpack.c.l.b16 %v501
    %v2282 = vunpack.c.l.b16 %v502
    %v2283 = vunpack.c.h.b16 %v502
    %v2284 = vunpack.c.l.b16 %v503
    %v2285 = vunpack.c.h.b16 %v503
    %v2286 = vunpack.c.l.b16 %v504
    %v2287 = vunpack.c.l.b16 %v505
    %v2288 = vunpack.c.h.b16 %v505
    %v2289 = vunpack.c.l.b16 %v506
    %v2290 = vunpack.c.h.b16 %v506
    %v2291 = vunpack.c.l.b16 %v507
    %v2292 = vunpack.c.l.b16 %v508
    %v2293 = vunpack.c.h.b16 %v508
    %v2294 = vunpack.c.l.b16 %v509
    %v2295 = vunpack.c.h.b16 %v509
    %v2296 = vunpack.c.l.b16 %v510
    %v2297 = vunpack.c.l.b16 %v511
    %v2298 = vunpack.c.h.b16 %v511
    %v2299 = vunpack.c.l.b16 %v512
    %v2300 = vunpack.c.h.b16 %v512
    %v2301 = vunpack.c.l.b16 %v513
    %v2302 = vunpack.c.l.b16 %v514
    %v2303 = vunpack.c.h.b16 %v514
    %v2304 = vunpack.c.l.b16 %v515
    %v2305 = vunpack.c.h.b16 %v515
    %v2306 = vunpack.c.l.b16 %v516
    %v2307 = vunpack.c.l.b16 %v517
    %v2308 = vunpack.c.h.b16 %v517
    %v2309 = vunpack.c.l.b16 %v518
    %v2310 = vunpack.c.h.b16 %v518
    %v2311 = vunpack.c.l.b16 %v519
    %v2312 = vunpack.c.l.b16 %v520
    %v2313 = vunpack.c.h.b16 %v520
    %v2314 = vunpack.c.l.b16 %v521
    %v2315 = vunpack.c.h.b16 %v521
    %v2316 = vunpack.c.l.b16 %v522
    %v2317 = vunpack.c.l.b16 %v523
    %v2318 = vunpack.c.h.b16 %v523
    %v2319 = vunpack.c.l.b16 %v524
    %v2320 = vunpack.c.h.b16 %v524
    %v2321 = vunpack.c.l.b16 %v525
    %v2322 = vunpack.c.l.b16 %v526
    %v2323 = vunpack.c.h.b16 %v526
    %v2324 = vunpack.c.l.b16 %v527
    %v2325 = vunpack.c.h.b16 %v527
    %v2326 = vunpack.c.l.b16 %v528
    %v2327 = vunpack.c.l.b16 %v529
    %v2328 = vunpack.c.h.b16 %v529
    %v2329 = vunpack.c.l.b16 %v530
    %v2330 = vunpack.c.h.b16 %v530
    %v2331 = vunpack.c.l.b16 %v531
    %v2332 = vunpack.c.l.b16 %v532
    %v2333 = vunpack.c.h.b16 %v532
    %v2334 = vunpack.c.l.b16 %v533
    %v2335 = vunpack.c.h.b16 %v533
    %v2336 = vunpack.c.l.b16 %v534
    %v2337 = vunpack.c.l.b16 %v535
    %v2338 = vunpack.c.h.b16 %v535
    %v2339 = vunpack.c.l.b16 %v536
    %v2340 = vunpack.c.h.b16 %v536
    %v2341 = vunpack.c.l.b16 %v537
    %v2342 = vunpack.c.l.b16 %v538
    %v2343 = vunpack.c.h.b16 %v538
    %v2344 = vunpack.c.l.b16 %v539
    %v2345 = vunpack.c.h.b16 %v539
    %v2346 = vunpack.c.l.b16 %v540
    %v2347 = vunpack.c.l.b16 %v541
    %v2348 = vunpack.c.h.b16 %v541
    %v2349 = vunpack.c.l.b16 %v542
    %v2350 = vunpack.c.h.b16 %v542
    %v2351 = vunpack.c.l.b16 %v543
    %v2352 = vunpack.c.l.b16 %v544
    %v2353 = vunpack.c.h.b16 %v544
    %v2354 = vunpack.c.l.b16 %v545
    %v2355 = vunpack.c.h.b16 %v545
    %v2356 = vunpack.c.l.b16 %v546
    %v2357 = vunpack.c.l.b16 %v547
    %v2358 = vunpack.c.h.b16 %v547
    %v2359 = vunpack.c.l.b16 %v548
    %v2360 = vunpack.c.h.b16 %v548
    %v2361 = vunpack.c.l.b16 %v549
    %v2362 = vunpack.c.l.b16 %v550
    %v2363 = vunpack.c.h.b16 %v550
    %v2364 = vunpack.c.l.b16 %v551
    %v2365 = vunpack.c.h.b16 %v551
    %v2366 = vunpack.c.l.b16 %v552
    %v2367 = vunpack.c.l.b16 %v553
    %v2368 = vunpack.c.h.b16 %v553
    %v2369 = vunpack.c.l.b16 %v554
    %v2370 = vunpack.c.h.b16 %v554
    %v2371 = vunpack.c.l.b16 %v555
    %v2372 = vunpack.c.l.b16 %v556
    %v2373 = vunpack.c.h.b16 %v556
    %v2374 = vunpack.c.l.b16 %v557
    %v2375 = vunpack.c.h.b16 %v557
    %v2376 = vunpack.c.l.b16 %v558
    %v2377 = vunpack.c.l.b16 %v559
    %v2378 = vunpack.c.h.b16 %v559
    %v2379 = vunpack.c.l.b16 %v560
    %v2380 = vunpack.c.h.b16 %v560
    %v2381 = vunpack.c.l.b16 %v561
    %v2382 = vunpack.c.l.b16 %v562
    %v2383 = vunpack.c.h.b16 %v562
    %v2384 = vunpack.c.l.b16 %v563
    %v2385 = vunpack.c.h.b16 %v563
    %v2386 = vunpack.c.l.b16 %v564
    %v2387 = vunpack.c.l.b16 %v565
    %v2388 = vunpack.c.h.b16 %v565
    %v2389 = vunpack.c.l.b16 %v566
    %v2390 = vunpack.c.h.b16 %v566
    %v2391 = vunpack.c.l.b16 %v567
    %v2392 = vunpack.c.l.b16 %v568
    %v2393 = vunpack.c.h.b16 %v568
    %v2394 = vunpack.c.l.b16 %v569
    %v2395 = vunpack.c.h.b16 %v569
    %v2396 = vunpack.c.l.b16 %v570
    %v2397 = vunpack.c.l.b16 %v571
    %v2398 = vunpack.c.h.b16 %v571
    %v2399 = vunpack.c.l.b16 %v572
    %v2400 = vunpack.c.h.b16 %v572
    %v2401 = vunpack.c.l.b16 %v573
    %v2402 = vunpack.c.l.b16 %v574
    %v2403 = vunpack.c.h.b16 %v574
    %v2404 = vunpack.c.l.b16 %v575
    %v2405 = vunpack.c.h.b16 %v575
    %v2406 = vunpack.c.l.b16 %v576
    %v2407 = vunpack.c.l.b16 %v577
    %v2408 = vunpack.c.h.b16 %v577
    %v2409 = vunpack.c.l.b16 %v578
    %v2410 = vunpack.c.h.b16 %v578
    %v2411 = vunpack.c.l.b16 %v579
    %v2412 = vunpack.c.l.b16 %v580
    %v2413 = vunpack.c.h.b16 %v580
    %v2414 = vunpack.c.l.b16 %v581
    %v2415 = vunpack.c.h.b16 %v581
    %v2416 = vunpack.c.l.b16 %v582
    %v2417 = vunpack.c.l.b16 %v583
    %v2418 = vunpack.c.h.b16 %v583
    %v2419 = vunpack.c.l.b16 %v584
    %v2420 = vunpack.c.h.b16 %v584
    %v2421 = vunpack.c.l.b16 %v585
    %v2422 = vunpack.c.l.b16 %v586
    %v2423 = vunpack.c.h.b16 %v586
    %v2424 = vunpack.c.l.b16 %v587
    %v2425 = vunpack.c.h.b16 %v587
    %v2426 = vunpack.c.l.b16 %v588
    %v2427 = vunpack.c.l.b16 %v589
    %v2428 = vunpack.c.h.b16 %v589
    %v2429 = vunpack.c.l.b16 %v590
    %v2430 = vunpack.c.h.b16 %v590
    %v2431 = vunpack.c.l.b16 %v591
    %v2432 = vunpack.c.l.b16 %v592
    %v2433 = vunpack.c.h.b16 %v592
    %v2434 = vunpack.c.l.b16 %v593
    %v2435 = vunpack.c.h.b16 %v593
    %v2436 = vunpack.c.l.b16 %v594
    %v2437 = vunpack.c.l.b16 %v595
    %v2438 = vunpack.c.h.b16 %v595
    %v2439 = vunpack.c.l.b16 %v596
    %v2440 = vunpack.c.h.b16 %v596
    %v2441 = vunpack.c.l.b16 %v597
    %v2442 = vunpack.c.l.b16 %v598
    %v2443 = vunpack.c.h.b16 %v598
    %v2444 = vunpack.c.l.b16 %v599
    %v2445 = vunpack.c.h.b16 %v599
    %v2446 = vunpack.c.l.b16 %v600
    %v2447 = vunpack.c.l.b16 %v601
    %v2448 = vunpack.c.h.b16 %v601
    %v2449 = vunpack.c.l.b16 %v602
    %v2450 = vunpack.c.h.b16 %v602
    %v2451 = vunpack.c.l.b16 %v603
    %v2452 = vunpack.c.l.b16 %v604
    %v2453 = vunpack.c.h.b16 %v604
    %v2454 = vunpack.c.l.b16 %v605
    %v2455 = vunpack.c.h.b16 %v605
    %v2456 = vunpack.c.l.b16 %v606
    %v2457 = vunpack.c.l.b16 %v607
    %v2458 = vunpack.c.h.b16 %v607
    %v2459 = vunpack.c.l.b16 %v608
    %v2460 = vunpack.c.h.b16 %v608
    %v2461 = vunpack.c.l.b16 %v609
    %v2462 = vunpack.c.l.b16 %v610
    %v2463 = vunpack.c.h.b16 %v610
    %v2464 = vunpack.c.l.b16 %v611
    %v2465 = vunpack.c.h.b16 %v611
    %v2466 = vunpack.c.l.b16 %v612
    %v2467 = vunpack.c.l.b16 %v613
    %v2468 = vunpack.c.h.b16 %v613
    %v2469 = vunpack.c.l.b16 %v614
    %v2470 = vunpack.c.h.b16 %v614
    %v2471 = vunpack.c.l.b16 %v615
    %v2472 = vunpack.c.l.b16 %v616
    %v2473 = vunpack.c.h.b16 %v616
    %v2474 = vunpack.c.l.b16 %v617
    %v2475 = vunpack.c.h.b16 %v617
    %v2476 = vunpack.c.l.b16 %v618
    %v2477 = vunpack.c.l.b16 %v619
    %v2478 = vunpack.c.h.b16 %v619
    %v2479 = vunpack.c.l.b16 %v620
    %v2480 = vunpack.c.h.b16 %v620
    %v2481 = vunpack.c.l.b16 %v621
    %v2482 = vunpack.c.l.b16 %v622
    %v2483 = vunpack.c.h.b16 %v622
    %v2484 = vunpack.c.l.b16 %v623
    %v2485 = vunpack.c.h.b16 %v623
    %v2486 = vunpack.c.l.b16 %v624
    %v2487 = vunpack.c.l.b16 %v625
    %v2488 = vunpack.c.h.b16 %v625
    %v2489 = vunpack.c.l.b16 %v626
    %v2490 = vunpack.c.h.b16 %v626
    %v2491 = vunpack.c.l.b16 %v627
    %v2492 = vunpack.c.l.b16 %v628
    %v2493 = vunpack.c.h.b16 %v628
    %v2494 = vunpack.c.l.b16 %v629
    %v2495 = vunpack.c.h.b16 %v629
    %v2496 = vunpack.c.l.b16 %v630
    %v2497 = vunpack.c.l.b16 %v631
    %v2498 = vunpack.c.h.b16 %v631
    %v2499 = vunpack.c.l.b16 %v632
    %v2500 = vunpack.c.h.b16 %v632
    %v2501 = vunpack.c.l.b16 %v633
    %v2502 = vunpack.c.l.b16 %v634
    %v2503 = vunpack.c.h.b16 %v634
    %v2504 = vunpack.c.l.b16 %v635
    %v2505 = vunpack.c.h.b16 %v635
    %v2506 = vunpack.c.l.b16 %v636
    %v2507 = vunpack.c.l.b16 %v637
    %v2508 = vunpack.c.h.b16 %v637
    %v2509 = vunpack.c.l.b16 %v638
    %v2510 = vunpack.c.h.b16 %v638
    %v2511 = vunpack.c.l.b16 %v639
    %v2512 = vunpack.c.l.b16 %v640
    %v2513 = vunpack.c.h.b16 %v640
    %v2514 = vunpack.c.l.b16 %v641
    %v2515 = vunpack.c.h.b16 %v641
    %v2516 = vunpack.c.l.b16 %v642
    %v2517 = vunpack.c.l.b16 %v643
    %v2518 = vunpack.c.h.b16 %v643
    %v2519 = vunpack.c.l.b16 %v644
    %v2520 = vunpack.c.h.b16 %v644
    %v2521 = vunpack.c.l.b16 %v645
    %v2522 = vunpack.c.l.b16 %v646
    %v2523 = vunpack.c.h.b16 %v646
    %v2524 = vunpack.c.l.b16 %v647
    %v2525 = vunpack.c.h.b16 %v647
    %v2526 = vunpack.c.l.b16 %v648
    %v2527 = vunpack.c.l.b16 %v649
    %v2528 = vunpack.c.h.b16 %v649
    %v2529 = vunpack.c.l.b16 %v650
    %v2530 = vunpack.c.h.b16 %v650
    %v2531 = vunpack.c.l.b16 %v651
    %v2532 = vunpack.c.l.b16 %v652
    %v2533 = vunpack.c.h.b16 %v652
    %v2534 = vunpack.c.l.b16 %v653
    %v2535 = vunpack.c.h.b16 %v653
    %v2536 = vunpack.c.l.b16 %v654
    %v2537 = vunpack.c.l.b16 %v655
    %v2538 = vunpack.c.h.b16 %v655
    %v2539 = vunpack.c.l.b16 %v656
    %v2540 = vunpack.c.h.b16 %v656
    %v2541 = vunpack.c.l.b16 %v657
    %v2542 = vunpack.c.l.b16 %v658
    %v2543 = vunpack.c.h.b16 %v658
    %v2544 = vunpack.c.l.b16 %v659
    %v2545 = vunpack.c.h.b16 %v659
    %v2546 = vunpack.c.l.b16 %v660
    %v2547 = vunpack.c.l.b16 %v661
    %v2548 = vunpack.c.h.b16 %v661
    %v2549 = vunpack.c.l.b16 %v662
    %v2550 = vunpack.c.h.b16 %v662
    %v2551 = vunpack.c.l.b16 %v663
    %v2552 = vunpack.c.l.b16 %v664
    %v2553 = vunpack.c.h.b16 %v664
    %v2554 = vunpack.c.l.b16 %v665
    %v2555 = vunpack.c.h.b16 %v665
    %v2556 = vunpack.c.l.b16 %v666
    %v2557 = vunpack.c.l.b16 %v667
    %v2558 = vunpack.c.h.b16 %v667
    %v2559 = vunpack.c.l.b16 %v668
    %v2560 = vunpack.c.h.b16 %v668
    %v2561 = vunpack.c.l.b16 %v669
    %v2562 = vunpack.c.l.b16 %v670
    %v2563 = vunpack.c.h.b16 %v670
    %v2564 = vunpack.c.l.b16 %v671
    %v2565 = vunpack.c.h.b16 %v671
    %v2566 = vunpack.c.l.b16 %v672
    %v2567 = vunpack.c.l.b16 %v673
    %v2568 = vunpack.c.h.b16 %v673
    %v2569 = vunpack.c.l.b16 %v674
    %v2570 = vunpack.c.h.b16 %v674
    %v2571 = vunpack.c.l.b16 %v675
    %v2572 = vunpack.c.l.b16 %v676
    %v2573 = vunpack.c.h.b16 %v676
    %v2574 = vunpack.c.l.b16 %v677
    %v2575 = vunpack.c.h.b16 %v677
    %v2576 = vunpack.c.l.b16 %v678
    %v2577 = vunpack.c.l.b16 %v679
    %v2578 = vunpack.c.h.b16 %v679
    %v2579 = vunpack.c.l.b16 %v680
    %v2580 = vunpack.c.h.b16 %v680
    %v2581 = vunpack.c.l.b16 %v681
    %v2582 = vunpack.c.l.b16 %v682
    %v2583 = vunpack.c.h.b16 %v682
    %v2584 = vunpack.c.l.b16 %v683
    %v2585 = vunpack.c.h.b16 %v683
    %v2586 = vunpack.c.l.b16 %v684
    %v2587 = vunpack.c.l.b16 %v685
    %v2588 = vunpack.c.h.b16 %v685
    %v2589 = vunpack.c.l.b16 %v686
    %v2590 = vunpack.c.h.b16 %v686
    %v2591 = vunpack.c.l.b16 %v687
    %v2592 = vunpack.c.l.b16 %v688
    %v2593 = vunpack.c.h.b16 %v688
    %v2594 = vunpack.c.l.b16 %v689
    %v2595 = vunpack.c.h.b16 %v689
    %v2596 = vunpack.c.l.b16 %v690
    %v2597 = vunpack.c.l.b16 %v691
    %v2598 = vunpack.c.h.b16 %v691
    %v2599 = vunpack.c.l.b16 %v692
    %v2600 = vunpack.c.h.b16 %v692
    %v2601 = vunpack.c.l.b16 %v693
    %v2602 = vunpack.c.l.b16 %v694
    %v2603 = vunpack.c.h.b16 %v694
    %v2604 = vunpack.c.l.b16 %v695
    %v2605 = vunpack.c.h.b16 %v695
    %v2606 = vunpack.c.l.b16 %v696
    %v2607 = vunpack.c.l.b16 %v697
    %v2608 = vunpack.c.h.b16 %v697
    %v2609 = vunpack.c.l.b16 %v698
    %v2610 = vunpack.c.h.b16 %v698
    %v2611 = vunpack.c.l.b16 %v699
    %v2612 = vunpack.c.l.b16 %v700
    %v2613 = vunpack.c.h.b16 %v700
    %v2614 = vunpack.c.l.b16 %v701
    %v2615 = vunpack.c.h.b16 %v701
    %v2616 = vunpack.c.l.b16 %v702
    %v2617 = vunpack.c.l.b16 %v703
    %v2618 = vunpack.c.h.b16 %v703
    %v2619 = vunpack.c.l.b16 %v704
    %v2620 = vunpack.c.h.b16 %v704
    %v2621 = vunpack.c.l.b16 %v705
    %v2622 = vunpack.c.l.b16 %v706
    %v2623 = vunpack.c.h.b16 %v706
    %v2624 = vunpack.c.l.b16 %v707
    %v2625 = vunpack.c.h.b16 %v707
    %v2626 = vunpack.c.l.b16 %v708
    %v2627 = vunpack.c.l.b16 %v709
    %v2628 = vunpack.c.h.b16 %v709
    %v2629 = vunpack.c.l.b16 %v710
    %v2630 = vunpack.c.h.b16 %v710
    %v2631 = vunpack.c.l.b16 %v711
    %v2632 = vunpack.c.l.b16 %v712
    %v2633 = vunpack.c.h.b16 %v712
    %v2634 = vunpack.c.l.b16 %v713
    %v2635 = vunpack.c.h.b16 %v713
    %v2636 = vunpack.c.l.b16 %v714
    %v2637 = vunpack.c.l.b16 %v715
    %v2638 = vunpack.c.h.b16 %v715
    %v2639 = vunpack.c.l.b16 %v716
    %v2640 = vunpack.c.h.b16 %v716
    %v2641 = vunpack.c.l.b16 %v717
    %v2642 = vunpack.c.l.b16 %v718
    %v2643 = vunpack.c.h.b16 %v718
    %v2644 = vunpack.c.l.b16 %v719
    %v2645 = vunpack.c.h.b16 %v719
    %v2646 = vunpack.c.l.b16 %v720
    %v2647 = vunpack.c.l.b16 %v721
    %v2648 = vunpack.c.h.b16 %v721
    %v2649 = vunpack.c.l.b16 %v722
    %v2650 = vunpack.c.h.b16 %v722
    %v2651 = vunpack.c.l.b16 %v723
    %v2652 = vunpack.c.l.b16 %v724
    %v2653 = vunpack.c.h.b16 %v724
    %v2654 = vunpack.c.l.b16 %v725
    %v2655 = vunpack.c.h.b16 %v725
    %v2656 = vunpack.c.l.b16 %v726
    %v2657 = vunpack.c.l.b16 %v727
    %v2658 = vunpack.c.h.b16 %v727
    %v2659 = vunpack.c.l.b16 %v728
    %v2660 = vunpack.c.h.b16 %v728
    %v2661 = vunpack.c.l.b16 %v729
    %v2662 = vunpack.c.l.b16 %v730
    %v2663 = vunpack.c.h.b16 %v730
    %v2664 = vunpack.c.l.b16 %v731
    %v2665 = vunpack.c.h.b16 %v731
    %v2666 = vunpack.c.l.b16 %v732
    %v2667 = vunpack.c.l.b16 %v733
    %v2668 = vunpack.c.h.b16 %v733
    %v2669 = vunpack.c.l.b16 %v734
    %v2670 = vunpack.c.h.b16 %v734
    %v2671 = vunpack.c.l.b16 %v735
    %v2672 = vunpack.c.l.b16 %v736
    %v2673 = vunpack.c.h.b16 %v736
    %v2674 = vunpack.c.l.b16 %v737
    %v2675 = vunpack.c.h.b16 %v737
    %v2676 = vunpack.c.l.b16 %v738
    %v2677 = vunpack.c.l.b16 %v739
    %v2678 = vunpack.c.h.b16 %v739
    %v2679 = vunpack.c.l.b16 %v740
    %v2680 = vunpack.c.h.b16 %v740
    %v2681 = vunpack.c.l.b16 %v741
    %v2682 = vunpack.c.l.b16 %v742
    %v2683 = vunpack.c.h.b16 %v742
    %v2684 = vunpack.c.l.b16 %v743
    %v2685 = vunpack.c.h.b16 %v743
    %v2686 = vunpack.c.l.b16 %v744
    %v2687 = vunpack.c.l.b16 %v745
    %v2688 = vunpack.c.h.b16 %v745
    %v2689 = vunpack.c.l.b16 %v746
    %v2690 = vunpack.c.h.b16 %v746
    %v2691 = vunpack.c.l.b16 %v747
    %v2692 = vunpack.c.l.b16 %v748
    %v2693 = vunpack.c.h.b16 %v748
    %v2694 = vunpack.c.l.b16 %v749
    %v2695 = vunpack.c.h.b16 %v749
    %v2696 = vunpack.c.l.b16 %v750
    %v2697 = vunpack.c.l.b16 %v751
    %v2698 = vunpack.c.h.b16 %v751
    %v2699 = vunpack.c.l.b16 %v752
    %v2700 = vunpack.c.h.b16 %v752
    %v2701 = vunpack.c.l.b16 %v753
    %v2702 = vunpack.c.l.b16 %v754
    %v2703 = vunpack.c.h.b16 %v754
    %v2704 = vunpack.c.l.b16 %v755
    %v2705 = vunpack.c.h.b16 %v755
    %v2706 = vunpack.c.l.b16 %v756
    %v2707 = vunpack.c.l.b16 %v757
    %v2708 = vunpack.c.h.b16 %v757
    %v2709 = vunpack.c.l.b16 %v758
    %v2710 = vunpack.c.h.b16 %v758
    %v2711 = vunpack.c.l.b16 %v759
    %v2712 = vunpack.c.l.b16 %v760
    %v2713 = vunpack.c.h.b16 %v760
    %v2714 = vunpack.c.l.b16 %v761
    %v2715 = vunpack.c.h.b16 %v761
    %v2716 = vunpack.c.l.b16 %v762
    %v2717 = vunpack.c.l.b16 %v763
    %v2718 = vunpack.c.h.b16 %v763
    %v2719 = vunpack.c.l.b16 %v764
    %v2720 = vunpack.c.h.b16 %v764
    %v2721 = vunpack.c.l.b16 %v765
    %v2722 = vunpack.c.l.b16 %v766
    %v2723 = vunpack.c.h.b16 %v766
    %v2724 = vunpack.c.l.b16 %v767
    %v2725 = vunpack.c.h.b16 %v767
    %v2726 = vunpack.c.l.b16 %v768
    %v2727 = vunpack.c.l.b16 %v769
    %v2728 = vunpack.c.h.b16 %v769
    %v2729 = vunpack.c.l.b16 %v770
    %v2730 = vunpack.c.h.b16 %v770
    %v2731 = vunpack.c.l.b16 %v771
    %v2732 = vunpack.c.l.b16 %v772
    %v2733 = vunpack.c.h.b16 %v772
    %v2734 = vunpack.c.l.b16 %v773
    %v2735 = vunpack.c.h.b16 %v773
    %v2736 = vunpack.c.l.b16 %v774
    %v2737 = vunpack.c.l.b16 %v775
    %v2738 = vunpack.c.h.b16 %v775
    %v2739 = vunpack.c.l.b16 %v776
    %v2740 = vunpack.c.h.b16 %v776
    %v2741 = vunpack.c.l.b16 %v777
    %v2742 = vunpack.c.l.b16 %v778
    %v2743 = vunpack.c.h.b16 %v778
    %v2744 = vunpack.c.l.b16 %v779
    %v2745 = vunpack.c.h.b16 %v779
    %v2746 = vunpack.c.l.b16 %v780
    %v2747 = vunpack.c.l.b16 %v781
    %v2748 = vunpack.c.h.b16 %v781
    %v2749 = vunpack.c.l.b16 %v782
    %v2750 = vunpack.c.h.b16 %v782
    %v2751 = vunpack.c.l.b16 %v783
    %v2752 = vunpack.c.l.b16 %v784
    %v2753 = vunpack.c.h.b16 %v784
    %v2754 = vunpack.c.l.b16 %v785
    %v2755 = vunpack.c.h.b16 %v785
    %v2756 = vunpack.c.l.b16 %v786
    %v2757 = vunpack.c.l.b16 %v787
    %v2758 = vunpack.c.h.b16 %v787
    %v2759 = vunpack.c.l.b16 %v788
    %v2760 = vunpack.c.h.b16 %v788
    %v2761 = vunpack.c.l.b16 %v789
    %v2762 = vunpack.c.l.b16 %v790
    %v2763 = vunpack.c.h.b16 %v790
    %v2764 = vunpack.c.l.b16 %v791
    %v2765 = vunpack.c.h.b16 %v791
    %v2766 = vunpack.c.l.b16 %v792
    %v2767 = vunpack.c.l.b16 %v793
    %v2768 = vunpack.c.h.b16 %v793
    %v2769 = vunpack.c.l.b16 %v794
    %v2770 = vunpack.c.h.b16 %v794
    %v2771 = vunpack.c.l.b16 %v795
    %v2772 = vunpack.c.l.b16 %v796
    %v2773 = vunpack.c.h.b16 %v796
    %v2774 = vunpack.c.l.b16 %v797
    %v2775 = vunpack.c.h.b16 %v797
    %v2776 = vunpack.c.l.b16 %v798
    %v2777 = vunpack.c.l.b16 %v799
    %v2778 = vunpack.c.h.b16 %v799
    %v2779 = vunpack.c.l.b16 %v800
    %v2780 = vunpack.c.h.b16 %v800
    %v2781 = vunpack.c.l.b16 %v801
    %v2782 = vunpack.c.l.b16 %v802
    %v2783 = vunpack.c.h.b16 %v802
    %v2784 = vunpack.c.l.b16 %v803
    %v2785 = vunpack.c.h.b16 %v803
    %v2786 = vunpack.c.l.b16 %v804
    %v2787 = vunpack.c.l.b16 %v805
    %v2788 = vunpack.c.h.b16 %v805
    %v2789 = vunpack.c.l.b16 %v806
    %v2790 = vunpack.c.h.b16 %v806
    %v2791 = vunpack.c.l.b16 %v807
    %v2792 = vunpack.c.l.b16 %v808
    %v2793 = vunpack.c.h.b16 %v808
    %v2794 = vunpack.c.l.b16 %v809
    %v2795 = vunpack.c.h.b16 %v809
    %v2796 = vunpack.c.l.b16 %v810
    %v2797 = vunpack.c.l.b16 %v811
    %v2798 = vunpack.c.h.b16 %v811
    %v2799 = vunpack.c.l.b16 %v812
    %v2800 = vunpack.c.h.b16 %v812
    %v2801 = vunpack.c.l.b16 %v813
    %v2802 = vunpack.c.l.b16 %v814
    %v2803 = vunpack.c.h.b16 %v814
    %v2804 = vunpack.c.l.b16 %v815
    %v2805 = vunpack.c.h.b16 %v815
    %v2806 = vunpack.c.l.b16 %v816
    %v2807 = vunpack.c.l.b16 %v817
    %v2808 = vunpack.c.h.b16 %v817
    %v2809 = vunpack.c.l.b16 %v818
    %v2810 = vunpack.c.h.b16 %v818
    %v2811 = vunpack.c.l.b16 %v819
    %v2812 = vunpack.c.l.b16 %v820
    %v2813 = vunpack.c.h.b16 %v820
    %v2814 = vunpack.c.l.b16 %v821
    %v2815 = vunpack.c.h.b16 %v821
    %v2816 = vunpack.c.l.b16 %v822
    %v2817 = vunpack.c.l.b16 %v823
    %v2818 = vunpack.c.h.b16 %v823
    %v2819 = vunpack.c.l.b16 %v824
    %v2820 = vunpack.c.h.b16 %v824
    %v2821 = vunpack.c.l.b16 %v825
    %v2822 = vunpack.c.l.b16 %v826
    %v2823 = vunpack.c.h.b16 %v826
    %v2824 = vunpack.c.l.b16 %v827
    %v2825 = vunpack.c.h.b16 %v827
    %v2826 = vunpack.c.l.b16 %v828
    %v2827 = vunpack.c.l.b16 %v829
    %v2828 = vunpack.c.h.b16 %v829
    %v2829 = vunpack.c.l.b16 %v830
    %v2830 = vunpack.c.h.b16 %v830
    %v2831 = vunpack.c.l.b16 %v831
    %v2832 = vunpack.c.l.b16 %v832
    %v2833 = vunpack.c.h.b16 %v832
    %v2834 = vunpack.c.l.b16 %v833
    %v2835 = vunpack.c.h.b16 %v833
    %v2836 = vunpack.c.l.b16 %v834
    %v2837 = vunpack.c.l.b16 %v835
    %v2838 = vunpack.c.h.b16 %v835
    %v2839 = vunpack.c.l.b16 %v836
    %v2840 = vunpack.c.h.b16 %v836
    %v2841 = vunpack.c.l.b16 %v837
    %v2842 = vunpack.c.l.b16 %v838
    %v2843 = vunpack.c.h.b16 %v838
    %v2844 = vunpack.c.l.b16 %v839
    %v2845 = vunpack.c.h.b16 %v839
    %v2846 = vunpack.c.l.b16 %v840
    %v2847 = vunpack.c.l.b16 %v841
    %v2848 = vunpack.c.h.b16 %v841
    %v2849 = vunpack.c.l.b16 %v842
    %v2850 = vunpack.c.h.b16 %v842
    %v2851 = vunpack.c.l.b16 %v843
    %v2852 = vunpack.c.l.b16 %v844
    %v2853 = vunpack.c.h.b16 %v844
    %v2854 = vunpack.c.l.b16 %v845
    %v2855 = vunpack.c.h.b16 %v845
    %v2856 = vunpack.c.l.b16 %v846
    %v2857 = vunpack.c.l.b16 %v847
    %v2858 = vunpack.c.h.b16 %v847
    %v2859 = vunpack.c.l.b16 %v848
    %v2860 = vunpack.c.h.b16 %v848
    %v2861 = vunpack.c.l.b16 %v849
    %v2862 = vunpack.c.l.b16 %v850
    %v2863 = vunpack.c.h.b16 %v850
    %v2864 = vunpack.c.l.b16 %v851
    %v2865 = vunpack.c.h.b16 %v851
    %v2866 = vunpack.c.l.b16 %v852
    %v2867 = vunpack.c.l.b16 %v853
    %v2868 = vunpack.c.h.b16 %v853
    %v2869 = vunpack.c.l.b16 %v854
    %v2870 = vunpack.c.h.b16 %v854
    %v2871 = vunpack.c.l.b16 %v855
    %v2872 = vunpack.c.l.b16 %v856
    %v2873 = vunpack.c.h.b16 %v856
    %v2874 = vunpack.c.l.b16 %v857
    %v2875 = vunpack.c.h.b16 %v857
    %v2876 = vunpack.c.l.b16 %v858
    %v2877 = vunpack.c.l.b16 %v859
    %v2878 = vunpack.c.h.b16 %v859
    %v2879 = vunpack.c.l.b16 %v860
    %v2880 = vunpack.c.h.b16 %v860
    %v2881 = vunpack.c.l.b16 %v861
    %v2882 = vunpack.c.l.b16 %v862
    %v2883 = vunpack.c.h.b16 %v862
    %v2884 = vunpack.c.l.b16 %v863
    %v2885 = vunpack.c.h.b16 %v863
    %v2886 = vunpack.c.l.b16 %v864
    %v2887 = vunpack.c.l.b16 %v865
    %v2888 = vunpack.c.h.b16 %v865
    %v2889 = vunpack.c.l.b16 %v866
    %v2890 = vunpack.c.h.b16 %v866
    %v2891 = vunpack.c.l.b16 %v867
    %v2892 = vunpack.c.l.b16 %v868
    %v2893 = vunpack.c.h.b16 %v868
    %v2894 = vunpack.c.l.b16 %v869
    %v2895 = vunpack.c.h.b16 %v869
    %v2896 = vunpack.c.l.b16 %v870
    %v2897 = vunpack.c.l.b16 %v871
    %v2898 = vunpack.c.h.b16 %v871
    %v2899 = vunpack.c.l.b16 %v872
    %v2900 = vunpack.c.h.b16 %v872
    %v2901 = vunpack.c.l.b16 %v873
    %v2902 = vunpack.c.l.b16 %v874
    %v2903 = vunpack.c.h.b16 %v874
    %v2904 = vunpack.c.l.b16 %v875
    %v2905 = vunpack.c.h.b16 %v875
    %v2906 = vunpack.c.l.b16 %v876
    %v2907 = vunpack.c.l.b16 %v877
    %v2908 = vunpack.c.h.b16 %v877
    %v2909 = vunpack.c.l.b16 %v878
    %v2910 = vunpack.c.h.b16 %v878
    %v2911 = vunpack.c.l.b16 %v879
    %v2912 = vunpack.c.l.b16 %v880
    %v2913 = vunpack.c.h.b16 %v880
    %v2914 = vunpack.c.l.b16 %v881
    %v2915 = vunpack.c.h.b16 %v881
    %v2916 = vunpack.c.l.b16 %v882
    %v2917 = vunpack.c.l.b16 %v883
    %v2918 = vunpack.c.h.b16 %v883
    %v2919 = vunpack.c.l.b16 %v884
    %v2920 = vunpack.c.h.b16 %v884
    %v2921 = vunpack.c.l.b16 %v885
    %v2922 = vunpack.c.l.b16 %v886
    %v2923 = vunpack.c.h.b16 %v886
    %v2924 = vunpack.c.l.b16 %v887
    %v2925 = vunpack.c.h.b16 %v887
    %v2926 = vunpack.c.l.b16 %v888
    %v2927 = vunpack.c.l.b16 %v889
    %v2928 = vunpack.c.h.b16 %v889
    %v2929 = vunpack.c.l.b16 %v890
    %v2930 = vunpack.c.h.b16 %v890
    %v2931 = vunpack.c.l.b16 %v891
    %v2932 = vunpack.c.l.b16 %v892
    %v2933 = vunpack.c.h.b16 %v892
    %v2934 = vunpack.c.l.b16 %v893
    %v2935 = vunpack.c.h.b16 %v893
    %v2936 = vunpack.c.l.b16 %v894
    %v2937 = vunpack.c.l.b16 %v895
    %v2938 = vunpack.c.h.b16 %v895
    %v2939 = vunpack.c.l.b16 %v896
    %v2940 = vunpack.c.h.b16 %v896
    %v2941 = vunpack.c.l.b16 %v897
    %v2942 = vunpack.c.l.b16 %v898
    %v2943 = vunpack.c.h.b16 %v898
    %v2944 = vunpack.c.l.b16 %v899
    %v2945 = vunpack.c.h.b16 %v899
    %v2946 = vunpack.c.l.b16 %v900
    %v2947 = vunpack.c.l.b16 %v901
    %v2948 = vunpack.c.h.b16 %v901
    %v2949 = vunpack.c.l.b16 %v902
    %v2950 = vunpack.c.h.b16 %v902
    %v2951 = vunpack.c.l.b16 %v903
    %v2952 = vpack.c.b16 %v1677, %v1672
    %v2953 = vpack.c.b16 %v1678, %v1673
    %v2954 = vpack.c.b16 %v1679, %v1674
    %v2955 = vpack.c.b16 %v1680, %v1675
    %v2956 = vpack.c.b16 %v1681, %v1676
    %v2957 = vpack.c.b16 %v1687, %v1682
    %v2958 = vpack.c.b16 %v1688, %v1683
    %v2959 = vpack.c.b16 %v1689, %v1684
    %v2960 = vpack.c.b16 %v1690, %v1685
    %v2961 = vpack.c.b16 %v1691, %v1686
    %v2962 = vpack.c.b16 %v1697, %v1692
    %v2963 = vpack.c.b16 %v1698, %v1693
    %v2964 = vpack.c.b16 %v1699, %v1694
    %v2965 = vpack.c.b16 %v1700, %v1695
    %v2966 = vpack.c.b16 %v1701, %v1696
    %v2967 = vpack.c.b16 %v1707, %v1702
    %v2968 = vpack.c.b16 %v1708, %v1703
    %v2969 = vpack.c.b16 %v1709, %v1704
    %v2970 = vpack.c.b16 %v1710, %v1705
    %v2971 = vpack.c.b16 %v1711, %v1706
    %v2972 = vpack.c.b16 %v1717, %v1712
    %v2973 = vpack.c.b16 %v1718, %v1713
    %v2974 = vpack.c.b16 %v1719, %v1714
    %v2975 = vpack.c.b16 %v1720, %v1715
    %v2976 = vpack.c.b16 %v1721, %v1716
    %v2977 = vpack.c.b16 %v1727, %v1722
    %v2978 = vpack.c.b16 %v1728, %v1723
    %v2979 = vpack.c.b16 %v1729, %v1724
    %v2980 = vpack.c.b16 %v1730, %v1725
    %v2981 = vpack.c.b16 %v1731, %v1726
    %v2982 = vpack.c.b16 %v1737, %v1732
    %v2983 = vpack.c.b16 %v1738, %v1733
    %v2984 = vpack.c.b16 %v1739, %v1734
    %v2985 = vpack.c.b16 %v1740, %v1735
    %v2986 = vpack.c.b16 %v1741, %v1736
    %v2987 = vpack.c.b16 %v1747, %v1742
    %v2988 = vpack.c.b16 %v1748, %v1743
    %v2989 = vpack.c.b16 %v1749, %v1744
    %v2990 = vpack.c.b16 %v1750, %v1745
    %v2991 = vpack.c.b16 %v1751, %v1746
    %v2992 = vpack.c.b16 %v1757, %v1752
    %v2993 = vpack.c.b16 %v1758, %v1753
    %v2994 = vpack.c.b16 %v1759, %v1754
    %v2995 = vpack.c.b16 %v1760, %v1755
    %v2996 = vpack.c.b16 %v1761, %v1756
    %v2997 = vpack.c.b16 %v1767, %v1762
    %v2998 = vpack.c.b16 %v1768, %v1763
    %v2999 = vpack.c.b16 %v1769, %v1764
    %v3000 = vpack.c.b16 %v1770, %v1765
    %v3001 = vpack.c.b16 %v1771, %v1766
    %v3002 = vpack.c.b16 %v1777, %v1772
    %v3003 = vpack.c.b16 %v1778, %v1773
    %v3004 = vpack.c.b16 %v1779, %v1774
    %v3005 = vpack.c.b16 %v1780, %v1775
    %v3006 = vpack.c.b16 %v1781, %v1776
    %v3007 = vpack.c.b16 %v1787, %v1782
    %v3008 = vpack.c.b16 %v1788, %v1783
    %v3009 = vpack.c.b16 %v1789, %v1784
    %v3010 = vpack.c.b16 %v1790, %v1785
    %v3011 = vpack.c.b16 %v1791, %v1786
    %v3012 = vpack.c.b16 %v1797, %v1792
    %v3013 = vpack.c.b16 %v1798, %v1793
    %v3014 = vpack.c.b16 %v1799, %v1794
    %v3015 = vpack.c.b16 %v1800, %v1795
    %v3016 = vpack.c.b16 %v1801, %v1796
    %v3017 = vpack.c.b16 %v1807, %v1802
    %v3018 = vpack.c.b16 %v1808, %v1803
    %v3019 = vpack.c.b16 %v1809, %v1804
    %v3020 = vpack.c.b16 %v1810, %v1805
    %v3021 = vpack.c.b16 %v1811, %v1806
    %v3022 = vpack.c.b16 %v1817, %v1812
    %v3023 = vpack.c.b16 %v1818, %v1813
    %v3024 = vpack.c.b16 %v1819, %v1814
    %v3025 = vpack.c.b16 %v1820, %v1815
    %v3026 = vpack.c.b16 %v1821, %v1816
    %v3027 = vpack.c.b16 %v1827, %v1822
    %v3028 = vpack.c.b16 %v1828, %v1823
    %v3029 = vpack.c.b16 %v1829, %v1824
    %v3030 = vpack.c.b16 %v1830, %v1825
    %v3031 = vpack.c.b16 %v1831, %v1826
    %v3032 = vpack.c.b16 %v1837, %v1832
    %v3033 = vpack.c.b16 %v1838, %v1833
    %v3034 = vpack.c.b16 %v1839, %v1834
    %v3035 = vpack.c.b16 %v1840, %v1835
    %v3036 = vpack.c.b16 %v1841, %v1836
    %v3037 = vpack.c.b16 %v1847, %v1842
    %v3038 = vpack.c.b16 %v1848, %v1843
    %v3039 = vpack.c.b16 %v1849, %v1844
    %v3040 = vpack.c.b16 %v1850, %v1845
    %v3041 = vpack.c.b16 %v1851, %v1846
    %v3042 = vpack.c.b16 %v1857, %v1852
    %v3043 = vpack.c.b16 %v1858, %v1853
    %v3044 = vpack.c.b16 %v1859, %v1854
    %v3045 = vpack.c.b16 %v1860, %v1855
    %v3046 = vpack.c.b16 %v1861, %v1856
    %v3047 = vpack.c.b16 %v1867, %v1862
    %v3048 = vpack.c.b16 %v1868, %v1863
    %v3049 = vpack.c.b16 %v1869, %v1864
    %v3050 = vpack.c.b16 %v1870, %v1865
    %v3051 = vpack.c.b16 %v1871, %v1866
    %v3052 = vpack.c.b16 %v1877, %v1872
    %v3053 = vpack.c.b16 %v1878, %v1873
    %v3054 = vpack.c.b16 %v1879, %v1874
    %v3055 = vpack.c.b16 %v1880, %v1875
    %v3056 = vpack.c.b16 %v1881, %v1876
    %v3057 = vpack.c.b16 %v1887, %v1882
    %v3058 = vpack.c.b16 %v1888, %v1883
    %v3059 = vpack.c.b16 %v1889, %v1884
    %v3060 = vpack.c.b16 %v1890, %v1885
    %v3061 = vpack.c.b16 %v1891, %v1886
    %v3062 = vpack.c.b16 %v1897, %v1892
    %v3063 = vpack.c.b16 %v1898, %v1893
    %v3064 = vpack.c.b16 %v1899, %v1894
    %v3065 = vpack.c.b16 %v1900, %v1895
    %v3066 = vpack.c.b16 %v1901, %v1896
    %v3067 = vpack.c.b16 %v1907, %v1902
    %v3068 = vpack.c.b16 %v1908, %v1903
    %v3069 = vpack.c.b16 %v1909, %v1904
    %v3070 = vpack.c.b16 %v1910, %v1905
    %v3071 = vpack.c.b16 %v1911, %v1906
    %v3072 = vpack.c.b16 %v1917, %v1912
    %v3073 = vpack.c.b16 %v1918, %v1913
    %v3074 = vpack.c.b16 %v1919, %v1914
    %v3075 = vpack.c.b16 %v1920, %v1915
    %v3076 = vpack.c.b16 %v1921, %v1916
    %v3077 = vpack.c.b16 %v1927, %v1922
    %v3078 = vpack.c.b16 %v1928, %v1923
    %v3079 = vpack.c.b16 %v1929, %v1924
    %v3080 = vpack.c.b16 %v1930, %v1925
    %v3081 = vpack.c.b16 %v1931, %v1926
    %v3082 = vpack.c.b16 %v1937, %v1932
    %v3083 = vpack.c.b16 %v1938, %v1933
    %v3084 = vpack.c.b16 %v1939, %v1934
    %v3085 = vpack.c.b16 %v1940, %v1935
    %v3086 = vpack.c.b16 %v1941, %v1936
    %v3087 = vpack.c.b16 %v1947, %v1942
    %v3088 = vpack.c.b16 %v1948, %v1943
    %v3089 = vpack.c.b16 %v1949, %v1944
    %v3090 = vpack.c.b16 %v1950, %v1945
    %v3091 = vpack.c.b16 %v1951, %v1946
    %v3092 = vpack.c.b16 %v1957, %v1952
    %v3093 = vpack.c.b16 %v1958, %v1953
    %v3094 = vpack.c.b16 %v1959, %v1954
    %v3095 = vpack.c.b16 %v1960, %v1955
    %v3096 = vpack.c.b16 %v1961, %v1956
    %v3097 = vpack.c.b16 %v1967, %v1962
    %v3098 = vpack.c.b16 %v1968, %v1963
    %v3099 = vpack.c.b16 %v1969, %v1964
    %v3100 = vpack.c.b16 %v1970, %v1965
    %v3101 = vpack.c.b16 %v1971, %v1966
    %v3102 = vpack.c.b16 %v1977, %v1972
    %v3103 = vpack.c.b16 %v1978, %v1973
    %v3104 = vpack.c.b16 %v1979, %v1974
    %v3105 = vpack.c.b16 %v1980, %v1975
    %v3106 = vpack.c.b16 %v1981, %v1976
    %v3107 = vpack.c.b16 %v1987, %v1982
    %v3108 = vpack.c.b16 %v1988, %v1983
    %v3109 = vpack.c.b16 %v1989, %v1984
    %v3110 = vpack.c.b16 %v1990, %v1985
    %v3111 = vpack.c.b16 %v1991, %v1986
    %v3112 = vpack.c.b16 %v1997, %v1992
    %v3113 = vpack.c.b16 %v1998, %v1993
    %v3114 = vpack.c.b16 %v1999, %v1994
    %v3115 = vpack.c.b16 %v2000, %v1995
    %v3116 = vpack.c.b16 %v2001, %v1996
    %v3117 = vpack.c.b16 %v2007, %v2002
    %v3118 = vpack.c.b16 %v2008, %v2003
    %v3119 = vpack.c.b16 %v2009, %v2004
    %v3120 = vpack.c.b16 %v2010, %v2005
    %v3121 = vpack.c.b16 %v2011, %v2006
    %v3122 = vpack.c.b16 %v2017, %v2012
    %v3123 = vpack.c.b16 %v2018, %v2013
    %v3124 = vpack.c.b16 %v2019, %v2014
    %v3125 = vpack.c.b16 %v2020, %v2015
    %v3126 = vpack.c.b16 %v2021, %v2016
    %v3127 = vpack.c.b16 %v2027, %v2022
    %v3128 = vpack.c.b16 %v2028, %v2023
    %v3129 = vpack.c.b16 %v2029, %v2024
    %v3130 = vpack.c.b16 %v2030, %v2025
    %v3131 = vpack.c.b16 %v2031, %v2026
    %v3132 = vpack.c.b16 %v2037, %v2032
    %v3133 = vpack.c.b16 %v2038, %v2033
    %v3134 = vpack.c.b16 %v2039, %v2034
    %v3135 = vpack.c.b16 %v2040, %v2035
    %v3136 = vpack.c.b16 %v2041, %v2036
    %v3137 = vpack.c.b16 %v2047, %v2042
    %v3138 = vpack.c.b16 %v2048, %v2043
    %v3139 = vpack.c.b16 %v2049, %v2044
    %v3140 = vpack.c.b16 %v2050, %v2045
    %v3141 = vpack.c.b16 %v2051, %v2046
    %v3142 = vpack.c.b16 %v2057, %v2052
    %v3143 = vpack.c.b16 %v2058, %v2053
    %v3144 = vpack.c.b16 %v2059, %v2054
    %v3145 = vpack.c.b16 %v2060, %v2055
    %v3146 = vpack.c.b16 %v2061, %v2056
    %v3147 = vpack.c.b16 %v2067, %v2062
    %v3148 = vpack.c.b16 %v2068, %v2063
    %v3149 = vpack.c.b16 %v2069, %v2064
    %v3150 = vpack.c.b16 %v2070, %v2065
    %v3151 = vpack.c.b16 %v2071, %v2066
    %v3152 = vpack.c.b16 %v2077, %v2072
    %v3153 = vpack.c.b16 %v2078, %v2073
    %v3154 = vpack.c.b16 %v2079, %v2074
    %v3155 = vpack.c.b16 %v2080, %v2075
    %v3156 = vpack.c.b16 %v2081, %v2076
    %v3157 = vpack.c.b16 %v2087, %v2082
    %v3158 = vpack.c.b16 %v2088, %v2083
    %v3159 = vpack.c.b16 %v2089, %v2084
    %v3160 = vpack.c.b16 %v2090, %v2085
    %v3161 = vpack.c.b16 %v2091, %v2086
    %v3162 = vpack.c.b16 %v2097, %v2092
    %v3163 = vpack.c.b16 %v2098, %v2093
    %v3164 = vpack.c.b16 %v2099, %v2094
    %v3165 = vpack.c.b16 %v2100, %v2095
    %v3166 = vpack.c.b16 %v2101, %v2096
    %v3167 = vpack.c.b16 %v2107, %v2102
    %v3168 = vpack.c.b16 %v2108, %v2103
    %v3169 = vpack.c.b16 %v2109, %v2104
    %v3170 = vpack.c.b16 %v2110, %v2105
    %v3171 = vpack.c.b16 %v2111, %v2106
    %v3172 = vpack.c.b16 %v2117, %v2112
    %v3173 = vpack.c.b16 %v2118, %v2113
    %v3174 = vpack.c.b16 %v2119, %v2114
    %v3175 = vpack.c.b16 %v2120, %v2115
    %v3176 = vpack.c.b16 %v2121, %v2116
    %v3177 = vpack.c.b16 %v2127, %v2122
    %v3178 = vpack.c.b16 %v2128, %v2123
    %v3179 = vpack.c.b16 %v2129, %v2124
    %v3180 = vpack.c.b16 %v2130, %v2125
    %v3181 = vpack.c.b16 %v2131, %v2126
    %v3182 = vpack.c.b16 %v2137, %v2132
    %v3183 = vpack.c.b16 %v2138, %v2133
    %v3184 = vpack.c.b16 %v2139, %v2134
    %v3185 = vpack.c.b16 %v2140, %v2135
    %v3186 = vpack.c.b16 %v2141, %v2136
    %v3187 = vpack.c.b16 %v2147, %v2142
    %v3188 = vpack.c.b16 %v2148, %v2143
    %v3189 = vpack.c.b16 %v2149, %v2144
    %v3190 = vpack.c.b16 %v2150, %v2145
    %v3191 = vpack.c.b16 %v2151, %v2146
    %v3192 = vpack.c.b16 %v2157, %v2152
    %v3193 = vpack.c.b16 %v2158, %v2153
    %v3194 = vpack.c.b16 %v2159, %v2154
    %v3195 = vpack.c.b16 %v2160, %v2155
    %v3196 = vpack.c.b16 %v2161, %v2156
    %v3197 = vpack.c.b16 %v2167, %v2162
    %v3198 = vpack.c.b16 %v2168, %v2163
    %v3199 = vpack.c.b16 %v2169, %v2164
    %v3200 = vpack.c.b16 %v2170, %v2165
    %v3201 = vpack.c.b16 %v2171, %v2166
    %v3202 = vpack.c.b16 %v2177, %v2172
    %v3203 = vpack.c.b16 %v2178, %v2173
    %v3204 = vpack.c.b16 %v2179, %v2174
    %v3205 = vpack.c.b16 %v2180, %v2175
    %v3206 = vpack.c.b16 %v2181, %v2176
    %v3207 = vpack.c.b16 %v2187, %v2182
    %v3208 = vpack.c.b16 %v2188, %v2183
    %v3209 = vpack.c.b16 %v2189, %v2184
    %v3210 = vpack.c.b16 %v2190, %v2185
    %v3211 = vpack.c.b16 %v2191, %v2186
    %v3212 = vpack.c.b16 %v2197, %v2192
    %v3213 = vpack.c.b16 %v2198, %v2193
    %v3214 = vpack.c.b16 %v2199, %v2194
    %v3215 = vpack.c.b16 %v2200, %v2195
    %v3216 = vpack.c.b16 %v2201, %v2196
    %v3217 = vpack.c.b16 %v2207, %v2202
    %v3218 = vpack.c.b16 %v2208, %v2203
    %v3219 = vpack.c.b16 %v2209, %v2204
    %v3220 = vpack.c.b16 %v2210, %v2205
    %v3221 = vpack.c.b16 %v2211, %v2206
    %v3222 = vpack.c.b16 %v2217, %v2212
    %v3223 = vpack.c.b16 %v2218, %v2213
    %v3224 = vpack.c.b16 %v2219, %v2214
    %v3225 = vpack.c.b16 %v2220, %v2215
    %v3226 = vpack.c.b16 %v2221, %v2216
    %v3227 = vpack.c.b16 %v2227, %v2222
    %v3228 = vpack.c.b16 %v2228, %v2223
    %v3229 = vpack.c.b16 %v2229, %v2224
    %v3230 = vpack.c.b16 %v2230, %v2225
    %v3231 = vpack.c.b16 %v2231, %v2226
    %v3232 = vpack.c.b16 %v2237, %v2232
    %v3233 = vpack.c.b16 %v2238, %v2233
    %v3234 = vpack.c.b16 %v2239, %v2234
    %v3235 = vpack.c.b16 %v2240, %v2235
    %v3236 = vpack.c.b16 %v2241, %v2236
    %v3237 = vpack.c.b16 %v2247, %v2242
    %v3238 = vpack.c.b16 %v2248, %v2243
    %v3239 = vpack.c.b16 %v2249, %v2244
    %v3240 = vpack.c.b16 %v2250, %v2245
    %v3241 = vpack.c.b16 %v2251, %v2246
    %v3242 = vpack.c.b16 %v2257, %v2252
    %v3243 = vpack.c.b16 %v2258, %v2253
    %v3244 = vpack.c.b16 %v2259, %v2254
    %v3245 = vpack.c.b16 %v2260, %v2255
    %v3246 = vpack.c.b16 %v2261, %v2256
    %v3247 = vpack.c.b16 %v2267, %v2262
    %v3248 = vpack.c.b16 %v2268, %v2263
    %v3249 = vpack.c.b16 %v2269, %v2264
    %v3250 = vpack.c.b16 %v2270, %v2265
    %v3251 = vpack.c.b16 %v2271, %v2266
    %v3252 = vpack.c.b16 %v2277, %v2272
    %v3253 = vpack.c.b16 %v2278, %v2273
    %v3254 = vpack.c.b16 %v2279, %v2274
    %v3255 = vpack.c.b16 %v2280, %v2275
    %v3256 = vpack.c.b16 %v2281, %v2276
    %v3257 = vpack.c.b16 %v2287, %v2282
    %v3258 = vpack.c.b16 %v2288, %v2283
    %v3259 = vpack.c.b16 %v2289, %v2284
    %v3260 = vpack.c.b16 %v2290, %v2285
    %v3261 = vpack.c.b16 %v2291, %v2286
    %v3262 = vpack.c.b16 %v2297, %v2292
    %v3263 = vpack.c.b16 %v2298, %v2293
    %v3264 = vpack.c.b16 %v2299, %v2294
    %v3265 = vpack.c.b16 %v2300, %v2295
    %v3266 = vpack.c.b16 %v2301, %v2296
    %v3267 = vpack.c.b16 %v2307, %v2302
    %v3268 = vpack.c.b16 %v2308, %v2303
    %v3269 = vpack.c.b16 %v2309, %v2304
    %v3270 = vpack.c.b16 %v2310, %v2305
    %v3271 = vpack.c.b16 %v2311, %v2306
    %v3272 = vpack.c.b16 %v2317, %v2312
    %v3273 = vpack.c.b16 %v2318, %v2313
    %v3274 = vpack.c.b16 %v2319, %v2314
    %v3275 = vpack.c.b16 %v2320, %v2315
    %v3276 = vpack.c.b16 %v2321, %v2316
    %v3277 = vpack.c.b16 %v2327, %v2322
    %v3278 = vpack.c.b16 %v2328, %v2323
    %v3279 = vpack.c.b16 %v2329, %v2324
    %v3280 = vpack.c.b16 %v2330, %v2325
    %v3281 = vpack.c.b16 %v2331, %v2326
    %v3282 = vpack.c.b16 %v2337, %v2332
    %v3283 = vpack.c.b16 %v2338, %v2333
    %v3284 = vpack.c.b16 %v2339, %v2334
    %v3285 = vpack.c.b16 %v2340, %v2335
    %v3286 = vpack.c.b16 %v2341, %v2336
    %v3287 = vpack.c.b16 %v2347, %v2342
    %v3288 = vpack.c.b16 %v2348, %v2343
    %v3289 = vpack.c.b16 %v2349, %v2344
    %v3290 = vpack.c.b16 %v2350, %v2345
    %v3291 = vpack.c.b16 %v2351, %v2346
    %v3292 = vpack.c.b16 %v2357, %v2352
    %v3293 = vpack.c.b16 %v2358, %v2353
    %v3294 = vpack.c.b16 %v2359, %v2354
    %v3295 = vpack.c.b16 %v2360, %v2355
    %v3296 = vpack.c.b16 %v2361, %v2356
    %v3297 = vpack.c.b16 %v2367, %v2362
    %v3298 = vpack.c.b16 %v2368, %v2363
    %v3299 = vpack.c.b16 %v2369, %v2364
    %v3300 = vpack.c.b16 %v2370, %v2365
    %v3301 = vpack.c.b16 %v2371, %v2366
    %v3302 = vpack.c.b16 %v2377, %v2372
    %v3303 = vpack.c.b16 %v2378, %v2373
    %v3304 = vpack.c.b16 %v2379, %v2374
    %v3305 = vpack.c.b16 %v2380, %v2375
    %v3306 = vpack.c.b16 %v2381, %v2376
    %v3307 = vpack.c.b16 %v2387, %v2382
    %v3308 = vpack.c.b16 %v2388, %v2383
    %v3309 = vpack.c.b16 %v2389, %v2384
    %v3310 = vpack.c.b16 %v2390, %v2385
    %v3311 = vpack.c.b16 %v2391, %v2386
    %v3312 = vpack.c.b16 %v2397, %v2392
    %v3313 = vpack.c.b16 %v2398, %v2393
    %v3314 = vpack.c.b16 %v2399, %v2394
    %v3315 = vpack.c.b16 %v2400, %v2395
    %v3316 = vpack.c.b16 %v2401, %v2396
    %v3317 = vpack.c.b16 %v2407, %v2402
    %v3318 = vpack.c.b16 %v2408, %v2403
    %v3319 = vpack.c.b16 %v2409, %v2404
    %v3320 = vpack.c.b16 %v2410, %v2405
    %v3321 = vpack.c.b16 %v2411, %v2406
    %v3322 = vpack.c.b16 %v2417, %v2412
    %v3323 = vpack.c.b16 %v2418, %v2413
    %v3324 = vpack.c.b16 %v2419, %v2414
    %v3325 = vpack.c.b16 %v2420, %v2415
    %v3326 = vpack.c.b16 %v2421, %v2416
    %v3327 = vpack.c.b16 %v2427, %v2422
    %v3328 = vpack.c.b16 %v2428, %v2423
    %v3329 = vpack.c.b16 %v2429, %v2424
    %v3330 = vpack.c.b16 %v2430, %v2425
    %v3331 = vpack.c.b16 %v2431, %v2426
    %v3332 = vpack.c.b16 %v2437, %v2432
    %v3333 = vpack.c.b16 %v2438, %v2433
    %v3334 = vpack.c.b16 %v2439, %v2434
    %v3335 = vpack.c.b16 %v2440, %v2435
    %v3336 = vpack.c.b16 %v2441, %v2436
    %v3337 = vpack.c.b16 %v2447, %v2442
    %v3338 = vpack.c.b16 %v2448, %v2443
    %v3339 = vpack.c.b16 %v2449, %v2444
    %v3340 = vpack.c.b16 %v2450, %v2445
    %v3341 = vpack.c.b16 %v2451, %v2446
    %v3342 = vpack.c.b16 %v2457, %v2452
    %v3343 = vpack.c.b16 %v2458, %v2453
    %v3344 = vpack.c.b16 %v2459, %v2454
    %v3345 = vpack.c.b16 %v2460, %v2455
    %v3346 = vpack.c.b16 %v2461, %v2456
    %v3347 = vpack.c.b16 %v2467, %v2462
    %v3348 = vpack.c.b16 %v2468, %v2463
    %v3349 = vpack.c.b16 %v2469, %v2464
    %v3350 = vpack.c.b16 %v2470, %v2465
    %v3351 = vpack.c.b16 %v2471, %v2466
    %v3352 = vpack.c.b16 %v2477, %v2472
    %v3353 = vpack.c.b16 %v2478, %v2473
    %v3354 = vpack.c.b16 %v2479, %v2474
    %v3355 = vpack.c.b16 %v2480, %v2475
    %v3356 = vpack.c.b16 %v2481, %v2476
    %v3357 = vpack.c.b16 %v2487, %v2482
    %v3358 = vpack.c.b16 %v2488, %v2483
    %v3359 = vpack.c.b16 %v2489, %v2484
    %v3360 = vpack.c.b16 %v2490, %v2485
    %v3361 = vpack.c.b16 %v2491, %v2486
    %v3362 = vpack.c.b16 %v2497, %v2492
    %v3363 = vpack.c.b16 %v2498, %v2493
    %v3364 = vpack.c.b16 %v2499, %v2494
    %v3365 = vpack.c.b16 %v2500, %v2495
    %v3366 = vpack.c.b16 %v2501, %v2496
    %v3367 = vpack.c.b16 %v2507, %v2502
    %v3368 = vpack.c.b16 %v2508, %v2503
    %v3369 = vpack.c.b16 %v2509, %v2504
    %v3370 = vpack.c.b16 %v2510, %v2505
    %v3371 = vpack.c.b16 %v2511, %v2506
    %v3372 = vpack.c.b16 %v2517, %v2512
    %v3373 = vpack.c.b16 %v2518, %v2513
    %v3374 = vpack.c.b16 %v2519, %v2514
    %v3375 = vpack.c.b16 %v2520, %v2515
    %v3376 = vpack.c.b16 %v2521, %v2516
    %v3377 = vpack.c.b16 %v2527, %v2522
    %v3378 = vpack.c.b16 %v2528, %v2523
    %v3379 = vpack.c.b16 %v2529, %v2524
    %v3380 = vpack.c.b16 %v2530, %v2525
    %v3381 = vpack.c.b16 %v2531, %v2526
    %v3382 = vpack.c.b16 %v2537, %v2532
    %v3383 = vpack.c.b16 %v2538, %v2533
    %v3384 = vpack.c.b16 %v2539, %v2534
    %v3385 = vpack.c.b16 %v2540, %v2535
    %v3386 = vpack.c.b16 %v2541, %v2536
    %v3387 = vpack.c.b16 %v2547, %v2542
    %v3388 = vpack.c.b16 %v2548, %v2543
    %v3389 = vpack.c.b16 %v2549, %v2544
    %v3390 = vpack.c.b16 %v2550, %v2545
    %v3391 = vpack.c.b16 %v2551, %v2546
    %v3392 = vpack.c.b16 %v2557, %v2552
    %v3393 = vpack.c.b16 %v2558, %v2553
    %v3394 = vpack.c.b16 %v2559, %v2554
    %v3395 = vpack.c.b16 %v2560, %v2555
    %v3396 = vpack.c.b16 %v2561, %v2556
    %v3397 = vpack.c.b16 %v2567, %v2562
    %v3398 = vpack.c.b16 %v2568, %v2563
    %v3399 = vpack.c.b16 %v2569, %v2564
    %v3400 = vpack.c.b16 %v2570, %v2565
    %v3401 = vpack.c.b16 %v2571, %v2566
    %v3402 = vpack.c.b16 %v2577, %v2572
    %v3403 = vpack.c.b16 %v2578, %v2573
    %v3404 = vpack.c.b16 %v2579, %v2574
    %v3405 = vpack.c.b16 %v2580, %v2575
    %v3406 = vpack.c.b16 %v2581, %v2576
    %v3407 = vpack.c.b16 %v2587, %v2582
    %v3408 = vpack.c.b16 %v2588, %v2583
    %v3409 = vpack.c.b16 %v2589, %v2584
    %v3410 = vpack.c.b16 %v2590, %v2585
    %v3411 = vpack.c.b16 %v2591, %v2586
    %v3412 = vpack.c.b16 %v2597, %v2592
    %v3413 = vpack.c.b16 %v2598, %v2593
    %v3414 = vpack.c.b16 %v2599, %v2594
    %v3415 = vpack.c.b16 %v2600, %v2595
    %v3416 = vpack.c.b16 %v2601, %v2596
    %v3417 = vpack.c.b16 %v2607, %v2602
    %v3418 = vpack.c.b16 %v2608, %v2603
    %v3419 = vpack.c.b16 %v2609, %v2604
    %v3420 = vpack.c.b16 %v2610, %v2605
    %v3421 = vpack.c.b16 %v2611, %v2606
    %v3422 = vpack.c.b16 %v2617, %v2612
    %v3423 = vpack.c.b16 %v2618, %v2613
    %v3424 = vpack.c.b16 %v2619, %v2614
    %v3425 = vpack.c.b16 %v2620, %v2615
    %v3426 = vpack.c.b16 %v2621, %v2616
    %v3427 = vpack.c.b16 %v2627, %v2622
    %v3428 = vpack.c.b16 %v2628, %v2623
    %v3429 = vpack.c.b16 %v2629, %v2624
    %v3430 = vpack.c.b16 %v2630, %v2625
    %v3431 = vpack.c.b16 %v2631, %v2626
    %v3432 = vpack.c.b16 %v2637, %v2632
    %v3433 = vpack.c.b16 %v2638, %v2633
    %v3434 = vpack.c.b16 %v2639, %v2634
    %v3435 = vpack.c.b16 %v2640, %v2635
    %v3436 = vpack.c.b16 %v2641, %v2636
    %v3437 = vpack.c.b16 %v2647, %v2642
    %v3438 = vpack.c.b16 %v2648, %v2643
    %v3439 = vpack.c.b16 %v2649, %v2644
    %v3440 = vpack.c.b16 %v2650, %v2645
    %v3441 = vpack.c.b16 %v2651, %v2646
    %v3442 = vpack.c.b16 %v2657, %v2652
    %v3443 = vpack.c.b16 %v2658, %v2653
    %v3444 = vpack.c.b16 %v2659, %v2654
    %v3445 = vpack.c.b16 %v2660, %v2655
    %v3446 = vpack.c.b16 %v2661, %v2656
    %v3447 = vpack.c.b16 %v2667, %v2662
    %v3448 = vpack.c.b16 %v2668, %v2663
    %v3449 = vpack.c.b16 %v2669, %v2664
    %v3450 = vpack.c.b16 %v2670, %v2665
    %v3451 = vpack.c.b16 %v2671, %v2666
    %v3452 = vpack.c.b16 %v2677, %v2672
    %v3453 = vpack.c.b16 %v2678, %v2673
    %v3454 = vpack.c.b16 %v2679, %v2674
    %v3455 = vpack.c.b16 %v2680, %v2675
    %v3456 = vpack.c.b16 %v2681, %v2676
    %v3457 = vpack.c.b16 %v2687, %v2682
    %v3458 = vpack.c.b16 %v2688, %v2683
    %v3459 = vpack.c.b16 %v2689, %v2684
    %v3460 = vpack.c.b16 %v2690, %v2685
    %v3461 = vpack.c.b16 %v2691, %v2686
    %v3462 = vpack.c.b16 %v2697, %v2692
    %v3463 = vpack.c.b16 %v2698, %v2693
    %v3464 = vpack.c.b16 %v2699, %v2694
    %v3465 = vpack.c.b16 %v2700, %v2695
    %v3466 = vpack.c.b16 %v2701, %v2696
    %v3467 = vpack.c.b16 %v2707, %v2702
    %v3468 = vpack.c.b16 %v2708, %v2703
    %v3469 = vpack.c.b16 %v2709, %v2704
    %v3470 = vpack.c.b16 %v2710, %v2705
    %v3471 = vpack.c.b16 %v2711, %v2706
    %v3472 = vpack.c.b16 %v2717, %v2712
    %v3473 = vpack.c.b16 %v2718, %v2713
    %v3474 = vpack.c.b16 %v2719, %v2714
    %v3475 = vpack.c.b16 %v2720, %v2715
    %v3476 = vpack.c.b16 %v2721, %v2716
    %v3477 = vpack.c.b16 %v2727, %v2722
    %v3478 = vpack.c.b16 %v2728, %v2723
    %v3479 = vpack.c.b16 %v2729, %v2724
    %v3480 = vpack.c.b16 %v2730, %v2725
    %v3481 = vpack.c.b16 %v2731, %v2726
    %v3482 = vpack.c.b16 %v2737, %v2732
    %v3483 = vpack.c.b16 %v2738, %v2733
    %v3484 = vpack.c.b16 %v2739, %v2734
    %v3485 = vpack.c.b16 %v2740, %v2735
    %v3486 = vpack.c.b16 %v2741, %v2736
    %v3487 = vpack.c.b16 %v2747, %v2742
    %v3488 = vpack.c.b16 %v2748, %v2743
    %v3489 = vpack.c.b16 %v2749, %v2744
    %v3490 = vpack.c.b16 %v2750, %v2745
    %v3491 = vpack.c.b16 %v2751, %v2746
    %v3492 = vpack.c.b16 %v2757, %v2752
    %v3493 = vpack.c.b16 %v2758, %v2753
    %v3494 = vpack.c.b16 %v2759, %v2754
    %v3495 = vpack.c.b16 %v2760, %v2755
    %v3496 = vpack.c.b16 %v2761, %v2756
    %v3497 = vpack.c.b16 %v2767, %v2762
    %v3498 = vpack.c.b16 %v2768, %v2763
    %v3499 = vpack.c.b16 %v2769, %v2764
    %v3500 = vpack.c.b16 %v2770, %v2765
    %v3501 = vpack.c.b16 %v2771, %v2766
    %v3502 = vpack.c.b16 %v2777, %v2772
    %v3503 = vpack.c.b16 %v2778, %v2773
    %v3504 = vpack.c.b16 %v2779, %v2774
    %v3505 = vpack.c.b16 %v2780, %v2775
    %v3506 = vpack.c.b16 %v2781, %v2776
    %v3507 = vpack.c.b16 %v2787, %v2782
    %v3508 = vpack.c.b16 %v2788, %v2783
    %v3509 = vpack.c.b16 %v2789, %v2784
    %v3510 = vpack.c.b16 %v2790, %v2785
    %v3511 = vpack.c.b16 %v2791, %v2786
    %v3512 = vpack.c.b16 %v2797, %v2792
    %v3513 = vpack.c.b16 %v2798, %v2793
    %v3514 = vpack.c.b16 %v2799, %v2794
    %v3515 = vpack.c.b16 %v2800, %v2795
    %v3516 = vpack.c.b16 %v2801, %v2796
    %v3517 = vpack.c.b16 %v2807, %v2802
    %v3518 = vpack.c.b16 %v2808, %v2803
    %v3519 = vpack.c.b16 %v2809, %v2804
    %v3520 = vpack.c.b16 %v2810, %v2805
    %v3521 = vpack.c.b16 %v2811, %v2806
    %v3522 = vpack.c.b16 %v2817, %v2812
    %v3523 = vpack.c.b16 %v2818, %v2813
    %v3524 = vpack.c.b16 %v2819, %v2814
    %v3525 = vpack.c.b16 %v2820, %v2815
    %v3526 = vpack.c.b16 %v2821, %v2816
    %v3527 = vpack.c.b16 %v2827, %v2822
    %v3528 = vpack.c.b16 %v2828, %v2823
    %v3529 = vpack.c.b16 %v2829, %v2824
    %v3530 = vpack.c.b16 %v2830, %v2825
    %v3531 = vpack.c.b16 %v2831, %v2826
    %v3532 = vpack.c.b16 %v2837, %v2832
    %v3533 = vpack.c.b16 %v2838, %v2833
    %v3534 = vpack.c.b16 %v2839, %v2834
    %v3535 = vpack.c.b16 %v2840, %v2835
    %v3536 = vpack.c.b16 %v2841, %v2836
    %v3537 = vpack.c.b16 %v2847, %v2842
    %v3538 = vpack.c.b16 %v2848, %v2843
    %v3539 = vpack.c.b16 %v2849, %v2844
    %v3540 = vpack.c.b16 %v2850, %v2845
    %v3541 = vpack.c.b16 %v2851, %v2846
    %v3542 = vpack.c.b16 %v2857, %v2852
    %v3543 = vpack.c.b16 %v2858, %v2853
    %v3544 = vpack.c.b16 %v2859, %v2854
    %v3545 = vpack.c.b16 %v2860, %v2855
    %v3546 = vpack.c.b16 %v2861, %v2856
    %v3547 = vpack.c.b16 %v2867, %v2862
    %v3548 = vpack.c.b16 %v2868, %v2863
    %v3549 = vpack.c.b16 %v2869, %v2864
    %v3550 = vpack.c.b16 %v2870, %v2865
    %v3551 = vpack.c.b16 %v2871, %v2866
    %v3552 = vpack.c.b16 %v2877, %v2872
    %v3553 = vpack.c.b16 %v2878, %v2873
    %v3554 = vpack.c.b16 %v2879, %v2874
    %v3555 = vpack.c.b16 %v2880, %v2875
    %v3556 = vpack.c.b16 %v2881, %v2876
    %v3557 = vpack.c.b16 %v2887, %v2882
    %v3558 = vpack.c.b16 %v2888, %v2883
    %v3559 = vpack.c.b16 %v2889, %v2884
    %v3560 = vpack.c.b16 %v2890, %v2885
    %v3561 = vpack.c.b16 %v2891, %v2886
    %v3562 = vpack.c.b16 %v2897, %v2892
    %v3563 = vpack.c.b16 %v2898, %v2893
    %v3564 = vpack.c.b16 %v2899, %v2894
    %v3565 = vpack.c.b16 %v2900, %v2895
    %v3566 = vpack.c.b16 %v2901, %v2896
    %v3567 = vpack.c.b16 %v2907, %v2902
    %v3568 = vpack.c.b16 %v2908, %v2903
    %v3569 = vpack.c.b16 %v2909, %v2904
    %v3570 = vpack.c.b16 %v2910, %v2905
    %v3571 = vpack.c.b16 %v2911, %v2906
    %v3572 = vpack.c.b16 %v2917, %v2912
    %v3573 = vpack.c.b16 %v2918, %v2913
    %v3574 = vpack.c.b16 %v2919, %v2914
    %v3575 = vpack.c.b16 %v2920, %v2915
    %v3576 = vpack.c.b16 %v2921, %v2916
    %v3577 = vpack.c.b16 %v2927, %v2922
    %v3578 = vpack.c.b16 %v2928, %v2923
    %v3579 = vpack.c.b16 %v2929, %v2924
    %v3580 = vpack.c.b16 %v2930, %v2925
    %v3581 = vpack.c.b16 %v2931, %v2926
    %v3582 = vpack.c.b16 %v2937, %v2932
    %v3583 = vpack.c.b16 %v2938, %v2933
    %v3584 = vpack.c.b16 %v2939, %v2934
    %v3585 = vpack.c.b16 %v2940, %v2935
    %v3586 = vpack.c.b16 %v2941, %v2936
    %v3587 = vpack.c.b16 %v2947, %v2942
    %v3588 = vpack.c.b16 %v2948, %v2943
    %v3589 = vpack.c.b16 %v2949, %v2944
    %v3590 = vpack.c.b16 %v2950, %v2945
    %v3591 = vpack.c.b16 %v2951, %v2946
    %4232 = vmatprep.subr.bf16.mxu0 %v2953
    %4233 = vmatpush1.bf16.msra.mxu0 %v2952
    %4234 = vmatprep.subr.bf16.mxu0 %v2958
    %4235 = vmatpush1.bf16.msra.mxu0 %v2957
    %4236 = vmatprep.subr.bf16.mxu0 %v2963
    %4237 = vmatpush1.bf16.msra.mxu0 %v2962
    %4238 = vmatprep.subr.bf16.mxu0 %v2968
    %4239 = vmatpush1.bf16.msra.mxu0 %v2967
    %4240 = vmatprep.subr.bf16.mxu0 %v2973
    %4241 = vmatpush1.bf16.msra.mxu0 %v2972
    %4242 = vmatprep.subr.bf16.mxu0 %v2978
    %4243 = vmatpush1.bf16.msra.mxu0 %v2977
    %4244 = vmatprep.subr.bf16.mxu0 %v2983
    %4245 = vmatpush1.bf16.msra.mxu0 %v2982
    %4246 = vmatprep.subr.bf16.mxu0 %v2988
    %4247 = vmatpush1.bf16.msra.mxu0 %v2987
    %4248 = vmatprep.subr.bf16.mxu0 %v2993
    %4249 = vmatpush1.bf16.msra.mxu0 %v2992
    %4250 = vmatprep.subr.bf16.mxu0 %v2998
    %4251 = vmatpush1.bf16.msra.mxu0 %v2997
    %4252 = vmatprep.subr.bf16.mxu0 %v3003
    %4253 = vmatpush1.bf16.msra.mxu0 %v3002
    %4254 = vmatprep.subr.bf16.mxu0 %v3008
    %4255 = vmatpush1.bf16.msra.mxu0 %v3007
    %4256 = vmatprep.subr.bf16.mxu0 %v3013
    %4257 = vmatpush1.bf16.msra.mxu0 %v3012
    %4258 = vmatprep.subr.bf16.mxu0 %v3018
    %4259 = vmatpush1.bf16.msra.mxu0 %v3017
    %4260 = vmatprep.subr.bf16.mxu0 %v3023
    %4261 = vmatpush1.bf16.msra.mxu0 %v3022
    %4262 = vmatprep.subr.bf16.mxu0 %v3028
    %4263 = vmatpush1.bf16.msra.mxu0 %v3027
    %4264 = vmatprep.mubr.bf16.mxu0 %v121
    %4265 = vmatmul.mubr.bf16.gmra.mrb[0].mxu0 %v120
    %v4266 = vpop.f32.mrb[0].mxu0
    %v4267 = vadd.f32 0.0, %v4266
    %v4268 = vpop.f32.mrb[0].mxu0
    %v4269 = vadd.f32 0.0, %v4268
    %v4270 = vpop.f32.mrb[0].mxu0
    %v4271 = vpop.f32.mrb[0].mxu0
    %4272 = vdwg.mxu0
    %4273 = vmatprep.subr.bf16.mxu0 %v3033
    %4274 = vmatpush1.bf16.msra.mxu0 %v3032
    %4275 = vmatprep.subr.bf16.mxu0 %v3038
    %4276 = vmatpush1.bf16.msra.mxu0 %v3037
    %4277 = vmatprep.subr.bf16.mxu0 %v3043
    %4278 = vmatpush1.bf16.msra.mxu0 %v3042
    %4279 = vmatprep.subr.bf16.mxu0 %v3048
    %4280 = vmatpush1.bf16.msra.mxu0 %v3047
    %4281 = vmatprep.subr.bf16.mxu0 %v3053
    %4282 = vmatpush1.bf16.msra.mxu0 %v3052
    %4283 = vmatprep.subr.bf16.mxu0 %v3058
    %4284 = vmatpush1.bf16.msra.mxu0 %v3057
    %4285 = vmatprep.subr.bf16.mxu0 %v3063
    %4286 = vmatpush1.bf16.msra.mxu0 %v3062
    %4287 = vmatprep.subr.bf16.mxu0 %v3068
    %4288 = vmatpush1.bf16.msra.mxu0 %v3067
    %4289 = vmatprep.subr.bf16.mxu0 %v3073
    %4290 = vmatpush1.bf16.msra.mxu0 %v3072
    %4291 = vmatprep.subr.bf16.mxu0 %v3078
    %4292 = vmatpush1.bf16.msra.mxu0 %v3077
    %4293 = vmatprep.subr.bf16.mxu0 %v3083
    %4294 = vmatpush1.bf16.msra.mxu0 %v3082
    %4295 = vmatprep.subr.bf16.mxu0 %v3088
    %4296 = vmatpush1.bf16.msra.mxu0 %v3087
    %4297 = vmatprep.subr.bf16.mxu0 %v3093
    %4298 = vmatpush1.bf16.msra.mxu0 %v3092
    %4299 = vmatprep.subr.bf16.mxu0 %v3098
    %4300 = vmatpush1.bf16.msra.mxu0 %v3097
    %4301 = vmatprep.subr.bf16.mxu0 %v3103
    %4302 = vmatpush1.bf16.msra.mxu0 %v3102
    %4303 = vmatprep.subr.bf16.mxu0 %v3108
    %4304 = vmatpush1.bf16.msra.mxu0 %v3107
    %4305 = vmatprep.mubr.bf16.mxu0 %v123
    %4306 = vmatmul.mubr.bf16.gmra.mrb[0].mxu0 %v122
    %v4307 = vpop.f32.mrb[0].mxu0
    %v4308 = vadd.f32 %v4267, %v4307
    %v4309 = vpop.f32.mrb[0].mxu0
    %v4310 = vadd.f32 %v4269, %v4309
    %v4311 = vpop.f32.mrb[0].mxu0
    %v4312 = vpop.f32.mrb[0].mxu0
    %4313 = vdwg.mxu0
    %4314 = vmatprep.subr.bf16.mxu0 %v3113
    %4315 = vmatpush1.bf16.msra.mxu0 %v3112
    %4316 = vmatprep.subr.bf16.mxu0 %v3118
    %4317 = vmatpush1.bf16.msra.mxu0 %v3117
    %4318 = vmatprep.subr.bf16.mxu0 %v3123
    %4319 = vmatpush1.bf16.msra.mxu0 %v3122
    %4320 = vmatprep.subr.bf16.mxu0 %v3128
    %4321 = vmatpush1.bf16.msra.mxu0 %v3127
    %4322 = vmatprep.subr.bf16.mxu0 %v3133
    %4323 = vmatpush1.bf16.msra.mxu0 %v3132
    %4324 = vmatprep.subr.bf16.mxu0 %v3138
    %4325 = vmatpush1.bf16.msra.mxu0 %v3137
    %4326 = vmatprep.subr.bf16.mxu0 %v3143
    %4327 = vmatpush1.bf16.msra.mxu0 %v3142
    %4328 = vmatprep.subr.bf16.mxu0 %v3148
    %4329 = vmatpush1.bf16.msra.mxu0 %v3147
    %4330 = vmatprep.subr.bf16.mxu0 %v3153
    %4331 = vmatpush1.bf16.msra.mxu0 %v3152
    %4332 = vmatprep.subr.bf16.mxu0 %v3158
    %4333 = vmatpush1.bf16.msra.mxu0 %v3157
    %4334 = vmatprep.subr.bf16.mxu0 %v3163
    %4335 = vmatpush1.bf16.msra.mxu0 %v3162
    %4336 = vmatprep.subr.bf16.mxu0 %v3168
    %4337 = vmatpush1.bf16.msra.mxu0 %v3167
    %4338 = vmatprep.subr.bf16.mxu0 %v3173
    %4339 = vmatpush1.bf16.msra.mxu0 %v3172
    %4340 = vmatprep.subr.bf16.mxu0 %v3178
    %4341 = vmatpush1.bf16.msra.mxu0 %v3177
    %4342 = vmatprep.subr.bf16.mxu0 %v3183
    %4343 = vmatpush1.bf16.msra.mxu0 %v3182
    %4344 = vmatprep.subr.bf16.mxu0 %v3188
    %4345 = vmatpush1.bf16.msra.mxu0 %v3187
    %4346 = vmatprep.mubr.bf16.mxu0 %v125
    %4347 = vmatmul.mubr.bf16.gmra.mrb[0].mxu0 %v124
    %v4348 = vpop.f32.mrb[0].mxu0
    %v4349 = vadd.f32 %v4308, %v4348
    %v4350 = vpop.f32.mrb[0].mxu0
    %v4351 = vadd.f32 %v4310, %v4350
    %v4352 = vpop.f32.mrb[0].mxu0
    %v4353 = vpop.f32.mrb[0].mxu0
    %4354 = vdwg.mxu0
    %4355 = vmatprep.subr.bf16.mxu0 %v3193
    %4356 = vmatpush1.bf16.msra.mxu0 %v3192
    %4357 = vmatprep.subr.bf16.mxu0 %v3198
    %4358 = vmatpush1.bf16.msra.mxu0 %v3197
    %4359 = vmatprep.subr.bf16.mxu0 %v3203
    %4360 = vmatpush1.bf16.msra.mxu0 %v3202
    %4361 = vmatprep.subr.bf16.mxu0 %v3208
    %4362 = vmatpush1.bf16.msra.mxu0 %v3207
    %4363 = vmatprep.subr.bf16.mxu0 %v3213
    %4364 = vmatpush1.bf16.msra.mxu0 %v3212
    %4365 = vmatprep.subr.bf16.mxu0 %v3218
    %4366 = vmatpush1.bf16.msra.mxu0 %v3217
    %4367 = vmatprep.subr.bf16.mxu0 %v3223
    %4368 = vmatpush1.bf16.msra.mxu0 %v3222
    %4369 = vmatprep.subr.bf16.mxu0 %v3228
    %4370 = vmatpush1.bf16.msra.mxu0 %v3227
    %4371 = vmatprep.subr.bf16.mxu0 %v3233
    %4372 = vmatpush1.bf16.msra.mxu0 %v3232
    %4373 = vmatprep.subr.bf16.mxu0 %v3238
    %4374 = vmatpush1.bf16.msra.mxu0 %v3237
    %4375 = vmatprep.subr.bf16.mxu0 %v3243
    %4376 = vmatpush1.bf16.msra.mxu0 %v3242
    %4377 = vmatprep.subr.bf16.mxu0 %v3248
    %4378 = vmatpush1.bf16.msra.mxu0 %v3247
    %4379 = vmatprep.subr.bf16.mxu0 %v3253
    %4380 = vmatpush1.bf16.msra.mxu0 %v3252
    %4381 = vmatprep.subr.bf16.mxu0 %v3258
    %4382 = vmatpush1.bf16.msra.mxu0 %v3257
    %4383 = vmatprep.subr.bf16.mxu0 %v3263
    %4384 = vmatpush1.bf16.msra.mxu0 %v3262
    %4385 = vmatprep.subr.bf16.mxu0 %v3268
    %4386 = vmatpush1.bf16.msra.mxu0 %v3267
    %4387 = vmatprep.mubr.bf16.mxu0 %v127
    %4388 = vmatmul.mubr.bf16.gmra.mrb[0].mxu0 %v126
    %v4389 = vpop.f32.mrb[0].mxu0
    %v4390 = vadd.f32 %v4349, %v4389
    %v4391 = vpop.f32.mrb[0].mxu0
    %v4392 = vadd.f32 %v4351, %v4391
    %v4393 = vpop.f32.mrb[0].mxu0
    %v4394 = vpop.f32.mrb[0].mxu0
    %4395 = vdwg.mxu0
    %4396 = vmatprep.subr.bf16.mxu0 %v3273
    %4397 = vmatpush1.bf16.msra.mxu0 %v3272
    %4398 = vmatprep.subr.bf16.mxu0 %v3278
    %4399 = vmatpush1.bf16.msra.mxu0 %v3277
    %4400 = vmatprep.subr.bf16.mxu0 %v3283
    %4401 = vmatpush1.bf16.msra.mxu0 %v3282
    %4402 = vmatprep.subr.bf16.mxu0 %v3288
    %4403 = vmatpush1.bf16.msra.mxu0 %v3287
    %4404 = vmatprep.subr.bf16.mxu0 %v3293
    %4405 = vmatpush1.bf16.msra.mxu0 %v3292
    %4406 = vmatprep.subr.bf16.mxu0 %v3298
    %4407 = vmatpush1.bf16.msra.mxu0 %v3297
    %4408 = vmatprep.subr.bf16.mxu0 %v3303
    %4409 = vmatpush1.bf16.msra.mxu0 %v3302
    %4410 = vmatprep.subr.bf16.mxu0 %v3308
    %4411 = vmatpush1.bf16.msra.mxu0 %v3307
    %4412 = vmatprep.subr.bf16.mxu0 %v3313
    %4413 = vmatpush1.bf16.msra.mxu0 %v3312
    %4414 = vmatprep.subr.bf16.mxu0 %v3318
    %4415 = vmatpush1.bf16.msra.mxu0 %v3317
    %4416 = vmatprep.subr.bf16.mxu0 %v3323
    %4417 = vmatpush1.bf16.msra.mxu0 %v3322
    %4418 = vmatprep.subr.bf16.mxu0 %v3328
    %4419 = vmatpush1.bf16.msra.mxu0 %v3327
    %4420 = vmatprep.subr.bf16.mxu0 %v3333
    %4421 = vmatpush1.bf16.msra.mxu0 %v3332
    %4422 = vmatprep.subr.bf16.mxu0 %v3338
    %4423 = vmatpush1.bf16.msra.mxu0 %v3337
    %4424 = vmatprep.subr.bf16.mxu0 %v3343
    %4425 = vmatpush1.bf16.msra.mxu0 %v3342
    %4426 = vmatprep.subr.bf16.mxu0 %v3348
    %4427 = vmatpush1.bf16.msra.mxu0 %v3347
    %4428 = vmatprep.mubr.bf16.mxu0 %v129
    %4429 = vmatmul.mubr.bf16.gmra.mrb[0].mxu0 %v128
    %v4430 = vpop.f32.mrb[0].mxu0
    %v4431 = vadd.f32 %v4390, %v4430
    %v4432 = vpop.f32.mrb[0].mxu0
    %v4433 = vadd.f32 %v4392, %v4432
    %v4434 = vpop.f32.mrb[0].mxu0
    %v4435 = vpop.f32.mrb[0].mxu0
    %4436 = vdwg.mxu0
    %4437 = vmatprep.subr.bf16.mxu0 %v3353
    %4438 = vmatpush1.bf16.msra.mxu0 %v3352
    %4439 = vmatprep.subr.bf16.mxu0 %v3358
    %4440 = vmatpush1.bf16.msra.mxu0 %v3357
    %4441 = vmatprep.subr.bf16.mxu0 %v3363
    %4442 = vmatpush1.bf16.msra.mxu0 %v3362
    %4443 = vmatprep.subr.bf16.mxu0 %v3368
    %4444 = vmatpush1.bf16.msra.mxu0 %v3367
    %4445 = vmatprep.subr.bf16.mxu0 %v3373
    %4446 = vmatpush1.bf16.msra.mxu0 %v3372
    %4447 = vmatprep.subr.bf16.mxu0 %v3378
    %4448 = vmatpush1.bf16.msra.mxu0 %v3377
    %4449 = vmatprep.subr.bf16.mxu0 %v3383
    %4450 = vmatpush1.bf16.msra.mxu0 %v3382
    %4451 = vmatprep.subr.bf16.mxu0 %v3388
    %4452 = vmatpush1.bf16.msra.mxu0 %v3387
    %4453 = vmatprep.subr.bf16.mxu0 %v3393
    %4454 = vmatpush1.bf16.msra.mxu0 %v3392
    %4455 = vmatprep.subr.bf16.mxu0 %v3398
    %4456 = vmatpush1.bf16.msra.mxu0 %v3397
    %4457 = vmatprep.subr.bf16.mxu0 %v3403
    %4458 = vmatpush1.bf16.msra.mxu0 %v3402
    %4459 = vmatprep.subr.bf16.mxu0 %v3408
    %4460 = vmatpush1.bf16.msra.mxu0 %v3407
    %4461 = vmatprep.subr.bf16.mxu0 %v3413
    %4462 = vmatpush1.bf16.msra.mxu0 %v3412
    %4463 = vmatprep.subr.bf16.mxu0 %v3418
    %4464 = vmatpush1.bf16.msra.mxu0 %v3417
    %4465 = vmatprep.subr.bf16.mxu0 %v3423
    %4466 = vmatpush1.bf16.msra.mxu0 %v3422
    %4467 = vmatprep.subr.bf16.mxu0 %v3428
    %4468 = vmatpush1.bf16.msra.mxu0 %v3427
    %4469 = vmatprep.mubr.bf16.mxu0 %v131
    %4470 = vmatmul.mubr.bf16.gmra.mrb[0].mxu0 %v130
    %v4471 = vpop.f32.mrb[0].mxu0
    %v4472 = vadd.f32 %v4431, %v4471
    %v4473 = vpop.f32.mrb[0].mxu0
    %v4474 = vadd.f32 %v4433, %v4473
    %v4475 = vpop.f32.mrb[0].mxu0
    %v4476 = vpop.f32.mrb[0].mxu0
    %4477 = vdwg.mxu0
    %4478 = vmatprep.subr.bf16.mxu0 %v3433
    %4479 = vmatpush1.bf16.msra.mxu0 %v3432
    %4480 = vmatprep.subr.bf16.mxu0 %v3438
    %4481 = vmatpush1.bf16.msra.mxu0 %v3437
    %4482 = vmatprep.subr.bf16.mxu0 %v3443
    %4483 = vmatpush1.bf16.msra.mxu0 %v3442
    %4484 = vmatprep.subr.bf16.mxu0 %v3448
    %4485 = vmatpush1.bf16.msra.mxu0 %v3447
    %4486 = vmatprep.subr.bf16.mxu0 %v3453
    %4487 = vmatpush1.bf16.msra.mxu0 %v3452
    %4488 = vmatprep.subr.bf16.mxu0 %v3458
    %4489 = vmatpush1.bf16.msra.mxu0 %v3457
    %4490 = vmatprep.subr.bf16.mxu0 %v3463
    %4491 = vmatpush1.bf16.msra.mxu0 %v3462
    %4492 = vmatprep.subr.bf16.mxu0 %v3468
    %4493 = vmatpush1.bf16.msra.mxu0 %v3467
    %4494 = vmatprep.subr.bf16.mxu0 %v3473
    %4495 = vmatpush1.bf16.msra.mxu0 %v3472
    %4496 = vmatprep.subr.bf16.mxu0 %v3478
    %4497 = vmatpush1.bf16.msra.mxu0 %v3477
    %4498 = vmatprep.subr.bf16.mxu0 %v3483
    %4499 = vmatpush1.bf16.msra.mxu0 %v3482
    %4500 = vmatprep.subr.bf16.mxu0 %v3488
    %4501 = vmatpush1.bf16.msra.mxu0 %v3487
    %4502 = vmatprep.subr.bf16.mxu0 %v3493
    %4503 = vmatpush1.bf16.msra.mxu0 %v3492
    %4504 = vmatprep.subr.bf16.mxu0 %v3498
    %4505 = vmatpush1.bf16.msra.mxu0 %v3497
    %4506 = vmatprep.subr.bf16.mxu0 %v3503
    %4507 = vmatpush1.bf16.msra.mxu0 %v3502
    %4508 = vmatprep.subr.bf16.mxu0 %v3508
    %4509 = vmatpush1.bf16.msra.mxu0 %v3507
    %4510 = vmatprep.mubr.bf16.mxu0 %v133
    %4511 = vmatmul.mubr.bf16.gmra.mrb[0].mxu0 %v132
    %v4512 = vpop.f32.mrb[0].mxu0
    %v4513 = vadd.f32 %v4472, %v4512
    %v4514 = vpop.f32.mrb[0].mxu0
    %v4515 = vadd.f32 %v4474, %v4514
    %v4516 = vpop.f32.mrb[0].mxu0
    %v4517 = vpop.f32.mrb[0].mxu0
    %4518 = vdwg.mxu0
    %4519 = vmatprep.subr.bf16.mxu0 %v3513
    %4520 = vmatpush1.bf16.msra.mxu0 %v3512
    %4521 = vmatprep.subr.bf16.mxu0 %v3518
    %4522 = vmatpush1.bf16.msra.mxu0 %v3517
    %4523 = vmatprep.subr.bf16.mxu0 %v3523
    %4524 = vmatpush1.bf16.msra.mxu0 %v3522
    %4525 = vmatprep.subr.bf16.mxu0 %v3528
    %4526 = vmatpush1.bf16.msra.mxu0 %v3527
    %4527 = vmatprep.subr.bf16.mxu0 %v3533
    %4528 = vmatpush1.bf16.msra.mxu0 %v3532
    %4529 = vmatprep.subr.bf16.mxu0 %v3538
    %4530 = vmatpush1.bf16.msra.mxu0 %v3537
    %4531 = vmatprep.subr.bf16.mxu0 %v3543
    %4532 = vmatpush1.bf16.msra.mxu0 %v3542
    %4533 = vmatprep.subr.bf16.mxu0 %v3548
    %4534 = vmatpush1.bf16.msra.mxu0 %v3547
    %4535 = vmatprep.subr.bf16.mxu0 %v3553
    %4536 = vmatpush1.bf16.msra.mxu0 %v3552
    %4537 = vmatprep.subr.bf16.mxu0 %v3558
    %4538 = vmatpush1.bf16.msra.mxu0 %v3557
    %4539 = vmatprep.subr.bf16.mxu0 %v3563
    %4540 = vmatpush1.bf16.msra.mxu0 %v3562
    %4541 = vmatprep.subr.bf16.mxu0 %v3568
    %4542 = vmatpush1.bf16.msra.mxu0 %v3567
    %4543 = vmatprep.subr.bf16.mxu0 %v3573
    %4544 = vmatpush1.bf16.msra.mxu0 %v3572
    %4545 = vmatprep.subr.bf16.mxu0 %v3578
    %4546 = vmatpush1.bf16.msra.mxu0 %v3577
    %4547 = vmatprep.subr.bf16.mxu0 %v3583
    %4548 = vmatpush1.bf16.msra.mxu0 %v3582
    %4549 = vmatprep.subr.bf16.mxu0 %v3588
    %4550 = vmatpush1.bf16.msra.mxu0 %v3587
    %4551 = vmatprep.mubr.bf16.mxu0 %v135
    %4552 = vmatmul.mubr.bf16.gmra.mrb[0].mxu0 %v134
    %v4553 = vpop.f32.mrb[0].mxu0
    %v4554 = vadd.f32 %v4513, %v4553
    %v4555 = vpop.f32.mrb[0].mxu0
    %v4556 = vadd.f32 %v4515, %v4555
    %v4557 = vpop.f32.mrb[0].mxu0
    %v4558 = vpop.f32.mrb[0].mxu0
    %4559 = vdwg.mxu0
    %4560 = vmatprep.subr.bf16.mxu0 %v2955
    %4561 = vmatpush1.bf16.msra.mxu0 %v2954
    %4562 = vmatprep.subr.bf16.mxu0 %v2960
    %4563 = vmatpush1.bf16.msra.mxu0 %v2959
    %4564 = vmatprep.subr.bf16.mxu0 %v2965
    %4565 = vmatpush1.bf16.msra.mxu0 %v2964
    %4566 = vmatprep.subr.bf16.mxu0 %v2970
    %4567 = vmatpush1.bf16.msra.mxu0 %v2969
    %4568 = vmatprep.subr.bf16.mxu0 %v2975
    %4569 = vmatpush1.bf16.msra.mxu0 %v2974
    %4570 = vmatprep.subr.bf16.mxu0 %v2980
    %4571 = vmatpush1.bf16.msra.mxu0 %v2979
    %4572 = vmatprep.subr.bf16.mxu0 %v2985
    %4573 = vmatpush1.bf16.msra.mxu0 %v2984
    %4574 = vmatprep.subr.bf16.mxu0 %v2990
    %4575 = vmatpush1.bf16.msra.mxu0 %v2989
    %4576 = vmatprep.subr.bf16.mxu0 %v2995
    %4577 = vmatpush1.bf16.msra.mxu0 %v2994
    %4578 = vmatprep.subr.bf16.mxu0 %v3000
    %4579 = vmatpush1.bf16.msra.mxu0 %v2999
    %4580 = vmatprep.subr.bf16.mxu0 %v3005
    %4581 = vmatpush1.bf16.msra.mxu0 %v3004
    %4582 = vmatprep.subr.bf16.mxu0 %v3010
    %4583 = vmatpush1.bf16.msra.mxu0 %v3009
    %4584 = vmatprep.subr.bf16.mxu0 %v3015
    %4585 = vmatpush1.bf16.msra.mxu0 %v3014
    %4586 = vmatprep.subr.bf16.mxu0 %v3020
    %4587 = vmatpush1.bf16.msra.mxu0 %v3019
    %4588 = vmatprep.subr.bf16.mxu0 %v3025
    %4589 = vmatpush1.bf16.msra.mxu0 %v3024
    %4590 = vmatprep.subr.bf16.mxu0 %v3030
    %4591 = vmatpush1.bf16.msra.mxu0 %v3029
    %4592 = vmatprep.mubr.bf16.mxu0 %v121
    %4593 = vmatmul.mubr.bf16.gmra.mrb[0].mxu0 %v120
    %v4594 = vpop.f32.mrb[0].mxu0
    %v4595 = vadd.f32 0.0, %v4594
    %v4596 = vpop.f32.mrb[0].mxu0
    %v4597 = vadd.f32 0.0, %v4596
    %v4598 = vpop.f32.mrb[0].mxu0
    %v4599 = vpop.f32.mrb[0].mxu0
    %4600 = vdwg.mxu0
    %4601 = vmatprep.subr.bf16.mxu0 %v3035
    %4602 = vmatpush1.bf16.msra.mxu0 %v3034
    %4603 = vmatprep.subr.bf16.mxu0 %v3040
    %4604 = vmatpush1.bf16.msra.mxu0 %v3039
    %4605 = vmatprep.subr.bf16.mxu0 %v3045
    %4606 = vmatpush1.bf16.msra.mxu0 %v3044
    %4607 = vmatprep.subr.bf16.mxu0 %v3050
    %4608 = vmatpush1.bf16.msra.mxu0 %v3049
    %4609 = vmatprep.subr.bf16.mxu0 %v3055
    %4610 = vmatpush1.bf16.msra.mxu0 %v3054
    %4611 = vmatprep.subr.bf16.mxu0 %v3060
    %4612 = vmatpush1.bf16.msra.mxu0 %v3059
    %4613 = vmatprep.subr.bf16.mxu0 %v3065
    %4614 = vmatpush1.bf16.msra.mxu0 %v3064
    %4615 = vmatprep.subr.bf16.mxu0 %v3070
    %4616 = vmatpush1.bf16.msra.mxu0 %v3069
    %4617 = vmatprep.subr.bf16.mxu0 %v3075
    %4618 = vmatpush1.bf16.msra.mxu0 %v3074
    %4619 = vmatprep.subr.bf16.mxu0 %v3080
    %4620 = vmatpush1.bf16.msra.mxu0 %v3079
    %4621 = vmatprep.subr.bf16.mxu0 %v3085
    %4622 = vmatpush1.bf16.msra.mxu0 %v3084
    %4623 = vmatprep.subr.bf16.mxu0 %v3090
    %4624 = vmatpush1.bf16.msra.mxu0 %v3089
    %4625 = vmatprep.subr.bf16.mxu0 %v3095
    %4626 = vmatpush1.bf16.msra.mxu0 %v3094
    %4627 = vmatprep.subr.bf16.mxu0 %v3100
    %4628 = vmatpush1.bf16.msra.mxu0 %v3099
    %4629 = vmatprep.subr.bf16.mxu0 %v3105
    %4630 = vmatpush1.bf16.msra.mxu0 %v3104
    %4631 = vmatprep.subr.bf16.mxu0 %v3110
    %4632 = vmatpush1.bf16.msra.mxu0 %v3109
    %4633 = vmatprep.mubr.bf16.mxu0 %v123
    %4634 = vmatmul.mubr.bf16.gmra.mrb[0].mxu0 %v122
    %v4635 = vpop.f32.mrb[0].mxu0
    %v4636 = vadd.f32 %v4595, %v4635
    %v4637 = vpop.f32.mrb[0].mxu0
    %v4638 = vadd.f32 %v4597, %v4637
    %v4639 = vpop.f32.mrb[0].mxu0
    %v4640 = vpop.f32.mrb[0].mxu0
    %4641 = vdwg.mxu0
    %4642 = vmatprep.subr.bf16.mxu0 %v3115
    %4643 = vmatpush1.bf16.msra.mxu0 %v3114
    %4644 = vmatprep.subr.bf16.mxu0 %v3120
    %4645 = vmatpush1.bf16.msra.mxu0 %v3119
    %4646 = vmatprep.subr.bf16.mxu0 %v3125
    %4647 = vmatpush1.bf16.msra.mxu0 %v3124
    %4648 = vmatprep.subr.bf16.mxu0 %v3130
    %4649 = vmatpush1.bf16.msra.mxu0 %v3129
    %4650 = vmatprep.subr.bf16.mxu0 %v3135
    %4651 = vmatpush1.bf16.msra.mxu0 %v3134
    %4652 = vmatprep.subr.bf16.mxu0 %v3140
    %4653 = vmatpush1.bf16.msra.mxu0 %v3139
    %4654 = vmatprep.subr.bf16.mxu0 %v3145
    %4655 = vmatpush1.bf16.msra.mxu0 %v3144
    %4656 = vmatprep.subr.bf16.mxu0 %v3150
    %4657 = vmatpush1.bf16.msra.mxu0 %v3149
    %4658 = vmatprep.subr.bf16.mxu0 %v3155
    %4659 = vmatpush1.bf16.msra.mxu0 %v3154
    %4660 = vmatprep.subr.bf16.mxu0 %v3160
    %4661 = vmatpush1.bf16.msra.mxu0 %v3159
    %4662 = vmatprep.subr.bf16.mxu0 %v3165
    %4663 = vmatpush1.bf16.msra.mxu0 %v3164
    %4664 = vmatprep.subr.bf16.mxu0 %v3170
    %4665 = vmatpush1.bf16.msra.mxu0 %v3169
    %4666 = vmatprep.subr.bf16.mxu0 %v3175
    %4667 = vmatpush1.bf16.msra.mxu0 %v3174
    %4668 = vmatprep.subr.bf16.mxu0 %v3180
    %4669 = vmatpush1.bf16.msra.mxu0 %v3179
    %4670 = vmatprep.subr.bf16.mxu0 %v3185
    %4671 = vmatpush1.bf16.msra.mxu0 %v3184
    %4672 = vmatprep.subr.bf16.mxu0 %v3190
    %4673 = vmatpush1.bf16.msra.mxu0 %v3189
    %4674 = vmatprep.mubr.bf16.mxu0 %v125
    %4675 = vmatmul.mubr.bf16.gmra.mrb[0].mxu0 %v124
    %v4676 = vpop.f32.mrb[0].mxu0
    %v4677 = vadd.f32 %v4636, %v4676
    %v4678 = vpop.f32.mrb[0].mxu0
    %v4679 = vadd.f32 %v4638, %v4678
    %v4680 = vpop.f32.mrb[0].mxu0
    %v4681 = vpop.f32.mrb[0].mxu0
    %4682 = vdwg.mxu0
    %4683 = vmatprep.subr.bf16.mxu0 %v3195
    %4684 = vmatpush1.bf16.msra.mxu0 %v3194
    %4685 = vmatprep.subr.bf16.mxu0 %v3200
    %4686 = vmatpush1.bf16.msra.mxu0 %v3199
    %4687 = vmatprep.subr.bf16.mxu0 %v3205
    %4688 = vmatpush1.bf16.msra.mxu0 %v3204
    %4689 = vmatprep.subr.bf16.mxu0 %v3210
    %4690 = vmatpush1.bf16.msra.mxu0 %v3209
    %4691 = vmatprep.subr.bf16.mxu0 %v3215
    %4692 = vmatpush1.bf16.msra.mxu0 %v3214
    %4693 = vmatprep.subr.bf16.mxu0 %v3220
    %4694 = vmatpush1.bf16.msra.mxu0 %v3219
    %4695 = vmatprep.subr.bf16.mxu0 %v3225
    %4696 = vmatpush1.bf16.msra.mxu0 %v3224
    %4697 = vmatprep.subr.bf16.mxu0 %v3230
    %4698 = vmatpush1.bf16.msra.mxu0 %v3229
    %4699 = vmatprep.subr.bf16.mxu0 %v3235
    %4700 = vmatpush1.bf16.msra.mxu0 %v3234
    %4701 = vmatprep.subr.bf16.mxu0 %v3240
    %4702 = vmatpush1.bf16.msra.mxu0 %v3239
    %4703 = vmatprep.subr.bf16.mxu0 %v3245
    %4704 = vmatpush1.bf16.msra.mxu0 %v3244
    %4705 = vmatprep.subr.bf16.mxu0 %v3250
    %4706 = vmatpush1.bf16.msra.mxu0 %v3249
    %4707 = vmatprep.subr.bf16.mxu0 %v3255
    %4708 = vmatpush1.bf16.msra.mxu0 %v3254
    %4709 = vmatprep.subr.bf16.mxu0 %v3260
    %4710 = vmatpush1.bf16.msra.mxu0 %v3259
    %4711 = vmatprep.subr.bf16.mxu0 %v3265
    %4712 = vmatpush1.bf16.msra.mxu0 %v3264
    %4713 = vmatprep.subr.bf16.mxu0 %v3270
    %4714 = vmatpush1.bf16.msra.mxu0 %v3269
    %4715 = vmatprep.mubr.bf16.mxu0 %v127
    %4716 = vmatmul.mubr.bf16.gmra.mrb[0].mxu0 %v126
    %v4717 = vpop.f32.mrb[0].mxu0
    %v4718 = vadd.f32 %v4677, %v4717
    %v4719 = vpop.f32.mrb[0].mxu0
    %v4720 = vadd.f32 %v4679, %v4719
    %v4721 = vpop.f32.mrb[0].mxu0
    %v4722 = vpop.f32.mrb[0].mxu0
    %4723 = vdwg.mxu0
    %4724 = vmatprep.subr.bf16.mxu0 %v3275
    %4725 = vmatpush1.bf16.msra.mxu0 %v3274
    %4726 = vmatprep.subr.bf16.mxu0 %v3280
    %4727 = vmatpush1.bf16.msra.mxu0 %v3279
    %4728 = vmatprep.subr.bf16.mxu0 %v3285
    %4729 = vmatpush1.bf16.msra.mxu0 %v3284
    %4730 = vmatprep.subr.bf16.mxu0 %v3290
    %4731 = vmatpush1.bf16.msra.mxu0 %v3289
    %4732 = vmatprep.subr.bf16.mxu0 %v3295
    %4733 = vmatpush1.bf16.msra.mxu0 %v3294
    %4734 = vmatprep.subr.bf16.mxu0 %v3300
    %4735 = vmatpush1.bf16.msra.mxu0 %v3299
    %4736 = vmatprep.subr.bf16.mxu0 %v3305
    %4737 = vmatpush1.bf16.msra.mxu0 %v3304
    %4738 = vmatprep.subr.bf16.mxu0 %v3310
    %4739 = vmatpush1.bf16.msra.mxu0 %v3309
    %4740 = vmatprep.subr.bf16.mxu0 %v3315
    %4741 = vmatpush1.bf16.msra.mxu0 %v3314
    %4742 = vmatprep.subr.bf16.mxu0 %v3320
    %4743 = vmatpush1.bf16.msra.mxu0 %v3319
    %4744 = vmatprep.subr.bf16.mxu0 %v3325
    %4745 = vmatpush1.bf16.msra.mxu0 %v3324
    %4746 = vmatprep.subr.bf16.mxu0 %v3330
    %4747 = vmatpush1.bf16.msra.mxu0 %v3329
    %4748 = vmatprep.subr.bf16.mxu0 %v3335
    %4749 = vmatpush1.bf16.msra.mxu0 %v3334
    %4750 = vmatprep.subr.bf16.mxu0 %v3340
    %4751 = vmatpush1.bf16.msra.mxu0 %v3339
    %4752 = vmatprep.subr.bf16.mxu0 %v3345
    %4753 = vmatpush1.bf16.msra.mxu0 %v3344
    %4754 = vmatprep.subr.bf16.mxu0 %v3350
    %4755 = vmatpush1.bf16.msra.mxu0 %v3349
    %4756 = vmatprep.mubr.bf16.mxu0 %v129
    %4757 = vmatmul.mubr.bf16.gmra.mrb[0].mxu0 %v128
    %v4758 = vpop.f32.mrb[0].mxu0
    %v4759 = vadd.f32 %v4718, %v4758
    %v4760 = vpop.f32.mrb[0].mxu0
    %v4761 = vadd.f32 %v4720, %v4760
    %v4762 = vpop.f32.mrb[0].mxu0
    %v4763 = vpop.f32.mrb[0].mxu0
    %4764 = vdwg.mxu0
    %4765 = vmatprep.subr.bf16.mxu0 %v3355
    %4766 = vmatpush1.bf16.msra.mxu0 %v3354
    %4767 = vmatprep.subr.bf16.mxu0 %v3360
    %4768 = vmatpush1.bf16.msra.mxu0 %v3359
    %4769 = vmatprep.subr.bf16.mxu0 %v3365
    %4770 = vmatpush1.bf16.msra.mxu0 %v3364
    %4771 = vmatprep.subr.bf16.mxu0 %v3370
    %4772 = vmatpush1.bf16.msra.mxu0 %v3369
    %4773 = vmatprep.subr.bf16.mxu0 %v3375
    %4774 = vmatpush1.bf16.msra.mxu0 %v3374
    %4775 = vmatprep.subr.bf16.mxu0 %v3380
    %4776 = vmatpush1.bf16.msra.mxu0 %v3379
    %4777 = vmatprep.subr.bf16.mxu0 %v3385
    %4778 = vmatpush1.bf16.msra.mxu0 %v3384
    %4779 = vmatprep.subr.bf16.mxu0 %v3390
    %4780 = vmatpush1.bf16.msra.mxu0 %v3389
    %4781 = vmatprep.subr.bf16.mxu0 %v3395
    %4782 = vmatpush1.bf16.msra.mxu0 %v3394
    %4783 = vmatprep.subr.bf16.mxu0 %v3400
    %4784 = vmatpush1.bf16.msra.mxu0 %v3399
    %4785 = vmatprep.subr.bf16.mxu0 %v3405
    %4786 = vmatpush1.bf16.msra.mxu0 %v3404
    %4787 = vmatprep.subr.bf16.mxu0 %v3410
    %4788 = vmatpush1.bf16.msra.mxu0 %v3409
    %4789 = vmatprep.subr.bf16.mxu0 %v3415
    %4790 = vmatpush1.bf16.msra.mxu0 %v3414
    %4791 = vmatprep.subr.bf16.mxu0 %v3420
    %4792 = vmatpush1.bf16.msra.mxu0 %v3419
    %4793 = vmatprep.subr.bf16.mxu0 %v3425
    %4794 = vmatpush1.bf16.msra.mxu0 %v3424
    %4795 = vmatprep.subr.bf16.mxu0 %v3430
    %4796 = vmatpush1.bf16.msra.mxu0 %v3429
    %4797 = vmatprep.mubr.bf16.mxu0 %v131
    %4798 = vmatmul.mubr.bf16.gmra.mrb[0].mxu0 %v130
    %v4799 = vpop.f32.mrb[0].mxu0
    %v4800 = vadd.f32 %v4759, %v4799
    %v4801 = vpop.f32.mrb[0].mxu0
    %v4802 = vadd.f32 %v4761, %v4801
    %v4803 = vpop.f32.mrb[0].mxu0
    %v4804 = vpop.f32.mrb[0].mxu0
    %4805 = vdwg.mxu0
    %4806 = vmatprep.subr.bf16.mxu0 %v3435
    %4807 = vmatpush1.bf16.msra.mxu0 %v3434
    %4808 = vmatprep.subr.bf16.mxu0 %v3440
    %4809 = vmatpush1.bf16.msra.mxu0 %v3439
    %4810 = vmatprep.subr.bf16.mxu0 %v3445
    %4811 = vmatpush1.bf16.msra.mxu0 %v3444
    %4812 = vmatprep.subr.bf16.mxu0 %v3450
    %4813 = vmatpush1.bf16.msra.mxu0 %v3449
    %4814 = vmatprep.subr.bf16.mxu0 %v3455
    %4815 = vmatpush1.bf16.msra.mxu0 %v3454
    %4816 = vmatprep.subr.bf16.mxu0 %v3460
    %4817 = vmatpush1.bf16.msra.mxu0 %v3459
    %4818 = vmatprep.subr.bf16.mxu0 %v3465
    %4819 = vmatpush1.bf16.msra.mxu0 %v3464
    %4820 = vmatprep.subr.bf16.mxu0 %v3470
    %4821 = vmatpush1.bf16.msra.mxu0 %v3469
    %4822 = vmatprep.subr.bf16.mxu0 %v3475
    %4823 = vmatpush1.bf16.msra.mxu0 %v3474
    %4824 = vmatprep.subr.bf16.mxu0 %v3480
    %4825 = vmatpush1.bf16.msra.mxu0 %v3479
    %4826 = vmatprep.subr.bf16.mxu0 %v3485
    %4827 = vmatpush1.bf16.msra.mxu0 %v3484
    %4828 = vmatprep.subr.bf16.mxu0 %v3490
    %4829 = vmatpush1.bf16.msra.mxu0 %v3489
    %4830 = vmatprep.subr.bf16.mxu0 %v3495
    %4831 = vmatpush1.bf16.msra.mxu0 %v3494
    %4832 = vmatprep.subr.bf16.mxu0 %v3500
    %4833 = vmatpush1.bf16.msra.mxu0 %v3499
    %4834 = vmatprep.subr.bf16.mxu0 %v3505
    %4835 = vmatpush1.bf16.msra.mxu0 %v3504
    %4836 = vmatprep.subr.bf16.mxu0 %v3510
    %4837 = vmatpush1.bf16.msra.mxu0 %v3509
    %4838 = vmatprep.mubr.bf16.mxu0 %v133
    %4839 = vmatmul.mubr.bf16.gmra.mrb[0].mxu0 %v132
    %v4840 = vpop.f32.mrb[0].mxu0
    %v4841 = vadd.f32 %v4800, %v4840
    %v4842 = vpop.f32.mrb[0].mxu0
    %v4843 = vadd.f32 %v4802, %v4842
    %v4844 = vpop.f32.mrb[0].mxu0
    %v4845 = vpop.f32.mrb[0].mxu0
    %4846 = vdwg.mxu0
    %4847 = vmatprep.subr.bf16.mxu0 %v3515
    %4848 = vmatpush1.bf16.msra.mxu0 %v3514
    %4849 = vmatprep.subr.bf16.mxu0 %v3520
    %4850 = vmatpush1.bf16.msra.mxu0 %v3519
    %4851 = vmatprep.subr.bf16.mxu0 %v3525
    %4852 = vmatpush1.bf16.msra.mxu0 %v3524
    %4853 = vmatprep.subr.bf16.mxu0 %v3530
    %4854 = vmatpush1.bf16.msra.mxu0 %v3529
    %4855 = vmatprep.subr.bf16.mxu0 %v3535
    %4856 = vmatpush1.bf16.msra.mxu0 %v3534
    %4857 = vmatprep.subr.bf16.mxu0 %v3540
    %4858 = vmatpush1.bf16.msra.mxu0 %v3539
    %4859 = vmatprep.subr.bf16.mxu0 %v3545
    %4860 = vmatpush1.bf16.msra.mxu0 %v3544
    %4861 = vmatprep.subr.bf16.mxu0 %v3550
    %4862 = vmatpush1.bf16.msra.mxu0 %v3549
    %4863 = vmatprep.subr.bf16.mxu0 %v3555
    %4864 = vmatpush1.bf16.msra.mxu0 %v3554
    %4865 = vmatprep.subr.bf16.mxu0 %v3560
    %4866 = vmatpush1.bf16.msra.mxu0 %v3559
    %4867 = vmatprep.subr.bf16.mxu0 %v3565
    %4868 = vmatpush1.bf16.msra.mxu0 %v3564
    %4869 = vmatprep.subr.bf16.mxu0 %v3570
    %4870 = vmatpush1.bf16.msra.mxu0 %v3569
    %4871 = vmatprep.subr.bf16.mxu0 %v3575
    %4872 = vmatpush1.bf16.msra.mxu0 %v3574
    %4873 = vmatprep.subr.bf16.mxu0 %v3580
    %4874 = vmatpush1.bf16.msra.mxu0 %v3579
    %4875 = vmatprep.subr.bf16.mxu0 %v3585
    %4876 = vmatpush1.bf16.msra.mxu0 %v3584
    %4877 = vmatprep.subr.bf16.mxu0 %v3590
    %4878 = vmatpush1.bf16.msra.mxu0 %v3589
    %4879 = vmatprep.mubr.bf16.mxu0 %v135
    %4880 = vmatmul.mubr.bf16.gmra.mrb[0].mxu0 %v134
    %v4881 = vpop.f32.mrb[0].mxu0
    %v4882 = vadd.f32 %v4841, %v4881
    %v4883 = vpop.f32.mrb[0].mxu0
    %v4884 = vadd.f32 %v4843, %v4883
    %v4885 = vpop.f32.mrb[0].mxu0
    %v4886 = vpop.f32.mrb[0].mxu0
    %4887 = vdwg.mxu0
    %4888 = vmatprep.subr.bf16.mxu0 0
    %4889 = vmatpush1.bf16.msra.mxu0 %v2956
    %4890 = vmatprep.subr.bf16.mxu0 0
    %4891 = vmatpush1.bf16.msra.mxu0 %v2961
    %4892 = vmatprep.subr.bf16.mxu0 0
    %4893 = vmatpush1.bf16.msra.mxu0 %v2966
    %4894 = vmatprep.subr.bf16.mxu0 0
    %4895 = vmatpush1.bf16.msra.mxu0 %v2971
    %4896 = vmatprep.subr.bf16.mxu0 0
    %4897 = vmatpush1.bf16.msra.mxu0 %v2976
    %4898 = vmatprep.subr.bf16.mxu0 0
    %4899 = vmatpush1.bf16.msra.mxu0 %v2981
    %4900 = vmatprep.subr.bf16.mxu0 0
    %4901 = vmatpush1.bf16.msra.mxu0 %v2986
    %4902 = vmatprep.subr.bf16.mxu0 0
    %4903 = vmatpush1.bf16.msra.mxu0 %v2991
    %4904 = vmatprep.subr.bf16.mxu0 0
    %4905 = vmatpush1.bf16.msra.mxu0 %v2996
    %4906 = vmatprep.subr.bf16.mxu0 0
    %4907 = vmatpush1.bf16.msra.mxu0 %v3001
    %4908 = vmatprep.subr.bf16.mxu0 0
    %4909 = vmatpush1.bf16.msra.mxu0 %v3006
    %4910 = vmatprep.subr.bf16.mxu0 0
    %4911 = vmatpush1.bf16.msra.mxu0 %v3011
    %4912 = vmatprep.subr.bf16.mxu0 0
    %4913 = vmatpush1.bf16.msra.mxu0 %v3016
    %4914 = vmatprep.subr.bf16.mxu0 0
    %4915 = vmatpush1.bf16.msra.mxu0 %v3021
    %4916 = vmatprep.subr.bf16.mxu0 0
    %4917 = vmatpush1.bf16.msra.mxu0 %v3026
    %4918 = vmatprep.subr.bf16.mxu0 0
    %4919 = vmatpush1.bf16.msra.mxu0 %v3031
    %4920 = vmatprep.mubr.bf16.mxu0 %v121
    %4921 = vmatmul.mubr.bf16.gmra.mrb[0].mxu0 %v120
    %v4922 = vpop.f32.mrb[0].mxu0
    %v4923 = vadd.f32 0.0, %v4922
    %v4924 = vpop.f32.mrb[0].mxu0
    %v4925 = vpop.f32.mrb[0].mxu0
    %v4926 = vpop.f32.mrb[0].mxu0
    %4927 = vdwg.mxu0
    %4928 = vmatprep.subr.bf16.mxu0 0
    %4929 = vmatpush1.bf16.msra.mxu0 %v3036
    %4930 = vmatprep.subr.bf16.mxu0 0
    %4931 = vmatpush1.bf16.msra.mxu0 %v3041
    %4932 = vmatprep.subr.bf16.mxu0 0
    %4933 = vmatpush1.bf16.msra.mxu0 %v3046
    %4934 = vmatprep.subr.bf16.mxu0 0
    %4935 = vmatpush1.bf16.msra.mxu0 %v3051
    %4936 = vmatprep.subr.bf16.mxu0 0
    %4937 = vmatpush1.bf16.msra.mxu0 %v3056
    %4938 = vmatprep.subr.bf16.mxu0 0
    %4939 = vmatpush1.bf16.msra.mxu0 %v3061
    %4940 = vmatprep.subr.bf16.mxu0 0
    %4941 = vmatpush1.bf16.msra.mxu0 %v3066
    %4942 = vmatprep.subr.bf16.mxu0 0
    %4943 = vmatpush1.bf16.msra.mxu0 %v3071
    %4944 = vmatprep.subr.bf16.mxu0 0
    %4945 = vmatpush1.bf16.msra.mxu0 %v3076
    %4946 = vmatprep.subr.bf16.mxu0 0
    %4947 = vmatpush1.bf16.msra.mxu0 %v3081
    %4948 = vmatprep.subr.bf16.mxu0 0
    %4949 = vmatpush1.bf16.msra.mxu0 %v3086
    %4950 = vmatprep.subr.bf16.mxu0 0
    %4951 = vmatpush1.bf16.msra.mxu0 %v3091
    %4952 = vmatprep.subr.bf16.mxu0 0
    %4953 = vmatpush1.bf16.msra.mxu0 %v3096
    %4954 = vmatprep.subr.bf16.mxu0 0
    %4955 = vmatpush1.bf16.msra.mxu0 %v3101
    %4956 = vmatprep.subr.bf16.mxu0 0
    %4957 = vmatpush1.bf16.msra.mxu0 %v3106
    %4958 = vmatprep.subr.bf16.mxu0 0
    %4959 = vmatpush1.bf16.msra.mxu0 %v3111
    %4960 = vmatprep.mubr.bf16.mxu0 %v123
    %4961 = vmatmul.mubr.bf16.gmra.mrb[0].mxu0 %v122
    %v4962 = vpop.f32.mrb[0].mxu0
    %v4963 = vadd.f32 %v4923, %v4962
    %v4964 = vpop.f32.mrb[0].mxu0
    %v4965 = vpop.f32.mrb[0].mxu0
    %v4966 = vpop.f32.mrb[0].mxu0
    %4967 = vdwg.mxu0
    %4968 = vmatprep.subr.bf16.mxu0 0
    %4969 = vmatpush1.bf16.msra.mxu0 %v3116
    %4970 = vmatprep.subr.bf16.mxu0 0
    %4971 = vmatpush1.bf16.msra.mxu0 %v3121
    %4972 = vmatprep.subr.bf16.mxu0 0
    %4973 = vmatpush1.bf16.msra.mxu0 %v3126
    %4974 = vmatprep.subr.bf16.mxu0 0
    %4975 = vmatpush1.bf16.msra.mxu0 %v3131
    %4976 = vmatprep.subr.bf16.mxu0 0
    %4977 = vmatpush1.bf16.msra.mxu0 %v3136
    %4978 = vmatprep.subr.bf16.mxu0 0
    %4979 = vmatpush1.bf16.msra.mxu0 %v3141
    %4980 = vmatprep.subr.bf16.mxu0 0
    %4981 = vmatpush1.bf16.msra.mxu0 %v3146
    %4982 = vmatprep.subr.bf16.mxu0 0
    %4983 = vmatpush1.bf16.msra.mxu0 %v3151
    %4984 = vmatprep.subr.bf16.mxu0 0
    %4985 = vmatpush1.bf16.msra.mxu0 %v3156
    %4986 = vmatprep.subr.bf16.mxu0 0
    %4987 = vmatpush1.bf16.msra.mxu0 %v3161
    %4988 = vmatprep.subr.bf16.mxu0 0
    %4989 = vmatpush1.bf16.msra.mxu0 %v3166
    %4990 = vmatprep.subr.bf16.mxu0 0
    %4991 = vmatpush1.bf16.msra.mxu0 %v3171
    %4992 = vmatprep.subr.bf16.mxu0 0
    %4993 = vmatpush1.bf16.msra.mxu0 %v3176
    %4994 = vmatprep.subr.bf16.mxu0 0
    %4995 = vmatpush1.bf16.msra.mxu0 %v3181
    %4996 = vmatprep.subr.bf16.mxu0 0
    %4997 = vmatpush1.bf16.msra.mxu0 %v3186
    %4998 = vmatprep.subr.bf16.mxu0 0
    %4999 = vmatpush1.bf16.msra.mxu0 %v3191
    %5000 = vmatprep.mubr.bf16.mxu0 %v125
    %5001 = vmatmul.mubr.bf16.gmra.mrb[0].mxu0 %v124
    %v5002 = vpop.f32.mrb[0].mxu0
    %v5003 = vadd.f32 %v4963, %v5002
    %v5004 = vpop.f32.mrb[0].mxu0
    %v5005 = vpop.f32.mrb[0].mxu0
    %v5006 = vpop.f32.mrb[0].mxu0
    %5007 = vdwg.mxu0
    %5008 = vmatprep.subr.bf16.mxu0 0
    %5009 = vmatpush1.bf16.msra.mxu0 %v3196
    %5010 = vmatprep.subr.bf16.mxu0 0
    %5011 = vmatpush1.bf16.msra.mxu0 %v3201
    %5012 = vmatprep.subr.bf16.mxu0 0
    %5013 = vmatpush1.bf16.msra.mxu0 %v3206
    %5014 = vmatprep.subr.bf16.mxu0 0
    %5015 = vmatpush1.bf16.msra.mxu0 %v3211
    %5016 = vmatprep.subr.bf16.mxu0 0
    %5017 = vmatpush1.bf16.msra.mxu0 %v3216
    %5018 = vmatprep.subr.bf16.mxu0 0
    %5019 = vmatpush1.bf16.msra.mxu0 %v3221
    %5020 = vmatprep.subr.bf16.mxu0 0
    %5021 = vmatpush1.bf16.msra.mxu0 %v3226
    %5022 = vmatprep.subr.bf16.mxu0 0
    %5023 = vmatpush1.bf16.msra.mxu0 %v3231
    %5024 = vmatprep.subr.bf16.mxu0 0
    %5025 = vmatpush1.bf16.msra.mxu0 %v3236
    %5026 = vmatprep.subr.bf16.mxu0 0
    %5027 = vmatpush1.bf16.msra.mxu0 %v3241
    %5028 = vmatprep.subr.bf16.mxu0 0
    %5029 = vmatpush1.bf16.msra.mxu0 %v3246
    %5030 = vmatprep.subr.bf16.mxu0 0
    %5031 = vmatpush1.bf16.msra.mxu0 %v3251
    %5032 = vmatprep.subr.bf16.mxu0 0
    %5033 = vmatpush1.bf16.msra.mxu0 %v3256
    %5034 = vmatprep.subr.bf16.mxu0 0
    %5035 = vmatpush1.bf16.msra.mxu0 %v3261
    %5036 = vmatprep.subr.bf16.mxu0 0
    %5037 = vmatpush1.bf16.msra.mxu0 %v3266
    %5038 = vmatprep.subr.bf16.mxu0 0
    %5039 = vmatpush1.bf16.msra.mxu0 %v3271
    %5040 = vmatprep.mubr.bf16.mxu0 %v127
    %5041 = vmatmul.mubr.bf16.gmra.mrb[0].mxu0 %v126
    %v5042 = vpop.f32.mrb[0].mxu0
    %v5043 = vadd.f32 %v5003, %v5042
    %v5044 = vpop.f32.mrb[0].mxu0
    %v5045 = vpop.f32.mrb[0].mxu0
    %v5046 = vpop.f32.mrb[0].mxu0
    %5047 = vdwg.mxu0
    %5048 = vmatprep.subr.bf16.mxu0 0
    %5049 = vmatpush1.bf16.msra.mxu0 %v3276
    %5050 = vmatprep.subr.bf16.mxu0 0
    %5051 = vmatpush1.bf16.msra.mxu0 %v3281
    %5052 = vmatprep.subr.bf16.mxu0 0
    %5053 = vmatpush1.bf16.msra.mxu0 %v3286
    %5054 = vmatprep.subr.bf16.mxu0 0
    %5055 = vmatpush1.bf16.msra.mxu0 %v3291
    %5056 = vmatprep.subr.bf16.mxu0 0
    %5057 = vmatpush1.bf16.msra.mxu0 %v3296
    %5058 = vmatprep.subr.bf16.mxu0 0
    %5059 = vmatpush1.bf16.msra.mxu0 %v3301
    %5060 = vmatprep.subr.bf16.mxu0 0
    %5061 = vmatpush1.bf16.msra.mxu0 %v3306
    %5062 = vmatprep.subr.bf16.mxu0 0
    %5063 = vmatpush1.bf16.msra.mxu0 %v3311
    %5064 = vmatprep.subr.bf16.mxu0 0
    %5065 = vmatpush1.bf16.msra.mxu0 %v3316
    %5066 = vmatprep.subr.bf16.mxu0 0
    %5067 = vmatpush1.bf16.msra.mxu0 %v3321
    %5068 = vmatprep.subr.bf16.mxu0 0
    %5069 = vmatpush1.bf16.msra.mxu0 %v3326
    %5070 = vmatprep.subr.bf16.mxu0 0
    %5071 = vmatpush1.bf16.msra.mxu0 %v3331
    %5072 = vmatprep.subr.bf16.mxu0 0
    %5073 = vmatpush1.bf16.msra.mxu0 %v3336
    %5074 = vmatprep.subr.bf16.mxu0 0
    %5075 = vmatpush1.bf16.msra.mxu0 %v3341
    %5076 = vmatprep.subr.bf16.mxu0 0
    %5077 = vmatpush1.bf16.msra.mxu0 %v3346
    %5078 = vmatprep.subr.bf16.mxu0 0
    %5079 = vmatpush1.bf16.msra.mxu0 %v3351
    %5080 = vmatprep.mubr.bf16.mxu0 %v129
    %5081 = vmatmul.mubr.bf16.gmra.mrb[0].mxu0 %v128
    %v5082 = vpop.f32.mrb[0].mxu0
    %v5083 = vadd.f32 %v5043, %v5082
    %v5084 = vpop.f32.mrb[0].mxu0
    %v5085 = vpop.f32.mrb[0].mxu0
    %v5086 = vpop.f32.mrb[0].mxu0
    %5087 = vdwg.mxu0
    %5088 = vmatprep.subr.bf16.mxu0 0
    %5089 = vmatpush1.bf16.msra.mxu0 %v3356
    %5090 = vmatprep.subr.bf16.mxu0 0
    %5091 = vmatpush1.bf16.msra.mxu0 %v3361
    %5092 = vmatprep.subr.bf16.mxu0 0
    %5093 = vmatpush1.bf16.msra.mxu0 %v3366
    %5094 = vmatprep.subr.bf16.mxu0 0
    %5095 = vmatpush1.bf16.msra.mxu0 %v3371
    %5096 = vmatprep.subr.bf16.mxu0 0
    %5097 = vmatpush1.bf16.msra.mxu0 %v3376
    %5098 = vmatprep.subr.bf16.mxu0 0
    %5099 = vmatpush1.bf16.msra.mxu0 %v3381
    %5100 = vmatprep.subr.bf16.mxu0 0
    %5101 = vmatpush1.bf16.msra.mxu0 %v3386
    %5102 = vmatprep.subr.bf16.mxu0 0
    %5103 = vmatpush1.bf16.msra.mxu0 %v3391
    %5104 = vmatprep.subr.bf16.mxu0 0
    %5105 = vmatpush1.bf16.msra.mxu0 %v3396
    %5106 = vmatprep.subr.bf16.mxu0 0
    %5107 = vmatpush1.bf16.msra.mxu0 %v3401
    %5108 = vmatprep.subr.bf16.mxu0 0
    %5109 = vmatpush1.bf16.msra.mxu0 %v3406
    %5110 = vmatprep.subr.bf16.mxu0 0
    %5111 = vmatpush1.bf16.msra.mxu0 %v3411
    %5112 = vmatprep.subr.bf16.mxu0 0
    %5113 = vmatpush1.bf16.msra.mxu0 %v3416
    %5114 = vmatprep.subr.bf16.mxu0 0
    %5115 = vmatpush1.bf16.msra.mxu0 %v3421
    %5116 = vmatprep.subr.bf16.mxu0 0
    %5117 = vmatpush1.bf16.msra.mxu0 %v3426
    %5118 = vmatprep.subr.bf16.mxu0 0
    %5119 = vmatpush1.bf16.msra.mxu0 %v3431
    %5120 = vmatprep.mubr.bf16.mxu0 %v131
    %5121 = vmatmul.mubr.bf16.gmra.mrb[0].mxu0 %v130
    %v5122 = vpop.f32.mrb[0].mxu0
    %v5123 = vadd.f32 %v5083, %v5122
    %v5124 = vpop.f32.mrb[0].mxu0
    %v5125 = vpop.f32.mrb[0].mxu0
    %v5126 = vpop.f32.mrb[0].mxu0
    %5127 = vdwg.mxu0
    %5128 = vmatprep.subr.bf16.mxu0 0
    %5129 = vmatpush1.bf16.msra.mxu0 %v3436
    %5130 = vmatprep.subr.bf16.mxu0 0
    %5131 = vmatpush1.bf16.msra.mxu0 %v3441
    %5132 = vmatprep.subr.bf16.mxu0 0
    %5133 = vmatpush1.bf16.msra.mxu0 %v3446
    %5134 = vmatprep.subr.bf16.mxu0 0
    %5135 = vmatpush1.bf16.msra.mxu0 %v3451
    %5136 = vmatprep.subr.bf16.mxu0 0
    %5137 = vmatpush1.bf16.msra.mxu0 %v3456
    %5138 = vmatprep.subr.bf16.mxu0 0
    %5139 = vmatpush1.bf16.msra.mxu0 %v3461
    %5140 = vmatprep.subr.bf16.mxu0 0
    %5141 = vmatpush1.bf16.msra.mxu0 %v3466
    %5142 = vmatprep.subr.bf16.mxu0 0
    %5143 = vmatpush1.bf16.msra.mxu0 %v3471
    %5144 = vmatprep.subr.bf16.mxu0 0
    %5145 = vmatpush1.bf16.msra.mxu0 %v3476
    %5146 = vmatprep.subr.bf16.mxu0 0
    %5147 = vmatpush1.bf16.msra.mxu0 %v3481
    %5148 = vmatprep.subr.bf16.mxu0 0
    %5149 = vmatpush1.bf16.msra.mxu0 %v3486
    %5150 = vmatprep.subr.bf16.mxu0 0
    %5151 = vmatpush1.bf16.msra.mxu0 %v3491
    %5152 = vmatprep.subr.bf16.mxu0 0
    %5153 = vmatpush1.bf16.msra.mxu0 %v3496
    %5154 = vmatprep.subr.bf16.mxu0 0
    %5155 = vmatpush1.bf16.msra.mxu0 %v3501
    %5156 = vmatprep.subr.bf16.mxu0 0
    %5157 = vmatpush1.bf16.msra.mxu0 %v3506
    %5158 = vmatprep.subr.bf16.mxu0 0
    %5159 = vmatpush1.bf16.msra.mxu0 %v3511
    %5160 = vmatprep.mubr.bf16.mxu0 %v133
    %5161 = vmatmul.mubr.bf16.gmra.mrb[0].mxu0 %v132
    %v5162 = vpop.f32.mrb[0].mxu0
    %v5163 = vadd.f32 %v5123, %v5162
    %v5164 = vpop.f32.mrb[0].mxu0
    %v5165 = vpop.f32.mrb[0].mxu0
    %v5166 = vpop.f32.mrb[0].mxu0
    %5167 = vdwg.mxu0
    %5168 = vmatprep.subr.bf16.mxu0 0
    %5169 = vmatpush1.bf16.msra.mxu0 %v3516
    %5170 = vmatprep.subr.bf16.mxu0 0
    %5171 = vmatpush1.bf16.msra.mxu0 %v3521
    %5172 = vmatprep.subr.bf16.mxu0 0
    %5173 = vmatpush1.bf16.msra.mxu0 %v3526
    %5174 = vmatprep.subr.bf16.mxu0 0
    %5175 = vmatpush1.bf16.msra.mxu0 %v3531
    %5176 = vmatprep.subr.bf16.mxu0 0
    %5177 = vmatpush1.bf16.msra.mxu0 %v3536
    %5178 = vmatprep.subr.bf16.mxu0 0
    %5179 = vmatpush1.bf16.msra.mxu0 %v3541
    %5180 = vmatprep.subr.bf16.mxu0 0
    %5181 = vmatpush1.bf16.msra.mxu0 %v3546
    %5182 = vmatprep.subr.bf16.mxu0 0
    %5183 = vmatpush1.bf16.msra.mxu0 %v3551
    %5184 = vmatprep.subr.bf16.mxu0 0
    %5185 = vmatpush1.bf16.msra.mxu0 %v3556
    %5186 = vmatprep.subr.bf16.mxu0 0
    %5187 = vmatpush1.bf16.msra.mxu0 %v3561
    %5188 = vmatprep.subr.bf16.mxu0 0
    %5189 = vmatpush1.bf16.msra.mxu0 %v3566
    %5190 = vmatprep.subr.bf16.mxu0 0
    %5191 = vmatpush1.bf16.msra.mxu0 %v3571
    %5192 = vmatprep.subr.bf16.mxu0 0
    %5193 = vmatpush1.bf16.msra.mxu0 %v3576
    %5194 = vmatprep.subr.bf16.mxu0 0
    %5195 = vmatpush1.bf16.msra.mxu0 %v3581
    %5196 = vmatprep.subr.bf16.mxu0 0
    %5197 = vmatpush1.bf16.msra.mxu0 %v3586
    %5198 = vmatprep.subr.bf16.mxu0 0
    %5199 = vmatpush1.bf16.msra.mxu0 %v3591
    %5200 = vmatprep.mubr.bf16.mxu0 %v135
    %5201 = vmatmul.mubr.bf16.gmra.mrb[0].mxu0 %v134
    %v5202 = vpop.f32.mrb[0].mxu0
    %v5203 = vadd.f32 %v5163, %v5202
    %v5204 = vpop.f32.mrb[0].mxu0
    %v5205 = vpop.f32.mrb[0].mxu0
    %v5206 = vpop.f32.mrb[0].mxu0
    %5207 = vdwg.mxu0
    %v5208 = vmax.f32 %v4554, 0.0
    %v5209 = vmax.f32 %v4556, 0.0
    %v5210 = vmax.f32 %v4882, 0.0
    %v5211 = vmax.f32 %v4884, 0.0
    %v5212 = vmax.f32 %v5203, 0.0
    %v5213 = vpack.c.bf16 %v5208, %v5208
    %v5214 = vpack.c.bf16 %v5209, %v5209
    %v5215 = vpack.c.bf16 %v5210, %v5210
    %v5216 = vpack.c.bf16 %v5211, %v5211
    %v5217 = vpack.c.bf16 %v5212, %v5212
    %v5218 = vld [vmem:[%s2] sm:$0xf]
    %v5219 = vld [vmem:[%s2 + $0x4] sm:$0xf]
    %v5220 = vld [vmem:[%s2 + $0x8] sm:$0xf]
    %v5221 = vld [vmem:[%s2 + $0xc] sm:$0xf]
    %v5222 = vld [vmem:[%s2 + $0x10] sm:$0xf]
    %v5223 = vld [vmem:[%s2 + $0x14] sm:$0xf]
    %v5224 = vld [vmem:[%s2 + $0x18] sm:$0xf]
    %v5225 = vld [vmem:[%s2 + $0x1c] sm:$0xf]
    %v5226 = vld [vmem:[%s2 + $0x20] sm:$0xf]
    %v5227 = vld [vmem:[%s2 + $0x24] sm:$0xf]
    %v5228 = vld [vmem:[%s2 + $0x28] sm:$0xf]
    %v5229 = vld [vmem:[%s2 + $0x2c] sm:$0xf]
    %v5230 = vld [vmem:[%s2 + $0x30] sm:$0xf]
    %v5231 = vld [vmem:[%s2 + $0x34] sm:$0xf]
    %v5232 = vld [vmem:[%s2 + $0x38] sm:$0xf]
    %v5233 = vld [vmem:[%s2 + $0x3c] sm:$0xf]
    %v5234 = vld [vmem:[%s2 + $0x40] sm:$0xf]
    %v5235 = vld [vmem:[%s2 + $0x44] sm:$0xf]
    %v5236 = vld [vmem:[%s2 + $0x48] sm:$0xf]
    %v5237 = vld [vmem:[%s2 + $0x4c] sm:$0xf]
    %v5238 = vld [vmem:[%s2 + $0x50] sm:$0xf]
    %v5239 = vld [vmem:[%s2 + $0x54] sm:$0xf]
    %v5240 = vld [vmem:[%s2 + $0x58] sm:$0xf]
    %v5241 = vld [vmem:[%s2 + $0x5c] sm:$0xf]
    %v5242 = vld [vmem:[%s2 + $0x60] sm:$0xf]
    %v5243 = vld [vmem:[%s2 + $0x64] sm:$0xf]
    %v5244 = vld [vmem:[%s2 + $0x68] sm:$0xf]
    %v5245 = vld [vmem:[%s2 + $0x6c] sm:$0xf]
    %v5246 = vld [vmem:[%s2 + $0x70] sm:$0xf]
    %v5247 = vld [vmem:[%s2 + $0x74] sm:$0xf]
    %v5248 = vld [vmem:[%s2 + $0x78] sm:$0xf]
    %v5249 = vld [vmem:[%s2 + $0x7c] sm:$0xf]
    %v5250 = vld [vmem:[%s2 + $0x80] sm:$0xf]
    %v5251 = vld [vmem:[%s2 + $0x84] sm:$0xf]
    %v5252 = vld [vmem:[%s2 + $0x88] sm:$0xf]
    %v5253 = vld [vmem:[%s2 + $0x8c] sm:$0xf]
    %v5254 = vld [vmem:[%s2 + $0x90] sm:$0xf]
    %v5255 = vld [vmem:[%s2 + $0x94] sm:$0xf]
    %v5256 = vld [vmem:[%s2 + $0x98] sm:$0xf]
    %v5257 = vld [vmem:[%s2 + $0x9c] sm:$0xf]
    %v5258 = vld [vmem:[%s2 + $0xa0] sm:$0xf]
    %v5259 = vld [vmem:[%s2 + $0xa4] sm:$0xf]
    %v5260 = vld [vmem:[%s2 + $0xa8] sm:$0xf]
    %v5261 = vld [vmem:[%s2 + $0xac] sm:$0xf]
    %v5262 = vld [vmem:[%s2 + $0xb0] sm:$0xf]
    %v5263 = vld [vmem:[%s2 + $0xb4] sm:$0xf]
    %v5264 = vld [vmem:[%s2 + $0xb8] sm:$0xf]
    %v5265 = vld [vmem:[%s2 + $0xbc] sm:$0xf]
    %v5266 = vld [vmem:[%s2 + $0xc0] sm:$0xf]
    %v5267 = vld [vmem:[%s2 + $0xc4] sm:$0xf]
    %v5268 = vld [vmem:[%s2 + $0xc8] sm:$0xf]
    %v5269 = vld [vmem:[%s2 + $0xcc] sm:$0xf]
    %v5270 = vld [vmem:[%s2 + $0xd0] sm:$0xf]
    %v5271 = vld [vmem:[%s2 + $0xd4] sm:$0xf]
    %v5272 = vld [vmem:[%s2 + $0xd8] sm:$0xf]
    %v5273 = vld [vmem:[%s2 + $0xdc] sm:$0xf]
    %v5274 = vld [vmem:[%s2 + $0xe0] sm:$0xf]
    %v5275 = vld [vmem:[%s2 + $0xe4] sm:$0xf]
    %v5276 = vld [vmem:[%s2 + $0xe8] sm:$0xf]
    %v5277 = vld [vmem:[%s2 + $0xec] sm:$0xf]
    %v5278 = vld [vmem:[%s2 + $0xf0] sm:$0xf]
    %v5279 = vld [vmem:[%s2 + $0xf4] sm:$0xf]
    %v5280 = vld [vmem:[%s2 + $0xf8] sm:$0xf]
    %v5281 = vld [vmem:[%s2 + $0xfc] sm:$0xf]
    %v5282 = vld [vmem:[%s2 + $0x100] sm:$0xf]
    %v5283 = vld [vmem:[%s2 + $0x104] sm:$0xf]
    %v5284 = vld [vmem:[%s2 + $0x108] sm:$0xf]
    %v5285 = vld [vmem:[%s2 + $0x10c] sm:$0xf]
    %v5286 = vld [vmem:[%s2 + $0x110] sm:$0xf]
    %v5287 = vld [vmem:[%s2 + $0x114] sm:$0xf]
    %v5288 = vld [vmem:[%s2 + $0x118] sm:$0xf]
    %v5289 = vld [vmem:[%s2 + $0x11c] sm:$0xf]
    %v5362 = vunpack.c.l.b16 %v5218
    %v5363 = vunpack.c.l.b16 %v5219
    %v5364 = vunpack.c.l.b16 %v5220
    %v5365 = vunpack.c.l.b16 %v5221
    %v5366 = vunpack.c.l.b16 %v5222
    %v5367 = vunpack.c.l.b16 %v5223
    %v5368 = vunpack.c.l.b16 %v5224
    %v5369 = vunpack.c.l.b16 %v5225
    %v5370 = vunpack.c.l.b16 %v5226
    %v5371 = vunpack.c.l.b16 %v5227
    %v5372 = vunpack.c.l.b16 %v5228
    %v5373 = vunpack.c.l.b16 %v5229
    %v5374 = vunpack.c.l.b16 %v5230
    %v5375 = vunpack.c.l.b16 %v5231
    %v5376 = vunpack.c.l.b16 %v5232
    %v5377 = vunpack.c.l.b16 %v5233
    %v5378 = vunpack.c.l.b16 %v5234
    %v5379 = vunpack.c.l.b16 %v5235
    %v5380 = vunpack.c.l.b16 %v5236
    %v5381 = vunpack.c.l.b16 %v5237
    %v5382 = vunpack.c.l.b16 %v5238
    %v5383 = vunpack.c.l.b16 %v5239
    %v5384 = vunpack.c.l.b16 %v5240
    %v5385 = vunpack.c.l.b16 %v5241
    %v5386 = vunpack.c.l.b16 %v5242
    %v5387 = vunpack.c.l.b16 %v5243
    %v5388 = vunpack.c.l.b16 %v5244
    %v5389 = vunpack.c.l.b16 %v5245
    %v5390 = vunpack.c.l.b16 %v5246
    %v5391 = vunpack.c.l.b16 %v5247
    %v5392 = vunpack.c.l.b16 %v5248
    %v5393 = vunpack.c.l.b16 %v5249
    %v5394 = vunpack.c.l.b16 %v5250
    %v5395 = vunpack.c.l.b16 %v5251
    %v5396 = vunpack.c.l.b16 %v5252
    %v5397 = vunpack.c.l.b16 %v5253
    %v5398 = vunpack.c.l.b16 %v5254
    %v5399 = vunpack.c.l.b16 %v5255
    %v5400 = vunpack.c.l.b16 %v5256
    %v5401 = vunpack.c.l.b16 %v5257
    %v5402 = vunpack.c.l.b16 %v5258
    %v5403 = vunpack.c.l.b16 %v5259
    %v5404 = vunpack.c.l.b16 %v5260
    %v5405 = vunpack.c.l.b16 %v5261
    %v5406 = vunpack.c.l.b16 %v5262
    %v5407 = vunpack.c.l.b16 %v5263
    %v5408 = vunpack.c.l.b16 %v5264
    %v5409 = vunpack.c.l.b16 %v5265
    %v5410 = vunpack.c.l.b16 %v5266
    %v5411 = vunpack.c.l.b16 %v5267
    %v5412 = vunpack.c.l.b16 %v5268
    %v5413 = vunpack.c.l.b16 %v5269
    %v5414 = vunpack.c.l.b16 %v5270
    %v5415 = vunpack.c.l.b16 %v5271
    %v5416 = vunpack.c.l.b16 %v5272
    %v5417 = vunpack.c.l.b16 %v5273
    %v5418 = vunpack.c.l.b16 %v5274
    %v5419 = vunpack.c.l.b16 %v5275
    %v5420 = vunpack.c.l.b16 %v5276
    %v5421 = vunpack.c.l.b16 %v5277
    %v5422 = vunpack.c.l.b16 %v5278
    %v5423 = vunpack.c.l.b16 %v5279
    %v5424 = vunpack.c.l.b16 %v5280
    %v5425 = vunpack.c.l.b16 %v5281
    %v5426 = vunpack.c.l.b16 %v5282
    %v5427 = vunpack.c.l.b16 %v5283
    %v5428 = vunpack.c.l.b16 %v5284
    %v5429 = vunpack.c.l.b16 %v5285
    %v5430 = vunpack.c.l.b16 %v5286
    %v5431 = vunpack.c.l.b16 %v5287
    %v5432 = vunpack.c.l.b16 %v5288
    %v5433 = vunpack.c.l.b16 %v5289
    %v5434 = vpack.c.b16 %v5363, %v5362
    %v5435 = vpack.c.b16 %v5365, %v5364
    %v5436 = vpack.c.b16 %v5367, %v5366
    %v5437 = vpack.c.b16 %v5369, %v5368
    %v5438 = vpack.c.b16 %v5371, %v5370
    %v5439 = vpack.c.b16 %v5373, %v5372
    %v5440 = vpack.c.b16 %v5375, %v5374
    %v5441 = vpack.c.b16 %v5377, %v5376
    %v5442 = vpack.c.b16 %v5379, %v5378
    %v5443 = vpack.c.b16 %v5381, %v5380
    %v5444 = vpack.c.b16 %v5383, %v5382
    %v5445 = vpack.c.b16 %v5385, %v5384
    %v5446 = vpack.c.b16 %v5387, %v5386
    %v5447 = vpack.c.b16 %v5389, %v5388
    %v5448 = vpack.c.b16 %v5391, %v5390
    %v5449 = vpack.c.b16 %v5393, %v5392
    %v5450 = vpack.c.b16 %v5395, %v5394
    %v5451 = vpack.c.b16 %v5397, %v5396
    %v5452 = vpack.c.b16 %v5399, %v5398
    %v5453 = vpack.c.b16 %v5401, %v5400
    %v5454 = vpack.c.b16 %v5403, %v5402
    %v5455 = vpack.c.b16 %v5405, %v5404
    %v5456 = vpack.c.b16 %v5407, %v5406
    %v5457 = vpack.c.b16 %v5409, %v5408
    %v5458 = vpack.c.b16 %v5411, %v5410
    %v5459 = vpack.c.b16 %v5413, %v5412
    %v5460 = vpack.c.b16 %v5415, %v5414
    %v5461 = vpack.c.b16 %v5417, %v5416
    %v5462 = vpack.c.b16 %v5419, %v5418
    %v5463 = vpack.c.b16 %v5421, %v5420
    %v5464 = vpack.c.b16 %v5423, %v5422
    %v5465 = vpack.c.b16 %v5425, %v5424
    %v5466 = vpack.c.b16 %v5427, %v5426
    %v5467 = vpack.c.b16 %v5429, %v5428
    %v5468 = vpack.c.b16 %v5431, %v5430
    %v5469 = vpack.c.b16 %v5433, %v5432
    %vm5506 = vcmask 523264
    %v5508 = vsel %vm5506, %v5217, 0
    %5510 = vmatprep.subr.bf16.mxu0 0
    %5511 = vmatpush1.bf16.msra.mxu0 %v5434
    %5512 = vmatprep.subr.bf16.mxu0 0
    %5513 = vmatpush1.bf16.msra.mxu0 %v5435
    %5514 = vmatprep.subr.bf16.mxu0 0
    %5515 = vmatpush1.bf16.msra.mxu0 %v5436
    %5516 = vmatprep.subr.bf16.mxu0 0
    %5517 = vmatpush1.bf16.msra.mxu0 %v5437
    %5518 = vmatprep.subr.bf16.mxu0 0
    %5519 = vmatpush1.bf16.msra.mxu0 %v5438
    %5520 = vmatprep.subr.bf16.mxu0 0
    %5521 = vmatpush1.bf16.msra.mxu0 %v5439
    %5522 = vmatprep.subr.bf16.mxu0 0
    %5523 = vmatpush1.bf16.msra.mxu0 %v5440
    %5524 = vmatprep.subr.bf16.mxu0 0
    %5525 = vmatpush1.bf16.msra.mxu0 %v5441
    %5526 = vmatprep.subr.bf16.mxu0 0
    %5527 = vmatpush1.bf16.msra.mxu0 %v5442
    %5528 = vmatprep.subr.bf16.mxu0 0
    %5529 = vmatpush1.bf16.msra.mxu0 %v5443
    %5530 = vmatprep.subr.bf16.mxu0 0
    %5531 = vmatpush1.bf16.msra.mxu0 %v5444
    %5532 = vmatprep.subr.bf16.mxu0 0
    %5533 = vmatpush1.bf16.msra.mxu0 %v5445
    %5534 = vmatprep.subr.bf16.mxu0 0
    %5535 = vmatpush1.bf16.msra.mxu0 %v5446
    %5536 = vmatprep.subr.bf16.mxu0 0
    %5537 = vmatpush1.bf16.msra.mxu0 %v5447
    %5538 = vmatprep.subr.bf16.mxu0 0
    %5539 = vmatpush1.bf16.msra.mxu0 %v5448
    %5540 = vmatprep.subr.bf16.mxu0 0
    %5541 = vmatpush1.bf16.msra.mxu0 %v5449
    %5542 = vmatprep.mubr.bf16.mxu0 %v5214
    %5543 = vmatmul.mubr.bf16.gmra.mrb[0].mxu0 %v5213
    %v5544 = vpop.f32.mrb[0].mxu0
    %v5545 = vadd.f32 0.0, %v5544
    %v5546 = vpop.f32.mrb[0].mxu0
    %v5547 = vpop.f32.mrb[0].mxu0
    %v5548 = vpop.f32.mrb[0].mxu0
    %5549 = vdwg.mxu0
    %5550 = vmatprep.subr.bf16.mxu0 0
    %5551 = vmatpush1.bf16.msra.mxu0 %v5450
    %5552 = vmatprep.subr.bf16.mxu0 0
    %5553 = vmatpush1.bf16.msra.mxu0 %v5451
    %5554 = vmatprep.subr.bf16.mxu0 0
    %5555 = vmatpush1.bf16.msra.mxu0 %v5452
    %5556 = vmatprep.subr.bf16.mxu0 0
    %5557 = vmatpush1.bf16.msra.mxu0 %v5453
    %5558 = vmatprep.subr.bf16.mxu0 0
    %5559 = vmatpush1.bf16.msra.mxu0 %v5454
    %5560 = vmatprep.subr.bf16.mxu0 0
    %5561 = vmatpush1.bf16.msra.mxu0 %v5455
    %5562 = vmatprep.subr.bf16.mxu0 0
    %5563 = vmatpush1.bf16.msra.mxu0 %v5456
    %5564 = vmatprep.subr.bf16.mxu0 0
    %5565 = vmatpush1.bf16.msra.mxu0 %v5457
    %5566 = vmatprep.subr.bf16.mxu0 0
    %5567 = vmatpush1.bf16.msra.mxu0 %v5458
    %5568 = vmatprep.subr.bf16.mxu0 0
    %5569 = vmatpush1.bf16.msra.mxu0 %v5459
    %5570 = vmatprep.subr.bf16.mxu0 0
    %5571 = vmatpush1.bf16.msra.mxu0 %v5460
    %5572 = vmatprep.subr.bf16.mxu0 0
    %5573 = vmatpush1.bf16.msra.mxu0 %v5461
    %5574 = vmatprep.subr.bf16.mxu0 0
    %5575 = vmatpush1.bf16.msra.mxu0 %v5462
    %5576 = vmatprep.subr.bf16.mxu0 0
    %5577 = vmatpush1.bf16.msra.mxu0 %v5463
    %5578 = vmatprep.subr.bf16.mxu0 0
    %5579 = vmatpush1.bf16.msra.mxu0 %v5464
    %5580 = vmatprep.subr.bf16.mxu0 0
    %5581 = vmatpush1.bf16.msra.mxu0 %v5465
    %5582 = vmatprep.mubr.bf16.mxu0 %v5216
    %5583 = vmatmul.mubr.bf16.gmra.mrb[0].mxu0 %v5215
    %v5584 = vpop.f32.mrb[0].mxu0
    %v5585 = vadd.f32 %v5545, %v5584
    %v5586 = vpop.f32.mrb[0].mxu0
    %v5587 = vpop.f32.mrb[0].mxu0
    %v5588 = vpop.f32.mrb[0].mxu0
    %5589 = vdwg.mxu0
    %5590 = vmatprep.subr.bf16.mxu0 0
    %5591 = vmatpush1.bf16.msra.mxu0 %v5466
    %5592 = vmatprep.subr.bf16.mxu0 0
    %5593 = vmatpush1.bf16.msra.mxu0 %v5467
    %5594 = vmatprep.subr.bf16.mxu0 0
    %5595 = vmatpush1.bf16.msra.mxu0 %v5468
    %5596 = vmatprep.subr.bf16.mxu0 0
    %5597 = vmatpush1.bf16.msra.mxu0 %v5469
    %5598 = vmatprep.subr.bf16.mxu0 0
    %5599 = vmatpush1.bf16.msra.mxu0 0
    %5600 = vmatprep.subr.bf16.mxu0 0
    %5601 = vmatpush1.bf16.msra.mxu0 0
    %5602 = vmatprep.subr.bf16.mxu0 0
    %5603 = vmatpush1.bf16.msra.mxu0 0
    %5604 = vmatprep.subr.bf16.mxu0 0
    %5605 = vmatpush1.bf16.msra.mxu0 0
    %5606 = vmatprep.subr.bf16.mxu0 0
    %5607 = vmatpush1.bf16.msra.mxu0 0
    %5608 = vmatprep.subr.bf16.mxu0 0
    %5609 = vmatpush1.bf16.msra.mxu0 0
    %5610 = vmatprep.subr.bf16.mxu0 0
    %5611 = vmatpush1.bf16.msra.mxu0 0
    %5612 = vmatprep.subr.bf16.mxu0 0
    %5613 = vmatpush1.bf16.msra.mxu0 0
    %5614 = vmatprep.subr.bf16.mxu0 0
    %5615 = vmatpush1.bf16.msra.mxu0 0
    %5616 = vmatprep.subr.bf16.mxu0 0
    %5617 = vmatpush1.bf16.msra.mxu0 0
    %5618 = vmatprep.subr.bf16.mxu0 0
    %5619 = vmatpush1.bf16.msra.mxu0 0
    %5620 = vmatprep.subr.bf16.mxu0 0
    %5621 = vmatpush1.bf16.msra.mxu0 0
    %5622 = vmatprep.mubr.bf16.mxu0 0
    %5623 = vmatmul.mubr.bf16.gmra.mrb[0].mxu0 %v5508
    %v5624 = vpop.f32.mrb[0].mxu0
    %v5625 = vadd.f32 %v5585, %v5624
    %v5626 = vpop.f32.mrb[0].mxu0
    %v5627 = vpop.f32.mrb[0].mxu0
    %v5628 = vpop.f32.mrb[0].mxu0
    %5629 = vdwg.mxu0
    %v5630 = vmax.f32 %v5625, 0.0
    %v5631 = vpack.c.bf16 %v5630, %v5630
    %v5632 = vld [vmem:[%s3] sm:$0xff]
    %v5633 = vld [vmem:[%s3 + $0x8] sm:$0xff]
    %v5634 = vld [vmem:[%s3 + $0x10] sm:$0xff]
    %v5635 = vld [vmem:[%s3 + $0x18] sm:$0xff]
    %v5636 = vld [vmem:[%s3 + $0x20] sm:$0xff]
    %v5637 = vld [vmem:[%s3 + $0x28] sm:$0xff]
    %v5638 = vld [vmem:[%s3 + $0x30] sm:$0xff]
    %v5639 = vld [vmem:[%s3 + $0x38] sm:$0xff]
    %v5640 = vld [vmem:[%s3 + $0x40] sm:$0xff]
    %v5641 = vld [vmem:[%s3 + $0x48] sm:$0xff]
    %v5642 = vld [vmem:[%s3 + $0x50] sm:$0xff]
    %v5643 = vld [vmem:[%s3 + $0x58] sm:$0xff]
    %v5644 = vld [vmem:[%s3 + $0x60] sm:$0xff]
    %v5645 = vld [vmem:[%s3 + $0x68] sm:$0xff]
    %v5646 = vld [vmem:[%s3 + $0x70] sm:$0xff]
    %v5647 = vld [vmem:[%s3 + $0x78] sm:$0xff]
    %v5648 = vld [vmem:[%s4] sm:$0xf]
    %v5650 = vlaneseq
    %v5651 = vshrl.u32 %v5650, 7
    %v5652 = vsub.s32 0, %v5651
    %v5653 = vrot.slane %v5648, %v5652
    %v5654 = vlaneseq
    %v5655 = vshrl.u32 %v5654, 7
    %v5656 = vsub.s32 1, %v5655
    %v5657 = vrot.slane %v5648, %v5656
    %v5658 = vlaneseq
    %v5659 = vshrl.u32 %v5658, 7
    %v5660 = vsub.s32 2, %v5659
    %v5661 = vrot.slane %v5648, %v5660
    %v5662 = vlaneseq
    %v5663 = vshrl.u32 %v5662, 7
    %v5664 = vsub.s32 3, %v5663
    %v5665 = vrot.slane %v5648, %v5664
    %v5686 = vunpack.c.l.b16 %v5632
    %v5687 = vunpack.c.h.b16 %v5632
    %v5688 = vunpack.c.l.b16 %v5633
    %v5689 = vunpack.c.h.b16 %v5633
    %v5690 = vunpack.c.l.b16 %v5634
    %v5691 = vunpack.c.h.b16 %v5634
    %v5692 = vunpack.c.l.b16 %v5635
    %v5693 = vunpack.c.h.b16 %v5635
    %v5694 = vunpack.c.l.b16 %v5636
    %v5695 = vunpack.c.h.b16 %v5636
    %v5696 = vunpack.c.l.b16 %v5637
    %v5697 = vunpack.c.h.b16 %v5637
    %v5698 = vunpack.c.l.b16 %v5638
    %v5699 = vunpack.c.h.b16 %v5638
    %v5700 = vunpack.c.l.b16 %v5639
    %v5701 = vunpack.c.h.b16 %v5639
    %v5702 = vunpack.c.l.b16 %v5640
    %v5703 = vunpack.c.h.b16 %v5640
    %v5704 = vunpack.c.l.b16 %v5641
    %v5705 = vunpack.c.h.b16 %v5641
    %v5706 = vunpack.c.l.b16 %v5642
    %v5707 = vunpack.c.h.b16 %v5642
    %v5708 = vunpack.c.l.b16 %v5643
    %v5709 = vunpack.c.h.b16 %v5643
    %v5710 = vunpack.c.l.b16 %v5644
    %v5711 = vunpack.c.h.b16 %v5644
    %v5712 = vunpack.c.l.b16 %v5645
    %v5713 = vunpack.c.h.b16 %v5645
    %v5714 = vunpack.c.l.b16 %v5646
    %v5715 = vunpack.c.h.b16 %v5646
    %v5716 = vunpack.c.l.b16 %v5647
    %v5717 = vunpack.c.h.b16 %v5647
    %v5718 = vpack.c.b16 %v5690, %v5686
    %v5719 = vpack.c.b16 %v5691, %v5687
    %v5720 = vpack.c.b16 %v5692, %v5688
    %v5721 = vpack.c.b16 %v5693, %v5689
    %v5722 = vpack.c.b16 %v5698, %v5694
    %v5723 = vpack.c.b16 %v5699, %v5695
    %v5724 = vpack.c.b16 %v5700, %v5696
    %v5725 = vpack.c.b16 %v5701, %v5697
    %v5726 = vpack.c.b16 %v5706, %v5702
    %v5727 = vpack.c.b16 %v5707, %v5703
    %v5728 = vpack.c.b16 %v5708, %v5704
    %v5729 = vpack.c.b16 %v5709, %v5705
    %v5730 = vpack.c.b16 %v5714, %v5710
    %v5731 = vpack.c.b16 %v5715, %v5711
    %v5732 = vpack.c.b16 %v5716, %v5712
    %v5733 = vpack.c.b16 %v5717, %v5713
    %v5751 = vsel %vm5506, %v5631, 0
    %5753 = vmatprep.subr.bf16.mxu0 %v5719
    %5754 = vmatpush1.bf16.msra.mxu0 %v5718
    %5755 = vmatprep.subr.bf16.mxu0 %v5723
    %5756 = vmatpush1.bf16.msra.mxu0 %v5722
    %5757 = vmatprep.subr.bf16.mxu0 %v5727
    %5758 = vmatpush1.bf16.msra.mxu0 %v5726
    %5759 = vmatprep.subr.bf16.mxu0 %v5731
    %5760 = vmatpush1.bf16.msra.mxu0 %v5730
    %5761 = vmatprep.subr.bf16.mxu0 0
    %5762 = vmatpush1.bf16.msra.mxu0 0
    %5763 = vmatprep.subr.bf16.mxu0 0
    %5764 = vmatpush1.bf16.msra.mxu0 0
    %5765 = vmatprep.subr.bf16.mxu0 0
    %5766 = vmatpush1.bf16.msra.mxu0 0
    %5767 = vmatprep.subr.bf16.mxu0 0
    %5768 = vmatpush1.bf16.msra.mxu0 0
    %5769 = vmatprep.subr.bf16.mxu0 0
    %5770 = vmatpush1.bf16.msra.mxu0 0
    %5771 = vmatprep.subr.bf16.mxu0 0
    %5772 = vmatpush1.bf16.msra.mxu0 0
    %5773 = vmatprep.subr.bf16.mxu0 0
    %5774 = vmatpush1.bf16.msra.mxu0 0
    %5775 = vmatprep.subr.bf16.mxu0 0
    %5776 = vmatpush1.bf16.msra.mxu0 0
    %5777 = vmatprep.subr.bf16.mxu0 0
    %5778 = vmatpush1.bf16.msra.mxu0 0
    %5779 = vmatprep.subr.bf16.mxu0 0
    %5780 = vmatpush1.bf16.msra.mxu0 0
    %5781 = vmatprep.subr.bf16.mxu0 0
    %5782 = vmatpush1.bf16.msra.mxu0 0
    %5783 = vmatprep.subr.bf16.mxu0 0
    %5784 = vmatpush1.bf16.msra.mxu0 0
    %5785 = vmatprep.mubr.bf16.mxu0 0
    %5786 = vmatmul.mubr.bf16.gmra.mrb[0].mxu0 %v5751
    %v5787 = vpop.f32.mrb[0].mxu0
    %v5788 = vadd.f32 %v5653, %v5787
    %v5789 = vpop.f32.mrb[0].mxu0
    %v5790 = vadd.f32 %v5657, %v5789
    %v5791 = vpop.f32.mrb[0].mxu0
    %v5792 = vpop.f32.mrb[0].mxu0
    %5793 = vdwg.mxu0
    %5794 = vmatprep.subr.bf16.mxu0 %v5721
    %5795 = vmatpush1.bf16.msra.mxu0 %v5720
    %5796 = vmatprep.subr.bf16.mxu0 %v5725
    %5797 = vmatpush1.bf16.msra.mxu0 %v5724
    %5798 = vmatprep.subr.bf16.mxu0 %v5729
    %5799 = vmatpush1.bf16.msra.mxu0 %v5728
    %5800 = vmatprep.subr.bf16.mxu0 %v5733
    %5801 = vmatpush1.bf16.msra.mxu0 %v5732
    %5802 = vmatprep.subr.bf16.mxu0 0
    %5803 = vmatpush1.bf16.msra.mxu0 0
    %5804 = vmatprep.subr.bf16.mxu0 0
    %5805 = vmatpush1.bf16.msra.mxu0 0
    %5806 = vmatprep.subr.bf16.mxu0 0
    %5807 = vmatpush1.bf16.msra.mxu0 0
    %5808 = vmatprep.subr.bf16.mxu0 0
    %5809 = vmatpush1.bf16.msra.mxu0 0
    %5810 = vmatprep.subr.bf16.mxu0 0
    %5811 = vmatpush1.bf16.msra.mxu0 0
    %5812 = vmatprep.subr.bf16.mxu0 0
    %5813 = vmatpush1.bf16.msra.mxu0 0
    %5814 = vmatprep.subr.bf16.mxu0 0
    %5815 = vmatpush1.bf16.msra.mxu0 0
    %5816 = vmatprep.subr.bf16.mxu0 0
    %5817 = vmatpush1.bf16.msra.mxu0 0
    %5818 = vmatprep.subr.bf16.mxu0 0
    %5819 = vmatpush1.bf16.msra.mxu0 0
    %5820 = vmatprep.subr.bf16.mxu0 0
    %5821 = vmatpush1.bf16.msra.mxu0 0
    %5822 = vmatprep.subr.bf16.mxu0 0
    %5823 = vmatpush1.bf16.msra.mxu0 0
    %5824 = vmatprep.subr.bf16.mxu0 0
    %5825 = vmatpush1.bf16.msra.mxu0 0
    %5826 = vmatprep.mubr.bf16.mxu0 0
    %5827 = vmatmul.mubr.bf16.gmra.mrb[0].mxu0 %v5751
    %v5828 = vpop.f32.mrb[0].mxu0
    %v5829 = vadd.f32 %v5661, %v5828
    %v5830 = vpop.f32.mrb[0].mxu0
    %v5831 = vadd.f32 %v5665, %v5830
    %v5832 = vpop.f32.mrb[0].mxu0
    %v5833 = vpop.f32.mrb[0].mxu0
    %5834 = vdwg.mxu0
    %v5835 = vmax.f32 %v5788, 0.0
    %v5836 = vmax.f32 %v5790, 0.0
    %v5837 = vmax.f32 %v5829, 0.0
    %v5838 = vmax.f32 %v5831, 0.0
    %v5839 = vpack.c.bf16 %v5835, %v5835
    %v5840 = vpack.c.bf16 %v5836, %v5836
    %v5841 = vpack.c.bf16 %v5837, %v5837
    %v5842 = vpack.c.bf16 %v5838, %v5838
    %v5843 = vld [vmem:[%s5] sm:$0xf]
    %v5844 = vld [vmem:[%s5 + $0x4] sm:$0xf]
    %v5845 = vld [vmem:[%s5 + $0x8] sm:$0xf]
    %v5846 = vld [vmem:[%s5 + $0xc] sm:$0xf]
    %v5847 = vld [vmem:[%s5 + $0x10] sm:$0xf]
    %v5848 = vld [vmem:[%s5 + $0x14] sm:$0xf]
    %v5849 = vld [vmem:[%s5 + $0x18] sm:$0xf]
    %v5850 = vld [vmem:[%s5 + $0x1c] sm:$0xf]
    %v5851 = vld [vmem:[%s5 + $0x20] sm:$0xf]
    %v5852 = vld [vmem:[%s5 + $0x24] sm:$0xf]
    %v5853 = vld [vmem:[%s5 + $0x28] sm:$0xf]
    %v5854 = vld [vmem:[%s5 + $0x2c] sm:$0xf]
    %v5855 = vld [vmem:[%s5 + $0x30] sm:$0xf]
    %v5856 = vld [vmem:[%s5 + $0x34] sm:$0xf]
    %v5857 = vld [vmem:[%s5 + $0x38] sm:$0xf]
    %v5858 = vld [vmem:[%s5 + $0x3c] sm:$0xf]
    %v5859 = vld [vmem:[%s5 + $0x40] sm:$0xf]
    %v5860 = vld [vmem:[%s5 + $0x44] sm:$0xf]
    %v5861 = vld [vmem:[%s5 + $0x48] sm:$0xf]
    %v5862 = vld [vmem:[%s5 + $0x4c] sm:$0xf]
    %v5863 = vld [vmem:[%s5 + $0x50] sm:$0xf]
    %v5864 = vld [vmem:[%s5 + $0x54] sm:$0xf]
    %v5865 = vld [vmem:[%s5 + $0x58] sm:$0xf]
    %v5866 = vld [vmem:[%s5 + $0x5c] sm:$0xf]
    %v5867 = vld [vmem:[%s5 + $0x60] sm:$0xf]
    %v5868 = vld [vmem:[%s5 + $0x64] sm:$0xf]
    %v5869 = vld [vmem:[%s5 + $0x68] sm:$0xf]
    %v5870 = vld [vmem:[%s5 + $0x6c] sm:$0xf]
    %v5871 = vld [vmem:[%s5 + $0x70] sm:$0xf]
    %v5872 = vld [vmem:[%s5 + $0x74] sm:$0xf]
    %v5873 = vld [vmem:[%s5 + $0x78] sm:$0xf]
    %v5874 = vld [vmem:[%s5 + $0x7c] sm:$0xf]
    %v5875 = vld [vmem:[%s5 + $0x80] sm:$0xf]
    %v5876 = vld [vmem:[%s5 + $0x84] sm:$0xf]
    %v5877 = vld [vmem:[%s5 + $0x88] sm:$0xf]
    %v5878 = vld [vmem:[%s5 + $0x8c] sm:$0xf]
    %v5879 = vld [vmem:[%s5 + $0x90] sm:$0xf]
    %v5880 = vld [vmem:[%s5 + $0x94] sm:$0xf]
    %v5881 = vld [vmem:[%s5 + $0x98] sm:$0xf]
    %v5882 = vld [vmem:[%s5 + $0x9c] sm:$0xf]
    %v5883 = vld [vmem:[%s5 + $0xa0] sm:$0xf]
    %v5884 = vld [vmem:[%s5 + $0xa4] sm:$0xf]
    %v5885 = vld [vmem:[%s5 + $0xa8] sm:$0xf]
    %v5886 = vld [vmem:[%s5 + $0xac] sm:$0xf]
    %v5887 = vld [vmem:[%s5 + $0xb0] sm:$0xf]
    %v5888 = vld [vmem:[%s5 + $0xb4] sm:$0xf]
    %v5889 = vld [vmem:[%s5 + $0xb8] sm:$0xf]
    %v5890 = vld [vmem:[%s5 + $0xbc] sm:$0xf]
    %v5891 = vld [vmem:[%s5 + $0xc0] sm:$0xf]
    %v5892 = vld [vmem:[%s5 + $0xc4] sm:$0xf]
    %v5893 = vld [vmem:[%s5 + $0xc8] sm:$0xf]
    %v5894 = vld [vmem:[%s5 + $0xcc] sm:$0xf]
    %v5895 = vld [vmem:[%s5 + $0xd0] sm:$0xf]
    %v5896 = vld [vmem:[%s5 + $0xd4] sm:$0xf]
    %v5897 = vld [vmem:[%s5 + $0xd8] sm:$0xf]
    %v5898 = vld [vmem:[%s5 + $0xdc] sm:$0xf]
    %v5899 = vld [vmem:[%s5 + $0xe0] sm:$0xf]
    %v5900 = vld [vmem:[%s5 + $0xe4] sm:$0xf]
    %v5901 = vld [vmem:[%s5 + $0xe8] sm:$0xf]
    %v5902 = vld [vmem:[%s5 + $0xec] sm:$0xf]
    %v5903 = vld [vmem:[%s5 + $0xf0] sm:$0xf]
    %v5904 = vld [vmem:[%s5 + $0xf4] sm:$0xf]
    %v5905 = vld [vmem:[%s5 + $0xf8] sm:$0xf]
    %v5906 = vld [vmem:[%s5 + $0xfc] sm:$0xf]
    %v5907 = vld [vmem:[%s6] sm:$0x1]
    %v5909 = vlaneseq
    %v5910 = vshrl.u32 %v5909, 7
    %v5911 = vsub.s32 0, %v5910
    %v5912 = vrot.slane %v5907, %v5911
    %v5978 = vunpack.c.l.b16 %v5843
    %v5979 = vunpack.c.l.b16 %v5844
    %v5980 = vunpack.c.l.b16 %v5845
    %v5981 = vunpack.c.l.b16 %v5846
    %v5982 = vunpack.c.l.b16 %v5847
    %v5983 = vunpack.c.l.b16 %v5848
    %v5984 = vunpack.c.l.b16 %v5849
    %v5985 = vunpack.c.l.b16 %v5850
    %v5986 = vunpack.c.l.b16 %v5851
    %v5987 = vunpack.c.l.b16 %v5852
    %v5988 = vunpack.c.l.b16 %v5853
    %v5989 = vunpack.c.l.b16 %v5854
    %v5990 = vunpack.c.l.b16 %v5855
    %v5991 = vunpack.c.l.b16 %v5856
    %v5992 = vunpack.c.l.b16 %v5857
    %v5993 = vunpack.c.l.b16 %v5858
    %v5994 = vunpack.c.l.b16 %v5859
    %v5995 = vunpack.c.l.b16 %v5860
    %v5996 = vunpack.c.l.b16 %v5861
    %v5997 = vunpack.c.l.b16 %v5862
    %v5998 = vunpack.c.l.b16 %v5863
    %v5999 = vunpack.c.l.b16 %v5864
    %v6000 = vunpack.c.l.b16 %v5865
    %v6001 = vunpack.c.l.b16 %v5866
    %v6002 = vunpack.c.l.b16 %v5867
    %v6003 = vunpack.c.l.b16 %v5868
    %v6004 = vunpack.c.l.b16 %v5869
    %v6005 = vunpack.c.l.b16 %v5870
    %v6006 = vunpack.c.l.b16 %v5871
    %v6007 = vunpack.c.l.b16 %v5872
    %v6008 = vunpack.c.l.b16 %v5873
    %v6009 = vunpack.c.l.b16 %v5874
    %v6010 = vunpack.c.l.b16 %v5875
    %v6011 = vunpack.c.l.b16 %v5876
    %v6012 = vunpack.c.l.b16 %v5877
    %v6013 = vunpack.c.l.b16 %v5878
    %v6014 = vunpack.c.l.b16 %v5879
    %v6015 = vunpack.c.l.b16 %v5880
    %v6016 = vunpack.c.l.b16 %v5881
    %v6017 = vunpack.c.l.b16 %v5882
    %v6018 = vunpack.c.l.b16 %v5883
    %v6019 = vunpack.c.l.b16 %v5884
    %v6020 = vunpack.c.l.b16 %v5885
    %v6021 = vunpack.c.l.b16 %v5886
    %v6022 = vunpack.c.l.b16 %v5887
    %v6023 = vunpack.c.l.b16 %v5888
    %v6024 = vunpack.c.l.b16 %v5889
    %v6025 = vunpack.c.l.b16 %v5890
    %v6026 = vunpack.c.l.b16 %v5891
    %v6027 = vunpack.c.l.b16 %v5892
    %v6028 = vunpack.c.l.b16 %v5893
    %v6029 = vunpack.c.l.b16 %v5894
    %v6030 = vunpack.c.l.b16 %v5895
    %v6031 = vunpack.c.l.b16 %v5896
    %v6032 = vunpack.c.l.b16 %v5897
    %v6033 = vunpack.c.l.b16 %v5898
    %v6034 = vunpack.c.l.b16 %v5899
    %v6035 = vunpack.c.l.b16 %v5900
    %v6036 = vunpack.c.l.b16 %v5901
    %v6037 = vunpack.c.l.b16 %v5902
    %v6038 = vunpack.c.l.b16 %v5903
    %v6039 = vunpack.c.l.b16 %v5904
    %v6040 = vunpack.c.l.b16 %v5905
    %v6041 = vunpack.c.l.b16 %v5906
    %v6042 = vpack.c.b16 %v5979, %v5978
    %v6043 = vpack.c.b16 %v5981, %v5980
    %v6044 = vpack.c.b16 %v5983, %v5982
    %v6045 = vpack.c.b16 %v5985, %v5984
    %v6046 = vpack.c.b16 %v5987, %v5986
    %v6047 = vpack.c.b16 %v5989, %v5988
    %v6048 = vpack.c.b16 %v5991, %v5990
    %v6049 = vpack.c.b16 %v5993, %v5992
    %v6050 = vpack.c.b16 %v5995, %v5994
    %v6051 = vpack.c.b16 %v5997, %v5996
    %v6052 = vpack.c.b16 %v5999, %v5998
    %v6053 = vpack.c.b16 %v6001, %v6000
    %v6054 = vpack.c.b16 %v6003, %v6002
    %v6055 = vpack.c.b16 %v6005, %v6004
    %v6056 = vpack.c.b16 %v6007, %v6006
    %v6057 = vpack.c.b16 %v6009, %v6008
    %v6058 = vpack.c.b16 %v6011, %v6010
    %v6059 = vpack.c.b16 %v6013, %v6012
    %v6060 = vpack.c.b16 %v6015, %v6014
    %v6061 = vpack.c.b16 %v6017, %v6016
    %v6062 = vpack.c.b16 %v6019, %v6018
    %v6063 = vpack.c.b16 %v6021, %v6020
    %v6064 = vpack.c.b16 %v6023, %v6022
    %v6065 = vpack.c.b16 %v6025, %v6024
    %v6066 = vpack.c.b16 %v6027, %v6026
    %v6067 = vpack.c.b16 %v6029, %v6028
    %v6068 = vpack.c.b16 %v6031, %v6030
    %v6069 = vpack.c.b16 %v6033, %v6032
    %v6070 = vpack.c.b16 %v6035, %v6034
    %v6071 = vpack.c.b16 %v6037, %v6036
    %v6072 = vpack.c.b16 %v6039, %v6038
    %v6073 = vpack.c.b16 %v6041, %v6040
    %6106 = vmatprep.subr.bf16.mxu0 0
    %6107 = vmatpush1.bf16.msra.mxu0 %v6042
    %6108 = vmatprep.subr.bf16.mxu0 0
    %6109 = vmatpush1.bf16.msra.mxu0 %v6043
    %6110 = vmatprep.subr.bf16.mxu0 0
    %6111 = vmatpush1.bf16.msra.mxu0 %v6044
    %6112 = vmatprep.subr.bf16.mxu0 0
    %6113 = vmatpush1.bf16.msra.mxu0 %v6045
    %6114 = vmatprep.subr.bf16.mxu0 0
    %6115 = vmatpush1.bf16.msra.mxu0 %v6046
    %6116 = vmatprep.subr.bf16.mxu0 0
    %6117 = vmatpush1.bf16.msra.mxu0 %v6047
    %6118 = vmatprep.subr.bf16.mxu0 0
    %6119 = vmatpush1.bf16.msra.mxu0 %v6048
    %6120 = vmatprep.subr.bf16.mxu0 0
    %6121 = vmatpush1.bf16.msra.mxu0 %v6049
    %6122 = vmatprep.subr.bf16.mxu0 0
    %6123 = vmatpush1.bf16.msra.mxu0 %v6050
    %6124 = vmatprep.subr.bf16.mxu0 0
    %6125 = vmatpush1.bf16.msra.mxu0 %v6051
    %6126 = vmatprep.subr.bf16.mxu0 0
    %6127 = vmatpush1.bf16.msra.mxu0 %v6052
    %6128 = vmatprep.subr.bf16.mxu0 0
    %6129 = vmatpush1.bf16.msra.mxu0 %v6053
    %6130 = vmatprep.subr.bf16.mxu0 0
    %6131 = vmatpush1.bf16.msra.mxu0 %v6054
    %6132 = vmatprep.subr.bf16.mxu0 0
    %6133 = vmatpush1.bf16.msra.mxu0 %v6055
    %6134 = vmatprep.subr.bf16.mxu0 0
    %6135 = vmatpush1.bf16.msra.mxu0 %v6056
    %6136 = vmatprep.subr.bf16.mxu0 0
    %6137 = vmatpush1.bf16.msra.mxu0 %v6057
    %6138 = vmatprep.mubr.bf16.mxu0 %v5840
    %6139 = vmatmul.mubr.bf16.gmra.mrb[0].mxu0 %v5839
    %v6140 = vpop.f32.mrb[0].mxu0
    %v6141 = vadd.f32 %v5912, %v6140
    %v6142 = vpop.f32.mrb[0].mxu0
    %v6143 = vpop.f32.mrb[0].mxu0
    %v6144 = vpop.f32.mrb[0].mxu0
    %6145 = vdwg.mxu0
    %6146 = vmatprep.subr.bf16.mxu0 0
    %6147 = vmatpush1.bf16.msra.mxu0 %v6058
    %6148 = vmatprep.subr.bf16.mxu0 0
    %6149 = vmatpush1.bf16.msra.mxu0 %v6059
    %6150 = vmatprep.subr.bf16.mxu0 0
    %6151 = vmatpush1.bf16.msra.mxu0 %v6060
    %6152 = vmatprep.subr.bf16.mxu0 0
    %6153 = vmatpush1.bf16.msra.mxu0 %v6061
    %6154 = vmatprep.subr.bf16.mxu0 0
    %6155 = vmatpush1.bf16.msra.mxu0 %v6062
    %6156 = vmatprep.subr.bf16.mxu0 0
    %6157 = vmatpush1.bf16.msra.mxu0 %v6063
    %6158 = vmatprep.subr.bf16.mxu0 0
    %6159 = vmatpush1.bf16.msra.mxu0 %v6064
    %6160 = vmatprep.subr.bf16.mxu0 0
    %6161 = vmatpush1.bf16.msra.mxu0 %v6065
    %6162 = vmatprep.subr.bf16.mxu0 0
    %6163 = vmatpush1.bf16.msra.mxu0 %v6066
    %6164 = vmatprep.subr.bf16.mxu0 0
    %6165 = vmatpush1.bf16.msra.mxu0 %v6067
    %6166 = vmatprep.subr.bf16.mxu0 0
    %6167 = vmatpush1.bf16.msra.mxu0 %v6068
    %6168 = vmatprep.subr.bf16.mxu0 0
    %6169 = vmatpush1.bf16.msra.mxu0 %v6069
    %6170 = vmatprep.subr.bf16.mxu0 0
    %6171 = vmatpush1.bf16.msra.mxu0 %v6070
    %6172 = vmatprep.subr.bf16.mxu0 0
    %6173 = vmatpush1.bf16.msra.mxu0 %v6071
    %6174 = vmatprep.subr.bf16.mxu0 0
    %6175 = vmatpush1.bf16.msra.mxu0 %v6072
    %6176 = vmatprep.subr.bf16.mxu0 0
    %6177 = vmatpush1.bf16.msra.mxu0 %v6073
    %6178 = vmatprep.mubr.bf16.mxu0 %v5842
    %6179 = vmatmul.mubr.bf16.gmra.mrb[0].mxu0 %v5841
    %v6180 = vpop.f32.mrb[0].mxu0
    %v6181 = vadd.f32 %v6141, %v6180
    %v6182 = vpop.f32.mrb[0].mxu0
    %v6183 = vpop.f32.mrb[0].mxu0
    %v6184 = vpop.f32.mrb[0].mxu0
    %6185 = vdwg.mxu0
    %6186 = vst [vmem:[#allocation2] sm:$0x3] %v6181
    // Predicated region
    $region30: #{conv_nn_forward.3} parent=1 // pred_check
      _
    $region31: #{conv_nn_forward.3} parent=1 // pred_check_branch
      %6188 = sbr.rel (0) target = $region33
    $region32: #{conv_nn_forward.3} parent=1 // pred_region
      %s6190 = ssub.s32 32, 32
      %6191 = vsyncadd [#allocation3], %s6190
      %s6193 = sshll.u32 [#allocation2], 4
      %s6194 = int_to_ptr.vmem [resolvable:$true] %s6193
      %6196 = dma.vmem_to_hbm [thread:$0]  %s6194, 32, %s7, [#allocation3]
    $region33: #{conv_nn_forward.3} parent=1 // pred_fallthru
      _
    // Predicated region
    $region34: #{conv_nn_forward.3} parent=1 // pred_check
      _
    $region35: #{conv_nn_forward.3} parent=1 // pred_check_branch
      %6198 = sbr.rel (0) target = $region37
    $region36: #{conv_nn_forward.3} parent=1 // pred_region
      %6199 = dma.done [#allocation3], 32
    $region37: #{conv_nn_forward.3} parent=1 // pred_fallthru
      _
    %6200 = vsyncpa [#allocation3], 1

</llo_original>
